<compile_context>
chip_gen: v7x
topology: tpu7x:2x2x1
jax: 0.10.0
libtpu: 0.0.40
codegen_flags: <defaults>
</compile_context>

<pallas_src>
import functools

import jax
import jax.numpy as jnp
from jax.experimental import pallas as pl
from jax.experimental.pallas import tpu as pltpu

LANE = 128
_NN_DTYPE = jnp.bfloat16          # MXU-native operand dtype for the coupling nets
# Scoped-VMEM cap: actual tile footprint here is a few MiB; 32 MiB leaves headroom
# for compiler scratch/double-buffering on every generation (v7x: 64 MiB physical).
_VMEM_LIMIT = 32 * 1024 * 1024


# ----------------------------------------------------------------------------
# helpers
# ----------------------------------------------------------------------------

def _round_up(x, m):
    return ((x + m - 1) // m) * m


def _row_tile(m):
    # Largest 8/128-friendly row tile that still yields >= 2 row blocks (so the
    # "parallel" row axis can shard across v7x's two TensorCores) while keeping
    # 512-row tiles once M is large enough to amortize per-grid-step overhead.
    if m >= 2048:
        return 512
    for tm in (256, 128, 64):
        if m >= 2 * tm:
            return tm
    return 64


def _k_tiling(k):
    # Minimal-padding K tiling: single full-K block when small (no zero-pad MXU
    # passes, no extra grid step); otherwise 128-aligned tiles near 512 wide.
    if k <= 1024:
        kp = _round_up(k, 8)
        return kp, kp
    nk = -(-k // 512)
    tk = _round_up(-(-k // nk), LANE)
    return tk, nk * tk


def _pad2d(x, rows, cols):
    r, c = x.shape
    if r == rows and c == cols:
        return x
    return jnp.pad(x, ((0, rows - r), (0, cols - c)))


def _compiler_params():
    return pltpu.CompilerParams(
        dimension_semantics=("parallel", "arbitrary"),
        vmem_limit_bytes=_VMEM_LIMIT)


# ----------------------------------------------------------------------------
# Pallas kernels
# ----------------------------------------------------------------------------

def _mm_kernel(x_ref, w_ref, b_ref, o_ref, *acc, activation, single_k):
    """o = act(x @ w + b); single-block K or K-tiled with f32 VMEM accumulator."""

    def epilogue(acc_val):
        r = acc_val + b_ref[...]
        if activation == "relu":
            r = jnp.maximum(r, 0.0)
        o_ref[...] = r.astype(o_ref.dtype)

    if single_k:
        epilogue(jnp.dot(x_ref[...], w_ref[...], preferred_element_type=jnp.float32))
    else:
        acc_ref = acc[0]
        k = pl.program_id(1)

        @pl.when(k == 0)
        def _():
            acc_ref[...] = jnp.zeros_like(acc_ref)

        acc_ref[...] += jnp.dot(x_ref[...], w_ref[...],
                                preferred_element_type=jnp.float32)

        @pl.when(k == pl.num_programs(1) - 1)
        def _():
            epilogue(acc_ref[...])


def _mm2_kernel(x_ref, w1_ref, b1_ref, w2_ref, b2_ref, o_ref, *acc, single_k):
    """Fused coupling-net front-end: o = relu(relu(x @ w1 + b1) @ w2 + b2).
    w2/b2 are tiny, constant-indexed (loaded once) and live in VMEM; the hidden
    intermediate never leaves VMEM."""

    def epilogue(acc_val):
        h1 = jnp.maximum(acc_val + b1_ref[...], 0.0)
        h2 = jnp.dot(h1.astype(w2_ref.dtype), w2_ref[...],
                     preferred_element_type=jnp.float32)
        h2 = jnp.maximum(h2 + b2_ref[...], 0.0)
        o_ref[...] = h2.astype(o_ref.dtype)

    if single_k:
        epilogue(jnp.dot(x_ref[...], w1_ref[...], preferred_element_type=jnp.float32))
    else:
        acc_ref = acc[0]
        k = pl.program_id(1)

        @pl.when(k == 0)
        def _():
            acc_ref[...] = jnp.zeros_like(acc_ref)

        acc_ref[...] += jnp.dot(x_ref[...], w1_ref[...],
                                preferred_element_type=jnp.float32)

        @pl.when(k == pl.num_programs(1) - 1)
        def _():
            epilogue(acc_ref[...])


def _mm_affine_kernel(x_ref, w_ref, b_ref, zp_ref, o_ref, lsum_ref, *acc,
                      out_ch, ocp, single_k):
    """Last coupling conv fused with the affine transform:
        params = x @ w + b ; mu = params[:, :ocp] ; s = params[:, ocp:]
        scale = sigmoid(s + 2) ; out = zp * scale + mu
        lsum  = sum_{valid channels} log(scale)     (per row)
    """

    def epilogue(acc_val):
        acc_val = acc_val + b_ref[...]
        mu = acc_val[:, :ocp]
        s_arg = acc_val[:, ocp:] + 2.0
        # One EUP exp instead of exp/log/exp:
        #   t = exp(-|s|); log(sigmoid(s)) = min(s,0) - log(1+t)
        #   sigmoid(s) = select(s >= 0, 1, t) / (1 + t)
        t = jnp.exp(-jnp.abs(s_arg))
        log_scale = jnp.minimum(s_arg, 0.0) - jnp.log(1.0 + t)
        inv = pl.reciprocal(1.0 + t, approx=True)
        scale = jnp.where(s_arg >= 0.0, inv, t * inv)
        o_ref[...] = (zp_ref[...].astype(jnp.float32) * scale + mu).astype(o_ref.dtype)
        lane = jax.lax.broadcasted_iota(jnp.int32, log_scale.shape, 1)
        masked = jnp.where(lane < out_ch, log_scale, 0.0)
        # TODO(synk): (tm, 1) store is lane-sparse (masked vst); fold into a
        # lane-dense slab if it ever matters (minor; mostly a v5e concern).
        lsum_ref[...] = jnp.sum(masked, axis=-1, keepdims=True)

    if single_k:
        epilogue(jnp.dot(x_ref[...], w_ref[...], preferred_element_type=jnp.float32))
    else:
        acc_ref = acc[0]
        k = pl.program_id(1)

        @pl.when(k == 0)
        def _():
            acc_ref[...] = jnp.zeros_like(acc_ref)

        acc_ref[...] += jnp.dot(x_ref[...], w_ref[...],
                                preferred_element_type=jnp.float32)

        @pl.when(k == pl.num_programs(1) - 1)
        def _():
            epilogue(acc_ref[...])


# ----------------------------------------------------------------------------
# Kernel wrappers (glue: padding/im2col; compute: Pallas)
# ----------------------------------------------------------------------------

def matmul_bias(x, w, b, activation="none", out_dtype=jnp.float32,
                compute_dtype=_NN_DTYPE):
    """y = act(x @ w + b); x:(M,K), w:(K,N), b:(N,)."""
    M, K = x.shape
    K2, N = w.shape
    assert K == K2
    tm = _row_tile(M)
    Mp = _round_up(M, tm)
    Np = _round_up(N, LANE)
    tk, Kp = _k_tiling(K)
    nk = Kp // tk
    single_k = nk == 1

    xp = _pad2d(x.astype(compute_dtype), Mp, Kp)
    wp = _pad2d(w.astype(compute_dtype), Kp, Np)
    bp = jnp.pad(b.astype(jnp.float32), (0, Np - N)).reshape(1, Np)

    out = pl.pallas_call(
        functools.partial(_mm_kernel, activation=activation, single_k=single_k),
        out_shape=jax.ShapeDtypeStruct((Mp, Np), out_dtype),
        grid=(Mp // tm, nk),
        in_specs=[
            pl.BlockSpec((tm, tk), lambda i, k: (i, k)),
            pl.BlockSpec((tk, Np), lambda i, k: (k, 0)),
            pl.BlockSpec((1, Np), lambda i, k: (0, 0)),
        ],
        out_specs=pl.BlockSpec((tm, Np), lambda i, k: (i, 0)),
        scratch_shapes=() if single_k else (pltpu.VMEM((tm, Np), jnp.float32),),
        compiler_params=_compiler_params(),
    )(xp, wp, bp)
    return out[:M, :N]


def _im2col3x3(x_nhwc):
    # TODO(synk): streaming the 9 taps as a K-grid over the padded NHWC buffer
    # would avoid materializing this 9x copy in HBM at all.
    B, H, W, C = x_nhwc.shape
    xp = jnp.pad(x_nhwc, ((0, 0), (1, 1), (1, 1), (0, 0)))
    cols = [xp[:, dy:dy + H, dx:dx + W, :] for dy in range(3) for dx in range(3)]
    return jnp.concatenate(cols, axis=-1).reshape(B * H * W, 9 * C)


def coupling_frontend(z1_nhwc, w1, b1, w2, b2):
    """NICEConvBlock front-end: conv3x3 -> relu -> conv1x1 -> relu in ONE
    pallas_call. Returns the hidden activation (B,H,W,hidden) in bf16 (it only
    feeds the next conv's im2col)."""
    B, H, W, C = z1_nhwc.shape
    hidden = w1.shape[1]
    xc = _im2col3x3(z1_nhwc.astype(_NN_DTYPE))     # bf16 BEFORE im2col: half bytes
    M, K = xc.shape
    tm = _row_tile(M)
    Mp = _round_up(M, tm)
    Hp = _round_up(hidden, LANE)
    tk, Kp = _k_tiling(K)
    nk = Kp // tk
    single_k = nk == 1

    xp = _pad2d(xc, Mp, Kp)
    w1p = _pad2d(w1, Kp, Hp).astype(_NN_DTYPE)
    b1p = jnp.pad(b1, (0, Hp - hidden)).reshape(1, Hp).astype(jnp.float32)
    w2p = _pad2d(w2, Hp, Hp).astype(_NN_DTYPE)
    b2p = jnp.pad(b2, (0, Hp - hidden)).reshape(1, Hp).astype(jnp.float32)

    out = pl.pallas_call(
        functools.partial(_mm2_kernel, single_k=single_k),
        out_shape=jax.ShapeDtypeStruct((Mp, Hp), _NN_DTYPE),
        grid=(Mp // tm, nk),
        in_specs=[
            pl.BlockSpec((tm, tk), lambda i, k: (i, k)),
            pl.BlockSpec((tk, Hp), lambda i, k: (k, 0)),
            pl.BlockSpec((1, Hp), lambda i, k: (0, 0)),
            pl.BlockSpec((Hp, Hp), lambda i, k: (0, 0)),   # constant index: loaded once
            pl.BlockSpec((1, Hp), lambda i, k: (0, 0)),
        ],
        out_specs=pl.BlockSpec((tm, Hp), lambda i, k: (i, 0)),
        scratch_shapes=() if single_k else (pltpu.VMEM((tm, Hp), jnp.float32),),
        compiler_params=_compiler_params(),
    )(xp, w1p, b1p, w2p, b2p)
    # Slice back to logical hidden width only because the next im2col needs it
    # (tiny bf16 copy); the (M, hidden) intermediate itself never left VMEM.
    return out[:M, :hidden].reshape(B, H, W, hidden)


def conv3x3_affine(z, w, b, zp):
    """Fused: final 3x3 conv of the coupling net + affine coupling epilogue.
    z : (B,H,W,Cin) coupling-net hidden activation (bf16), w : (9*Cin, 2*out_ch),
    b : (2*out_ch,), zp: (B,H,W,out_ch) channels being transformed (f32).
    Returns (zp_new (B,H,W,out_ch), logdet (B,))."""
    B, H, W, Cin = z.shape
    out_ch = w.shape[1] // 2
    xc = _im2col3x3(z.astype(_NN_DTYPE))
    M, K = xc.shape
    tm = _row_tile(M)
    Mp = _round_up(M, tm)
    ocp = _round_up(out_ch, LANE)
    Np = 2 * ocp           # mu | log_scale packed side by side: 256-wide N tile
    tk, Kp = _k_tiling(K)
    nk = Kp // tk
    single_k = nk == 1

    xp = _pad2d(xc, Mp, Kp)
    w_mu = _pad2d(w[:, :out_ch], Kp, ocp)
    w_ls = _pad2d(w[:, out_ch:], Kp, ocp)
    wp = jnp.concatenate([w_mu, w_ls], axis=1).astype(_NN_DTYPE)
    b_mu = jnp.pad(b[:out_ch], (0, ocp - out_ch))
    b_ls = jnp.pad(b[out_ch:], (0, ocp - out_ch))
    bp = jnp.concatenate([b_mu, b_ls]).reshape(1, Np).astype(jnp.float32)
    zpp = _pad2d(zp.reshape(M, out_ch).astype(jnp.float32), Mp, ocp)

    out, lsum = pl.pallas_call(
        functools.partial(_mm_affine_kernel, out_ch=out_ch, ocp=ocp,
                          single_k=single_k),
        out_shape=(jax.ShapeDtypeStruct((Mp, ocp), jnp.float32),
                   jax.ShapeDtypeStruct((Mp, 1), jnp.float32)),
        grid=(Mp // tm, nk),
        in_specs=[
            pl.BlockSpec((tm, tk), lambda i, k: (i, k)),
            pl.BlockSpec((tk, Np), lambda i, k: (k, 0)),
            pl.BlockSpec((1, Np), lambda i, k: (0, 0)),
            pl.BlockSpec((tm, ocp), lambda i, k: (i, 0)),
        ],
        out_specs=(pl.BlockSpec((tm, ocp), lambda i, k: (i, 0)),
                   pl.BlockSpec((tm, 1), lambda i, k: (i, 0))),
        scratch_shapes=() if single_k else (pltpu.VMEM((tm, Np), jnp.float32),),
        compiler_params=_compiler_params(),
    )(xp, wp, bp, zpp)

    zp_new = out[:M, :out_ch].reshape(B, H, W, out_ch)
    logdet = lsum[:M, 0].reshape(B, H * W).sum(axis=1)
    return zp_new, logdet


# ----------------------------------------------------------------------------
# Flow components (functional, matching the PyTorch forward semantics)
# ----------------------------------------------------------------------------

def init_invconv(key, nf):
    """InvertibleConvLU1d.__init__: QR + LU based init."""
    w = jax.random.normal(key, (nf, nf), jnp.float32)
    q, _ = jnp.linalg.qr(w)
    p, l, u = jax.scipy.linalg.lu(q)
    s = jnp.diag(u)
    return dict(p=p, l=l, u=jnp.triu(u, k=1),
                sign_s=jnp.sign(s), log_s=jnp.log(jnp.abs(s)),
                lmask=jnp.tril(jnp.ones((nf, nf), jnp.float32), -1))


def invconv_fwd(params, x_nhwc, pre_scale=None, pre_bias=None):
    """InvertibleConvLU1d.forward. `pre_scale`/`pre_bias` optionally absorb a
    preceding per-channel affine (ActNorm):  y = (x*s + t) @ W^T  is computed
    as  x @ (s[:,None]*W^T) + t @ W^T  -- exact, zero extra kernels."""
    B, H, W, C = x_nhwc.shape
    eye = jnp.eye(C, dtype=jnp.float32)
    wl = params["l"] * params["lmask"] + eye
    wu = params["u"] * params["lmask"].T + jnp.diag(
        params["sign_s"] * jnp.exp(params["log_s"]))
    weight = params["p"] @ (wl @ wu)                  # (out, in) 1x1 conv weight
    wt = weight.T                                     # (in, out)
    bias = jnp.zeros((C,), jnp.float32)
    if pre_scale is not None:
        bias = pre_bias @ wt
        wt = pre_scale[:, None] * wt
    # TODO(synk): invertibility-critical path kept in f32 MXU emulation; a bf16x3
    # split would cut MXU passes if forward accuracy allows at larger C.
    out = matmul_bias(x_nhwc.reshape(-1, C), wt, bias,
                      compute_dtype=jnp.float32)
    logdet = jnp.sum(params["log_s"]) * (H * W) * jnp.ones((B,), jnp.float32)
    return out.reshape(B, H, W, C), logdet


def init_actnorm(key, C):
    """ActNorm2dFlow.reset_parameters: log_scale ~ N(0, 0.05), bias = 0."""
    return dict(log_scale=0.05 * jax.random.normal(key, (C,), jnp.float32),
                bias=jnp.zeros((C,), jnp.float32))


def init_nice_conv_block(key, in_ch, out_ch, hidden):
    # NOTE: on v6e/v7x, hidden in multiples of 256 fills the 2x256^2 MXU best.
    k1, k2, k3 = jax.random.split(key, 3)
    return dict(
        w1=0.05 * jax.random.normal(k1, (9 * in_ch, hidden), jnp.float32),
        b1=jnp.zeros((hidden,), jnp.float32),
        w2=0.05 * jax.random.normal(k2, (hidden, hidden), jnp.float32),
        b2=jnp.zeros((hidden,), jnp.float32),
        w3=0.01 * jax.random.normal(k3, (9 * hidden, out_ch), jnp.float32),
        b3=jnp.zeros((out_ch,), jnp.float32),
    )


def init_nice2d(key, in_channels, hidden, factor):
    out_ch = in_channels // factor
    z1_ch = in_channels - out_ch                       # order='up'
    return dict(net=init_nice_conv_block(key, z1_ch, 2 * out_ch, hidden))


def nice2d_fwd(params, x_nhwc):
    """NICE2d.forward (affine transform, continuous split, order='up').
    Channel counts are derived from parameter shapes (static under jit)."""
    B, H, W, C = x_nhwc.shape
    p = params["net"]
    out_ch = p["w3"].shape[1] // 2
    z1_ch = C - out_ch
    z1 = x_nhwc[..., :z1_ch]
    z2 = x_nhwc[..., z1_ch:]
    # NICEConvBlock: [conv3x3 -> relu -> conv1x1 -> relu] fused in one kernel,
    # then [conv3x3 fused with the affine coupling + log-scale reduction].
    h = coupling_frontend(z1, p["w1"], p["b1"], p["w2"], p["b2"])
    z2_new, logdet = conv3x3_affine(h, p["w3"], p["b3"], z2)
    return jnp.concatenate([z1, z2_new], axis=-1), logdet


# TODO(synk): the original flow_step (MaCowStep with masked convolutions) is not
# part of the provided source; a Glow-style step (invertible 1x1 conv + NICE2d
# affine coupling) is used as the flow step.
def init_flowstep(key, C, hidden):
    k1, k2 = jax.random.split(key)
    return dict(conv1x1=init_invconv(k1, C), coupling=init_nice2d(k2, C, hidden, 2))


def flowstep_fwd(params, x_nhwc):
    out, ld = invconv_fwd(params["conv1x1"], x_nhwc)
    out, ld2 = nice2d_fwd(params["coupling"], out)
    return out, ld + ld2


def init_prior(key, C, hidden, factor):
    k1, k2, k3 = jax.random.split(key, 3)
    out_ch = C // factor
    return dict(conv1x1=init_invconv(k1, C),
                coupling=init_nice2d(k2, C, hidden, factor),
                actnorm=init_actnorm(k3, out_ch))


def prior_fwd(params, x_nhwc):
    """MultiScalePrior.forward (use_1x1=True). Returns (out, logdet, scale, bias)
    where the ActNorm affine on the last out_ch channels is *deferred* so it can
    be absorbed by the following 1x1 shuffle conv."""
    B, H, W, C = x_nhwc.shape
    out, logdet = invconv_fwd(params["conv1x1"], x_nhwc)
    out, ld = nice2d_fwd(params["coupling"], out)
    logdet = logdet + ld
    out_ch = params["actnorm"]["log_scale"].shape[0]
    z1_ch = C - out_ch
    out2 = out[..., z1_ch:]
    # ActNorm2dFlow data-dependent init (first forward of a fresh module):
    out0 = out2 * jnp.exp(params["actnorm"]["log_scale"]) + params["actnorm"]["bias"]
    flat = out0.reshape(-1, out_ch)
    mean = flat.mean(axis=0)
    std = flat.std(axis=0, ddof=1)
    inv_stdv = 1.0 / (std + 1e-6)
    an_log_scale = jnp.log(inv_stdv)
    an_bias = -mean * inv_stdv
    logdet = logdet + jnp.sum(an_log_scale) * (H * W) * jnp.ones((B,), jnp.float32)
    # per-channel affine for the FULL C channels (identity on the first z1_ch)
    pre_scale = jnp.concatenate([jnp.ones((z1_ch,), jnp.float32),
                                 jnp.exp(an_log_scale)])
    pre_bias = jnp.concatenate([jnp.zeros((z1_ch,), jnp.float32), an_bias])
    return out, logdet, pre_scale, pre_bias


# ----------------------------------------------------------------------------
# MultiScaleInternal
# ----------------------------------------------------------------------------

def init_multiscale_internal(key, in_channels, hidden_channels, num_steps, factor=2):
    assert len(num_steps) < factor
    scales = []
    C = in_channels
    f = factor
    channel_step = in_channels // factor
    for ns in num_steps:
        key, *ks = jax.random.split(key, ns + 3)
        steps = [init_flowstep(ks[i], C, hidden_channels) for i in range(ns)]
        prior = init_prior(ks[ns], C, hidden_channels, f)
        shuffle = init_invconv(ks[ns + 1], C)   # use_1x1=True -> InvertibleConvLU1d
        scales.append(dict(steps=steps, prior=prior, shuffle=shuffle))
        assert C - channel_step == C - C // f
        C = C - channel_step
        f -= 1
    return dict(scales=scales)


def multiscale_internal_fwd(params, x_nchw):
    """MultiScaleInternal.forward (not reverse). Returns (out NCHW, logdet [B])."""
    x = jnp.transpose(x_nchw, (0, 2, 3, 1)).astype(jnp.float32)     # -> NHWC
    B = x.shape[0]
    logdet_accum = jnp.zeros((B,), jnp.float32)
    out = x
    outputs = []
    for scale in params["scales"]:
        for step in scale["steps"]:
            out, ld = flowstep_fwd(step, out)
            logdet_accum = logdet_accum + ld
        out, ld, pre_scale, pre_bias = prior_fwd(scale["prior"], out)
        logdet_accum = logdet_accum + ld
        # shuffle 1x1 conv with the prior's ActNorm folded into its weight/bias
        out, ld = invconv_fwd(scale["shuffle"], out,
                              pre_scale=pre_scale, pre_bias=pre_bias)
        logdet_accum = logdet_accum + ld
        out_ch = scale["prior"]["actnorm"]["log_scale"].shape[0]
        z1_ch = out.shape[-1] - out_ch
        outputs.append(out[..., z1_ch:])
        out = out[..., :z1_ch]
    outputs.append(out)
    outputs.reverse()
    out = jnp.concatenate(outputs, axis=-1)
    return jnp.transpose(out, (0, 3, 1, 2)), logdet_accum           # back to NCHW


if __name__ == "__main__":
    key = jax.random.PRNGKey(0)
    k_x, k_p = jax.random.split(key)

    B, C, H, W = 2, 8, 16, 16
    hidden_channels = 32
    num_steps = [2]          # one scale, two flow steps (num_layers < factor=2)

    x = jax.random.normal(k_x, (B, C, H, W), jnp.float32)
    params = init_multiscale_internal(k_p, C, hidden_channels, num_steps, factor=2)

    fwd = jax.jit(multiscale_internal_fwd)
    out, logdet = fwd(params, x)
    jax.block_until_ready((out, logdet))

    assert out.shape == (B, C, H, W), out.shape
    assert logdet.shape == (B,), logdet.shape
    assert bool(jnp.all(jnp.isfinite(out))) and bool(jnp.all(jnp.isfinite(logdet)))
    print("KERNEL_OK")
</pallas_src>

<mosaic_0001>
module attributes {stable_mosaic.version = 11 : i64} {
  func.func @_mm_kernel(%arg0: i32, %arg1: i32, %arg2: memref<256x8xf32, #tpu.memory_space<vmem>>, %arg3: memref<8x128xf32, #tpu.memory_space<vmem>>, %arg4: memref<1x128xf32, #tpu.memory_space<vmem>>, %arg5: memref<256x128xf32, #tpu.memory_space<vmem>>) attributes {dimension_semantics = [#tpu.dimension_semantics<parallel>, #tpu.dimension_semantics<arbitrary>], iteration_bounds = array<i64: 2, 1>, scalar_prefetch = 0 : i64, scratch_operands = 0 : i64, tpu.core_type = #tpu.core_type<tc>, window_params = [{transform_indices = @transform_0, window_bounds = array<i64: 256, 8>}, {transform_indices = @transform_1, window_bounds = array<i64: 8, 128>}, {pipeline_mode = #tpu.pipeline_mode<synchronous>, transform_indices = @transform_2, window_bounds = array<i64: 1, 128>}, {transform_indices = @transform_3, window_bounds = array<i64: 256, 128>}]} {
    %c0 = arith.constant 0 : index
    %c0_0 = arith.constant 0 : index
    %0 = vector.load %arg2[%c0, %c0_0] : memref<256x8xf32, #tpu.memory_space<vmem>>, vector<256x8xf32>
    %c0_1 = arith.constant 0 : index
    %c0_2 = arith.constant 0 : index
    %1 = vector.load %arg3[%c0_1, %c0_2] : memref<8x128xf32, #tpu.memory_space<vmem>>, vector<8x128xf32>
    %cst = arith.constant dense<0.000000e+00> : vector<256x128xf32>
    %2 = tpu.matmul %0, %1, %cst {dimension_numbers = #tpu.dot_dimension_numbers<[1], [0], [0], [1], [0, 0, 1, 1], [], []>} : vector<256x8xf32>, vector<8x128xf32>, vector<256x128xf32> -> vector<256x128xf32>
    %c0_3 = arith.constant 0 : index
    %c0_4 = arith.constant 0 : index
    %3 = vector.load %arg4[%c0_3, %c0_4] : memref<1x128xf32, #tpu.memory_space<vmem>>, vector<1x128xf32>
    %4 = vector.broadcast %3 : vector<1x128xf32> to vector<256x128xf32>
    %5 = arith.addf %2, %4 : vector<256x128xf32>
    %c0_5 = arith.constant 0 : index
    %c0_6 = arith.constant 0 : index
    %6 = vector.load %arg5[%c0_5, %c0_6] : memref<256x128xf32, #tpu.memory_space<vmem>>, vector<256x128xf32>
    tpu.vector_store %arg5[%c0_5, %c0_6], %5 {strides = array<i32>} : memref<256x128xf32, #tpu.memory_space<vmem>>, vector<256x128xf32>,
    return
  }
  func.func @transform_0(%arg0: i32, %arg1: i32) -> (i32, i32) {
    %c0_i32 = arith.constant 0 : i32
    return %arg0, %arg1 : i32, i32
  }
  func.func @transform_1(%arg0: i32, %arg1: i32) -> (i32, i32) {
    %c0_i32 = arith.constant 0 : i32
    %c0_i32_0 = arith.constant 0 : i32
    return %arg1, %c0_i32 : i32, i32
  }
  func.func @transform_2(%arg0: i32, %arg1: i32) -> (i32, i32) {
    %c0_i32 = arith.constant 0 : i32
    %c0_i32_0 = arith.constant 0 : i32
    %c0_i32_1 = arith.constant 0 : i32
    return %c0_i32, %c0_i32_0 : i32, i32
  }
  func.func @transform_3(%arg0: i32, %arg1: i32) -> (i32, i32) {
    %c0_i32 = arith.constant 0 : i32
    %c0_i32_0 = arith.constant 0 : i32
    return %arg0, %c0_i32 : i32, i32
  }
}

module attributes {stable_mosaic.version = 11 : i64} {
  func.func @_mm2_kernel(%arg0: i32, %arg1: i32, %arg2: memref<256x40xbf16, #tpu.memory_space<vmem>>, %arg3: memref<40x128xbf16, #tpu.memory_space<vmem>>, %arg4: memref<1x128xf32, #tpu.memory_space<vmem>>, %arg5: memref<128x128xbf16, #tpu.memory_space<vmem>>, %arg6: memref<1x128xf32, #tpu.memory_space<vmem>>, %arg7: memref<256x128xbf16, #tpu.memory_space<vmem>>) attributes {dimension_semantics = [#tpu.dimension_semantics<parallel>, #tpu.dimension_semantics<arbitrary>], iteration_bounds = array<i64: 2, 1>, scalar_prefetch = 0 : i64, scratch_operands = 0 : i64, tpu.core_type = #tpu.core_type<tc>, window_params = [{transform_indices = @transform_0, window_bounds = array<i64: 256, 40>}, {transform_indices = @transform_1, window_bounds = array<i64: 40, 128>}, {pipeline_mode = #tpu.pipeline_mode<synchronous>, transform_indices = @transform_2, window_bounds = array<i64: 1, 128>}, {pipeline_mode = #tpu.pipeline_mode<synchronous>, transform_indices = @transform_3, window_bounds = array<i64: 128, 128>}, {pipeline_mode = #tpu.pipeline_mode<synchronous>, transform_indices = @transform_4, window_bounds = array<i64: 1, 128>}, {transform_indices = @transform_5, window_bounds = array<i64: 256, 128>}]} {
    %c0 = arith.constant 0 : index
    %c0_0 = arith.constant 0 : index
    %0 = vector.load %arg2[%c0, %c0_0] : memref<256x40xbf16, #tpu.memory_space<vmem>>, vector<256x40xbf16>
    %c0_1 = arith.constant 0 : index
    %c0_2 = arith.constant 0 : index
    %1 = vector.load %arg3[%c0_1, %c0_2] : memref<40x128xbf16, #tpu.memory_space<vmem>>, vector<40x128xbf16>
    %cst = arith.constant dense<0.000000e+00> : vector<256x128xf32>
    %2 = tpu.matmul %0, %1, %cst {dimension_numbers = #tpu.dot_dimension_numbers<[1], [0], [0], [1], [0, 0, 1, 1], [], []>} : vector<256x40xbf16>, vector<40x128xbf16>, vector<256x128xf32> -> vector<256x128xf32>
    %c0_3 = arith.constant 0 : index
    %c0_4 = arith.constant 0 : index
    %3 = vector.load %arg4[%c0_3, %c0_4] : memref<1x128xf32, #tpu.memory_space<vmem>>, vector<1x128xf32>
    %4 = vector.broadcast %3 : vector<1x128xf32> to vector<256x128xf32>
    %5 = arith.addf %2, %4 : vector<256x128xf32>
    %cst_5 = arith.constant 0.000000e+00 : f32
    %6 = vector.broadcast %cst_5 : f32 to vector<256x128xf32>
    %7 = arith.maximumf %5, %6 : vector<256x128xf32>
    %8 = arith.truncf %7 : vector<256x128xf32> to vector<256x128xbf16>
    %c0_6 = arith.constant 0 : index
    %c0_7 = arith.constant 0 : index
    %9 = vector.load %arg5[%c0_6, %c0_7] : memref<128x128xbf16, #tpu.memory_space<vmem>>, vector<128x128xbf16>
    %cst_8 = arith.constant dense<0.000000e+00> : vector<256x128xf32>
    %10 = tpu.matmul %8, %9, %cst_8 {dimension_numbers = #tpu.dot_dimension_numbers<[1], [0], [0], [1], [0, 0, 1, 1], [], []>} : vector<256x128xbf16>, vector<128x128xbf16>, vector<256x128xf32> -> vector<256x128xf32>
    %c0_9 = arith.constant 0 : index
    %c0_10 = arith.constant 0 : index
    %11 = vector.load %arg6[%c0_9, %c0_10] : memref<1x128xf32, #tpu.memory_space<vmem>>, vector<1x128xf32>
    %12 = vector.broadcast %11 : vector<1x128xf32> to vector<256x128xf32>
    %13 = arith.addf %10, %12 : vector<256x128xf32>
    %cst_11 = arith.constant 0.000000e+00 : f32
    %14 = vector.broadcast %cst_11 : f32 to vector<256x128xf32>
    %15 = arith.maximumf %13, %14 : vector<256x128xf32>
    %16 = arith.truncf %15 : vector<256x128xf32> to vector<256x128xbf16>
    %c0_12 = arith.constant 0 : index
    %c0_13 = arith.constant 0 : index
    %17 = vector.load %arg7[%c0_12, %c0_13] : memref<256x128xbf16, #tpu.memory_space<vmem>>, vector<256x128xbf16>
    tpu.vector_store %arg7[%c0_12, %c0_13], %16 {strides = array<i32>} : memref<256x128xbf16, #tpu.memory_space<vmem>>, vector<256x128xbf16>,
    return
  }
  func.func @transform_0(%arg0: i32, %arg1: i32) -> (i32, i32) {
    %c0_i32 = arith.constant 0 : i32
    return %arg0, %arg1 : i32, i32
  }
  func.func @transform_1(%arg0: i32, %arg1: i32) -> (i32, i32) {
    %c0_i32 = arith.constant 0 : i32
    %c0_i32_0 = arith.constant 0 : i32
    return %arg1, %c0_i32 : i32, i32
  }
  func.func @transform_2(%arg0: i32, %arg1: i32) -> (i32, i32) {
    %c0_i32 = arith.constant 0 : i32
    %c0_i32_0 = arith.constant 0 : i32
    %c0_i32_1 = arith.constant 0 : i32
    return %c0_i32, %c0_i32_0 : i32, i32
  }
  func.func @transform_3(%arg0: i32, %arg1: i32) -> (i32, i32) {
    %c0_i32 = arith.constant 0 : i32
    %c0_i32_0 = arith.constant 0 : i32
    %c0_i32_1 = arith.constant 0 : i32
    return %c0_i32, %c0_i32_0 : i32, i32
  }
  func.func @transform_4(%arg0: i32, %arg1: i32) -> (i32, i32) {
    %c0_i32 = arith.constant 0 : i32
    %c0_i32_0 = arith.constant 0 : i32
    %c0_i32_1 = arith.constant 0 : i32
    return %c0_i32, %c0_i32_0 : i32, i32
  }
  func.func @transform_5(%arg0: i32, %arg1: i32) -> (i32, i32) {
    %c0_i32 = arith.constant 0 : i32
    %c0_i32_0 = arith.constant 0 : i32
    return %arg0, %c0_i32 : i32, i32
  }
}

module attributes {stable_mosaic.version = 11 : i64} {
  func.func @_mm_affine_kernel(%arg0: i32, %arg1: i32, %arg2: memref<256x288xbf16, #tpu.memory_space<vmem>>, %arg3: memref<288x256xbf16, #tpu.memory_space<vmem>>, %arg4: memref<1x256xf32, #tpu.memory_space<vmem>>, %arg5: memref<256x128xf32, #tpu.memory_space<vmem>>, %arg6: memref<256x128xf32, #tpu.memory_space<vmem>>, %arg7: memref<256x1xf32, #tpu.memory_space<vmem>>) attributes {dimension_semantics = [#tpu.dimension_semantics<parallel>, #tpu.dimension_semantics<arbitrary>], iteration_bounds = array<i64: 2, 1>, scalar_prefetch = 0 : i64, scratch_operands = 0 : i64, tpu.core_type = #tpu.core_type<tc>, window_params = [{transform_indices = @transform_0, window_bounds = array<i64: 256, 288>}, {transform_indices = @transform_1, window_bounds = array<i64: 288, 256>}, {pipeline_mode = #tpu.pipeline_mode<synchronous>, transform_indices = @transform_2, window_bounds = array<i64: 1, 256>}, {transform_indices = @transform_3, window_bounds = array<i64: 256, 128>}, {transform_indices = @transform_4, window_bounds = array<i64: 256, 128>}, {transform_indices = @transform_5, window_bounds = array<i64: 256, 1>}]} {
    %c0 = arith.constant 0 : index
    %c0_0 = arith.constant 0 : index
    %0 = vector.load %arg2[%c0, %c0_0] : memref<256x288xbf16, #tpu.memory_space<vmem>>, vector<256x288xbf16>
    %c0_1 = arith.constant 0 : index
    %c0_2 = arith.constant 0 : index
    %1 = vector.load %arg3[%c0_1, %c0_2] : memref<288x256xbf16, #tpu.memory_space<vmem>>, vector<288x256xbf16>
    %cst = arith.constant dense<0.000000e+00> : vector<256x256xf32>
    %2 = tpu.matmul %0, %1, %cst {dimension_numbers = #tpu.dot_dimension_numbers<[1], [0], [0], [1], [0, 0, 1, 1], [], []>} : vector<256x288xbf16>, vector<288x256xbf16>, vector<256x256xf32> -> vector<256x256xf32>
    %c0_3 = arith.constant 0 : index
    %c0_4 = arith.constant 0 : index
    %3 = vector.load %arg4[%c0_3, %c0_4] : memref<1x256xf32, #tpu.memory_space<vmem>>, vector<1x256xf32>
    %4 = vector.broadcast %3 : vector<1x256xf32> to vector<256x256xf32>
    %5 = arith.addf %2, %4 : vector<256x256xf32>
    %6 = vector.extract_strided_slice %5 {offsets = [0, 0], sizes = [256, 128], strides = [1, 1]} : vector<256x256xf32> to vector<256x128xf32>
    %7 = vector.extract_strided_slice %5 {offsets = [0, 128], sizes = [256, 128], strides = [1, 1]} : vector<256x256xf32> to vector<256x128xf32>
    %cst_5 = arith.constant 2.000000e+00 : f32
    %8 = vector.broadcast %cst_5 : f32 to vector<256x128xf32>
    %9 = arith.addf %7, %8 : vector<256x128xf32>
    %10 = math.absf %9 : vector<256x128xf32>
    %cst_6 = arith.constant 0.000000e+00 : f32
    %11 = vector.broadcast %cst_6 : f32 to vector<256x128xf32>
    %12 = arith.subf %11, %10 : vector<256x128xf32>
    %13 = math.exp %12 : vector<256x128xf32>
    %cst_7 = arith.constant 0.000000e+00 : f32
    %14 = vector.broadcast %cst_7 : f32 to vector<256x128xf32>
    %15 = arith.minimumf %9, %14 : vector<256x128xf32>
    %cst_8 = arith.constant 1.000000e+00 : f32
    %16 = vector.broadcast %cst_8 : f32 to vector<256x128xf32>
    %17 = arith.addf %16, %13 : vector<256x128xf32>
    %18 = math.log %17 : vector<256x128xf32>
    %19 = arith.subf %15, %18 : vector<256x128xf32>
    %cst_9 = arith.constant 1.000000e+00 : f32
    %20 = vector.broadcast %cst_9 : f32 to vector<256x128xf32>
    %21 = arith.addf %20, %13 : vector<256x128xf32>
    %22 = tpu.reciprocal %21 {approx = true} : vector<256x128xf32> -> vector<256x128xf32>
    %cst_10 = arith.constant 0.000000e+00 : f32
    %23 = vector.broadcast %cst_10 : f32 to vector<256x128xf32>
    %24 = arith.cmpf oge, %9, %23 : vector<256x128xf32>
    %25 = arith.mulf %13, %22 : vector<256x128xf32>
    %26 = arith.select %24, %22, %25 : vector<256x128xi1>, vector<256x128xf32>
    %c0_11 = arith.constant 0 : index
    %c0_12 = arith.constant 0 : index
    %27 = vector.load %arg5[%c0_11, %c0_12] : memref<256x128xf32, #tpu.memory_space<vmem>>, vector<256x128xf32>
    %28 = arith.mulf %27, %26 : vector<256x128xf32>
    %29 = arith.addf %28, %6 : vector<256x128xf32>
    %c0_13 = arith.constant 0 : index
    %c0_14 = arith.constant 0 : index
    %30 = vector.load %arg6[%c0_13, %c0_14] : memref<256x128xf32, #tpu.memory_space<vmem>>, vector<256x128xf32>
    tpu.vector_store %arg6[%c0_13, %c0_14], %29 {strides = array<i32>} : memref<256x128xf32, #tpu.memory_space<vmem>>, vector<256x128xf32>,
    %31 = tpu.iota {dimensions = array<i32: 1>} : vector<256x128xi32>
    %c4_i32 = arith.constant 4 : i32
    %32 = vector.broadcast %c4_i32 : i32 to vector<256x128xi32>
    %33 = arith.cmpi slt, %31, %32 : vector<256x128xi32>
    %cst_15 = arith.constant 0.000000e+00 : f32
    %34 = vector.broadcast %cst_15 : f32 to vector<256x128xf32>
    %35 = arith.select %33, %19, %34 : vector<256x128xi1>, vector<256x128xf32>
    %cst_16 = arith.constant dense<0.000000e+00> : vector<256xf32>
    %36 = vector.multi_reduction <add>, %35, %cst_16 [1] : vector<256x128xf32> to vector<256xf32>
    %37 = vector.shape_cast %36 : vector<256xf32> to vector<256x1xf32>
    %c0_17 = arith.constant 0 : index
    %c0_18 = arith.constant 0 : index
    %38 = vector.load %arg7[%c0_17, %c0_18] : memref<256x1xf32, #tpu.memory_space<vmem>>, vector<256x1xf32>
    tpu.vector_store %arg7[%c0_17, %c0_18], %37 {strides = array<i32>} : memref<256x1xf32, #tpu.memory_space<vmem>>, vector<256x1xf32>,
    return
  }
  func.func @transform_0(%arg0: i32, %arg1: i32) -> (i32, i32) {
    %c0_i32 = arith.constant 0 : i32
    return %arg0, %arg1 : i32, i32
  }
  func.func @transform_1(%arg0: i32, %arg1: i32) -> (i32, i32) {
    %c0_i32 = arith.constant 0 : i32
    %c0_i32_0 = arith.constant 0 : i32
    return %arg1, %c0_i32 : i32, i32
  }
  func.func @transform_2(%arg0: i32, %arg1: i32) -> (i32, i32) {
    %c0_i32 = arith.constant 0 : i32
    %c0_i32_0 = arith.constant 0 : i32
    %c0_i32_1 = arith.constant 0 : i32
    return %c0_i32, %c0_i32_0 : i32, i32
  }
  func.func @transform_3(%arg0: i32, %arg1: i32) -> (i32, i32) {
    %c0_i32 = arith.constant 0 : i32
    %c0_i32_0 = arith.constant 0 : i32
    return %arg0, %c0_i32 : i32, i32
  }
  func.func @transform_4(%arg0: i32, %arg1: i32) -> (i32, i32) {
    %c0_i32 = arith.constant 0 : i32
    %c0_i32_0 = arith.constant 0 : i32
    return %arg0, %c0_i32 : i32, i32
  }
  func.func @transform_5(%arg0: i32, %arg1: i32) -> (i32, i32) {
    %c0_i32 = arith.constant 0 : i32
    %c0_i32_0 = arith.constant 0 : i32
    return %arg0, %c0_i32 : i32, i32
  }
}

</mosaic_0001>

<llo_original>
// kernel: multiscale_internal_fwd.10
$region0: #{multiscale_internal_fwd.10}
  #allocation0 [shape = 'u32[]', space=smem, size = 0x4, offset = 0x4, fixed_abs, tag = 'smem constant byte address 0x4 - core index']
  #allocation1 [shape = 'u32[144,128]{1,0:T(1,128)}', space=vmem, size = 0x12000, scoped, tag = 'internal scratch']
  %s0 = inlined_call_operand.vmem [shape: f32[512,8], index: 0, kind: input, shape index: {}]
  %s1 = inlined_call_operand.vmem [shape: f32[8,128], index: 1, kind: input, shape index: {}]
  %s2 = inlined_call_operand.vmem [shape: f32[1,128], index: 2, kind: input, shape index: {}]
  %s3 = inlined_call_operand.vmem [shape: f32[512,128], index: 3, kind: output, shape index: {}]
  %s4 = sld [smem:[#allocation0]]
  $region45: #{multiscale_internal_fwd.10} parent=0
    _
  %s6 = ssub.s32 1, %s4
  %s7 = scalar_select 0, %s6, %s4
  loop: start=0, step=1, limit=4
  $region2: #{multiscale_internal_fwd.10} parent=0 // loop_pre_header
    _
  $region3: #{multiscale_internal_fwd.10} parent=0 // loop_header
    %s9 = sphi 0, %s13
    %p10 = scmp.ge.s32.totalorder %s9, 4
    %s16 = sphi 0, %s28
    %s17 = sphi 0, %s24
    %s18 = sphi 0, %s16
    %s19 = sphi 0, %s17
    %s20 = sphi 0, %s18
    %s21 = sphi 0, %s19
    %s33 = sphi 0, %s35
    %s36 = sphi 0, %s33
    %s37 = sphi 0, %s36
    %s53 = sphi 0, %s37
    %s59 = sphi 0, %s61
    %s62 = sphi 0, %s59
    %s63 = sphi 0, %s62
    %s79 = sphi 0, %s63
    %s83 = sphi 0, %s83
    %s85 = sphi 0, %s83
    %s86 = sphi 0, %s85
    %s100 = sphi 0, %s86
    %s106 = sphi 0, %s108
    %s109 = sphi 0, %s106
    %s110 = sphi 0, %s109
    %s126 = sphi 0, %s110
  $region4: #{multiscale_internal_fwd.10} parent=0 // loop_header_branch
    %12 = sbr.rel (%p10) target = $region8
  $region5: #{multiscale_internal_fwd.10} parent=0 // loop_body
    %s14 = ssub.s32 %s9, 1
    %s15 = ssub.s32 %s9, 2
    %s22 = sadd.s32 1, %s17
    %p23 = scmp.ge.s32.totalorder %s22, 1
    %s24 = scalar_select %p23, 0, %s22
    %s25 = sadd.s32 1, %s16
    %s26 = scalar_select %p23, %s25, %s16
    %p27 = scmp.ge.s32.totalorder %s26, 2
    %s28 = scalar_select %p27, 0, %s26
    %s29 = ssub.s32 %s16, %s28
    %s30 = ssub.s32 %s17, %s24
    %s31 = sor.u32 %s29, %s30
    %p32 = scmp.eq.s32.totalorder %s31, 0
    %s34 = sadd.s32 %s33, 1
    %s35 = scalar_select %p32, %s33, %s34
    %p38 = pneg %p32
    %p39 = scmp.eq.s32.totalorder %s9, 1
    %p40 = por %p38, %p39
    %p41 = scmp.ne.s32.totalorder %s33, %s36
    %p42 = scmp.eq.s32.totalorder %s9, 0
    %p43 = por %p41, %p42
    %p44 = scmp.ne.s32.totalorder %s33, %s36
    %p45 = scmp.eq.s32.totalorder %s14, 1
    %p46 = por %p44, %p45
    %p47 = scmp.ne.s32.totalorder %s36, %s37
    %p48 = scmp.eq.s32.totalorder %s14, 0
    %p49 = por %p47, %p48
    %p50 = scmp.ne.s32.totalorder %s36, %s37
    %p51 = scmp.eq.s32.totalorder %s15, 1
    %p52 = por %p50, %p51
    %p54 = scmp.ne.s32.totalorder %s37, %s53
    %p55 = scmp.eq.s32.totalorder %s15, 0
    %p56 = por %p54, %p55
    %s57 = ssub.s32 %s17, %s24
    %p58 = scmp.eq.s32.totalorder %s57, 0
    %s60 = sadd.s32 %s59, 1
    %s61 = scalar_select %p58, %s59, %s60
    %p64 = pneg %p58
    %p65 = scmp.eq.s32.totalorder %s9, 1
    %p66 = por %p64, %p65
    %p67 = scmp.ne.s32.totalorder %s59, %s62
    %p68 = scmp.eq.s32.totalorder %s9, 0
    %p69 = por %p67, %p68
    %p70 = scmp.ne.s32.totalorder %s59, %s62
    %p71 = scmp.eq.s32.totalorder %s14, 1
    %p72 = por %p70, %p71
    %p73 = scmp.ne.s32.totalorder %s62, %s63
    %p74 = scmp.eq.s32.totalorder %s14, 0
    %p75 = por %p73, %p74
    %p76 = scmp.ne.s32.totalorder %s62, %s63
    %p77 = scmp.eq.s32.totalorder %s15, 1
    %p78 = por %p76, %p77
    %p80 = scmp.ne.s32.totalorder %s63, %s79
    %p81 = scmp.eq.s32.totalorder %s15, 0
    %p82 = por %p80, %p81
    %s84 = sadd.s32 %s83, 1
    %p87 = scmp.eq.s32.totalorder %s9, 1
    %p88 = scmp.ne.s32.totalorder %s83, %s85
    %p89 = scmp.eq.s32.totalorder %s9, 0
    %p90 = por %p88, %p89
    %p91 = scmp.ne.s32.totalorder %s83, %s85
    %p92 = scmp.eq.s32.totalorder %s14, 1
    %p93 = por %p91, %p92
    %p94 = scmp.ne.s32.totalorder %s85, %s86
    %p95 = scmp.eq.s32.totalorder %s14, 0
    %p96 = por %p94, %p95
    %p97 = scmp.ne.s32.totalorder %s85, %s86
    %p98 = scmp.eq.s32.totalorder %s15, 1
    %p99 = por %p97, %p98
    %p101 = scmp.ne.s32.totalorder %s86, %s100
    %p102 = scmp.eq.s32.totalorder %s15, 0
    %p103 = por %p101, %p102
    %s104 = ssub.s32 %s16, %s28
    %p105 = scmp.eq.s32.totalorder %s104, 0
    %s107 = sadd.s32 %s106, 1
    %s108 = scalar_select %p105, %s106, %s107
    %p111 = pneg %p105
    %p112 = scmp.eq.s32.totalorder %s9, 1
    %p113 = por %p111, %p112
    %p114 = scmp.ne.s32.totalorder %s106, %s109
    %p115 = scmp.eq.s32.totalorder %s9, 0
    %p116 = por %p114, %p115
    %p117 = scmp.ne.s32.totalorder %s106, %s109
    %p118 = scmp.eq.s32.totalorder %s14, 1
    %p119 = por %p117, %p118
    %p120 = scmp.ne.s32.totalorder %s109, %s110
    %p121 = scmp.eq.s32.totalorder %s14, 0
    %p122 = por %p120, %p121
    %p123 = scmp.ne.s32.totalorder %s109, %s110
    %p124 = scmp.eq.s32.totalorder %s15, 1
    %p125 = por %p123, %p124
    %p127 = scmp.ne.s32.totalorder %s110, %s126
    %p128 = scmp.eq.s32.totalorder %s15, 0
    %p129 = por %p127, %p128
    %p130 = scmp.le.s32.totalorder 1, %s9
    %p131 = scmp.lt.s32.totalorder %s9, 3
    %p132 = pnand %p130, %p131
    %p133 = pneg %p132
    // Predicated region
    $region9: #{multiscale_internal_fwd.10} parent=5 // pred_check
      _
    $region10: #{multiscale_internal_fwd.10} parent=5 // pred_check_branch
      %135 = sbr.rel (%p132) target = $region12
    $region11: #{multiscale_internal_fwd.10} parent=5 // pred_region
      %s136 = ssub.s32 %s9, 1
      // Predicated region
      $region13: #{multiscale_internal_fwd.10} parent=11 // pred_check
        %p137 = pneg %p75
      $region14: #{multiscale_internal_fwd.10} parent=11 // pred_check_branch
        %139 = sbr.rel (%p137) target = $region16
      $region15: #{multiscale_internal_fwd.10} parent=11 // pred_region
        %p140 = scmp.lt.s32.totalorder %s19, 0
        %s141 = scalar_select %p140, %s19, 0
        %s142 = smul.addr %s141, 8
        %s143 = scalar_lea.vmem %s1, %s142
      $region16: #{multiscale_internal_fwd.10} parent=11 // pred_fallthru
        _
      // Predicated region
      $region17: #{multiscale_internal_fwd.10} parent=11 // pred_check
        %p144 = pneg %p96
      $region18: #{multiscale_internal_fwd.10} parent=11 // pred_check_branch
        %146 = sbr.rel (%p144) target = $region20
      $region19: #{multiscale_internal_fwd.10} parent=11 // pred_region
        _
      $region20: #{multiscale_internal_fwd.10} parent=11 // pred_fallthru
        _
    $region12: #{multiscale_internal_fwd.10} parent=5 // pred_fallthru
      _
    %p147 = scmp.lt.s32.totalorder %s9, 2
    // Predicated region
    $region21: #{multiscale_internal_fwd.10} parent=5 // pred_check
      %p148 = pneg %p147
    $region22: #{multiscale_internal_fwd.10} parent=5 // pred_check_branch
      %150 = sbr.rel (%p148) target = $region24
    $region23: #{multiscale_internal_fwd.10} parent=5 // pred_region
      // Predicated region
      $region25: #{multiscale_internal_fwd.10} parent=23 // pred_check
        %p151 = pneg %p43
      $region26: #{multiscale_internal_fwd.10} parent=23 // pred_check_branch
        %153 = sbr.rel (%p151) target = $region28
      $region27: #{multiscale_internal_fwd.10} parent=23 // pred_region
        %s154 = smul.u32 32, %s16
        %p155 = scmp.lt.s32.totalorder %s154, 63
        %s156 = scalar_select %p155, %s154, 63
        %p157 = scmp.lt.s32.totalorder %s17, 0
        %s158 = scalar_select %p157, %s17, 0
        %s159 = sadd.s32 %s158, %s156
        %s160 = smul.addr %s159, 8
        %s161 = scalar_lea.vmem %s0, %s160
        %s162 = smul.u32 32, %s16
      $region28: #{multiscale_internal_fwd.10} parent=23 // pred_fallthru
        _
    $region24: #{multiscale_internal_fwd.10} parent=5 // pred_fallthru
      _
    %p163 = scmp.le.s32.totalorder 1, %s9
    %p164 = scmp.lt.s32.totalorder %s9, 3
    %p165 = pnand %p163, %p164
    %p166 = pneg %p165
    // Predicated region
    $region29: #{multiscale_internal_fwd.10} parent=5 // pred_check
      _
    $region30: #{multiscale_internal_fwd.10} parent=5 // pred_check_branch
      %168 = sbr.rel (%p165) target = $region32
    $region31: #{multiscale_internal_fwd.10} parent=5 // pred_region
      %s169 = ssub.s32 %s9, 1
      %s170 = smul.u32 32, %s18
      %p171 = scmp.lt.s32.totalorder %s170, 63
      %s172 = scalar_select %p171, %s170, 63
      %p173 = scmp.lt.s32.totalorder %s19, 0
      %s174 = scalar_select %p173, %s19, 0
      %s175 = sadd.s32 %s174, %s172
      %s176 = smul.addr %s175, 8
      %s177 = scalar_lea.vmem %s0, %s176
      %p178 = pneg %p49
      %p179 = pneg %p46
      %p180 = scmp.lt.s32.totalorder %s19, 0
      %s181 = scalar_select %p180, %s19, 0
      %s182 = smul.addr %s181, 8
      %s183 = scalar_lea.vmem %s1, %s182
      %p184 = pneg %p75
      %p185 = pneg %p72
      %p186 = pneg %p96
      %p187 = pneg %p93
      %p188 = pneg %p122
      %p189 = pneg %p119
      %s190 = smul.u32 32, %s18
      %p191 = scmp.lt.s32.totalorder %s190, 63
      %s192 = scalar_select %p191, %s190, 63
      %s193 = smul.addr %s192, 8
      %s194 = scalar_lea.vmem %s3, %s193
      %s195 = smul.u32 32, %s18
      %p196 = scmp.lt.s32.totalorder %s195, 63
      %s197 = scalar_select %p196, %s195, 63
      %p198 = scmp.lt.s32.totalorder %s19, 0
      %s199 = scalar_select %p198, %s19, 0
      %s200 = sadd.s32 %s199, %s197
      %s201 = smul.addr %s200, 8
      %s202 = scalar_lea.vmem %s0, %s201
      %s203 = smul.u32 32, %s18
      %p204 = scmp.lt.s32.totalorder %s19, 0
      %s205 = scalar_select %p204, %s19, 0
      %s206 = smul.addr %s205, 8
      %s207 = scalar_lea.vmem %s1, %s206
      %s208 = smul.u32 32, %s18
      %p209 = scmp.lt.s32.totalorder %s208, 63
      %s210 = scalar_select %p209, %s208, 63
      %s211 = smul.addr %s210, 8
      %s212 = scalar_lea.vmem %s3, %s211
      %s213 = smul.u32 32, %s18
      %v214 = vld [vmem:[%s202] sm:$0xff]
      %v215 = vld [vmem:[%s202 + $0x8] sm:$0xff]
      %v216 = vld [vmem:[%s202 + $0x10] sm:$0xff]
      %v217 = vld [vmem:[%s202 + $0x18] sm:$0xff]
      %v218 = vld [vmem:[%s202 + $0x20] sm:$0xff]
      %v219 = vld [vmem:[%s202 + $0x28] sm:$0xff]
      %v220 = vld [vmem:[%s202 + $0x30] sm:$0xff]
      %v221 = vld [vmem:[%s202 + $0x38] sm:$0xff]
      %v222 = vld [vmem:[%s202 + $0x40] sm:$0xff]
      %v223 = vld [vmem:[%s202 + $0x48] sm:$0xff]
      %v224 = vld [vmem:[%s202 + $0x50] sm:$0xff]
      %v225 = vld [vmem:[%s202 + $0x58] sm:$0xff]
      %v226 = vld [vmem:[%s202 + $0x60] sm:$0xff]
      %v227 = vld [vmem:[%s202 + $0x68] sm:$0xff]
      %v228 = vld [vmem:[%s202 + $0x70] sm:$0xff]
      %v229 = vld [vmem:[%s202 + $0x78] sm:$0xff]
      %v230 = vld [vmem:[%s202 + $0x80] sm:$0xff]
      %v231 = vld [vmem:[%s202 + $0x88] sm:$0xff]
      %v232 = vld [vmem:[%s202 + $0x90] sm:$0xff]
      %v233 = vld [vmem:[%s202 + $0x98] sm:$0xff]
      %v234 = vld [vmem:[%s202 + $0xa0] sm:$0xff]
      %v235 = vld [vmem:[%s202 + $0xa8] sm:$0xff]
      %v236 = vld [vmem:[%s202 + $0xb0] sm:$0xff]
      %v237 = vld [vmem:[%s202 + $0xb8] sm:$0xff]
      %v238 = vld [vmem:[%s202 + $0xc0] sm:$0xff]
      %v239 = vld [vmem:[%s202 + $0xc8] sm:$0xff]
      %v240 = vld [vmem:[%s202 + $0xd0] sm:$0xff]
      %v241 = vld [vmem:[%s202 + $0xd8] sm:$0xff]
      %v242 = vld [vmem:[%s202 + $0xe0] sm:$0xff]
      %v243 = vld [vmem:[%s202 + $0xe8] sm:$0xff]
      %v244 = vld [vmem:[%s202 + $0xf0] sm:$0xff]
      %v245 = vld [vmem:[%s202 + $0xf8] sm:$0xff]
      %v246 = vld [vmem:[%s207] sm:$0xff]
      %v247 = vld [vmem:[%s2] sm:$0x1]
      %v249 = vlaneseq
      %v250 = vshrl.u32 %v249, 7
      %v251 = vsub.s32 0, %v250
      %v252 = vrot.slane %v247, %v251
      %vm254 = vcmask 64512
      %v256 = vsel %vm254, %v214, 0
      %v259 = vsel %vm254, %v215, 0
      %v262 = vsel %vm254, %v216, 0
      %v265 = vsel %vm254, %v217, 0
      %v268 = vsel %vm254, %v218, 0
      %v271 = vsel %vm254, %v219, 0
      %v274 = vsel %vm254, %v220, 0
      %v277 = vsel %vm254, %v221, 0
      %v280 = vsel %vm254, %v222, 0
      %v283 = vsel %vm254, %v223, 0
      %v286 = vsel %vm254, %v224, 0
      %v289 = vsel %vm254, %v225, 0
      %v292 = vsel %vm254, %v226, 0
      %v295 = vsel %vm254, %v227, 0
      %v298 = vsel %vm254, %v228, 0
      %v301 = vsel %vm254, %v229, 0
      %v304 = vsel %vm254, %v230, 0
      %v307 = vsel %vm254, %v231, 0
      %v310 = vsel %vm254, %v232, 0
      %v313 = vsel %vm254, %v233, 0
      %v316 = vsel %vm254, %v234, 0
      %v319 = vsel %vm254, %v235, 0
      %v322 = vsel %vm254, %v236, 0
      %v325 = vsel %vm254, %v237, 0
      %v328 = vsel %vm254, %v238, 0
      %v331 = vsel %vm254, %v239, 0
      %v334 = vsel %vm254, %v240, 0
      %v337 = vsel %vm254, %v241, 0
      %v340 = vsel %vm254, %v242, 0
      %v343 = vsel %vm254, %v243, 0
      %v346 = vsel %vm254, %v244, 0
      %v349 = vsel %vm254, %v245, 0
      %351 = vmatprep.subr.mxu0 0.0
      %352 = vmatpush1.msra.mxu0 %v246
      %353 = vmatprep.subr.mxu0 0.0
      %354 = vmatpush1.msra.mxu0 0.0
      %355 = vmatprep.subr.mxu0 0.0
      %356 = vmatpush1.msra.mxu0 0.0
      %357 = vmatprep.subr.mxu0 0.0
      %358 = vmatpush1.msra.mxu0 0.0
      %359 = vmatprep.subr.mxu0 0.0
      %360 = vmatpush1.msra.mxu0 0.0
      %361 = vmatprep.subr.mxu0 0.0
      %362 = vmatpush1.msra.mxu0 0.0
      %363 = vmatprep.subr.mxu0 0.0
      %364 = vmatpush1.msra.mxu0 0.0
      %365 = vmatprep.subr.mxu0 0.0
      %366 = vmatpush1.msra.mxu0 0.0
      %367 = vmatprep.subr.mxu0 0.0
      %368 = vmatpush1.msra.mxu0 0.0
      %369 = vmatprep.subr.mxu0 0.0
      %370 = vmatpush1.msra.mxu0 0.0
      %371 = vmatprep.subr.mxu0 0.0
      %372 = vmatpush1.msra.mxu0 0.0
      %373 = vmatprep.subr.mxu0 0.0
      %374 = vmatpush1.msra.mxu0 0.0
      %375 = vmatprep.subr.mxu0 0.0
      %376 = vmatpush1.msra.mxu0 0.0
      %377 = vmatprep.subr.mxu0 0.0
      %378 = vmatpush1.msra.mxu0 0.0
      %379 = vmatprep.subr.mxu0 0.0
      %380 = vmatpush1.msra.mxu0 0.0
      %381 = vmatprep.subr.mxu0 0.0
      %382 = vmatpush1.msra.mxu0 0.0
      %383 = vmatprep.subr.mxu0 0.0
      %384 = vmatpush1.msra.mxu0 0.0
      %385 = vmatprep.subr.mxu0 0.0
      %386 = vmatpush1.msra.mxu0 0.0
      %387 = vmatprep.subr.mxu0 0.0
      %388 = vmatpush1.msra.mxu0 0.0
      %389 = vmatprep.subr.mxu0 0.0
      %390 = vmatpush1.msra.mxu0 0.0
      %391 = vmatprep.subr.mxu0 0.0
      %392 = vmatpush1.msra.mxu0 0.0
      %393 = vmatprep.subr.mxu0 0.0
      %394 = vmatpush1.msra.mxu0 0.0
      %395 = vmatprep.subr.mxu0 0.0
      %396 = vmatpush1.msra.mxu0 0.0
      %397 = vmatprep.subr.mxu0 0.0
      %398 = vmatpush1.msra.mxu0 0.0
      %399 = vmatprep.subr.mxu0 0.0
      %400 = vmatpush1.msra.mxu0 0.0
      %401 = vmatprep.subr.mxu0 0.0
      %402 = vmatpush1.msra.mxu0 0.0
      %403 = vmatprep.subr.mxu0 0.0
      %404 = vmatpush1.msra.mxu0 0.0
      %405 = vmatprep.subr.mxu0 0.0
      %406 = vmatpush1.msra.mxu0 0.0
      %407 = vmatprep.subr.mxu0 0.0
      %408 = vmatpush1.msra.mxu0 0.0
      %409 = vmatprep.subr.mxu0 0.0
      %410 = vmatpush1.msra.mxu0 0.0
      %411 = vmatprep.subr.mxu0 0.0
      %412 = vmatpush1.msra.mxu0 0.0
      %413 = vmatprep.subr.mxu0 0.0
      %414 = vmatpush1.msra.mxu0 0.0
      %415 = vmatprep.mubr.f32.mxu0 0.0
      %416 = vmatmul.mubr.f32.gmra.mrb[0].mxu0 %v256
      %v417 = vpop.f32.mrb[0].mxu0
      %v418 = vadd.f32 %v252, %v417
      %v419 = vpop.f32.mrb[0].mxu0
      %420 = vmatprep.mubr.f32.mxu0 0.0
      %421 = vmatmul.mubr.f32.gmra.mrb[0].mxu0 %v259
      %v422 = vpop.f32.mrb[0].mxu0
      %v423 = vadd.f32 %v252, %v422
      %v424 = vpop.f32.mrb[0].mxu0
      %425 = vmatprep.mubr.f32.mxu0 0.0
      %426 = vmatmul.mubr.f32.gmra.mrb[0].mxu0 %v262
      %v427 = vpop.f32.mrb[0].mxu0
      %v428 = vadd.f32 %v252, %v427
      %v429 = vpop.f32.mrb[0].mxu0
      %430 = vmatprep.mubr.f32.mxu0 0.0
      %431 = vmatmul.mubr.f32.gmra.mrb[0].mxu0 %v265
      %v432 = vpop.f32.mrb[0].mxu0
      %v433 = vadd.f32 %v252, %v432
      %v434 = vpop.f32.mrb[0].mxu0
      %435 = vmatprep.mubr.f32.mxu0 0.0
      %436 = vmatmul.mubr.f32.gmra.mrb[0].mxu0 %v268
      %v437 = vpop.f32.mrb[0].mxu0
      %v438 = vadd.f32 %v252, %v437
      %v439 = vpop.f32.mrb[0].mxu0
      %440 = vmatprep.mubr.f32.mxu0 0.0
      %441 = vmatmul.mubr.f32.gmra.mrb[0].mxu0 %v271
      %v442 = vpop.f32.mrb[0].mxu0
      %v443 = vadd.f32 %v252, %v442
      %v444 = vpop.f32.mrb[0].mxu0
      %445 = vmatprep.mubr.f32.mxu0 0.0
      %446 = vmatmul.mubr.f32.gmra.mrb[0].mxu0 %v274
      %v447 = vpop.f32.mrb[0].mxu0
      %v448 = vadd.f32 %v252, %v447
      %v449 = vpop.f32.mrb[0].mxu0
      %450 = vmatprep.mubr.f32.mxu0 0.0
      %451 = vmatmul.mubr.f32.gmra.mrb[0].mxu0 %v277
      %v452 = vpop.f32.mrb[0].mxu0
      %v453 = vadd.f32 %v252, %v452
      %v454 = vpop.f32.mrb[0].mxu0
      %455 = vmatprep.mubr.f32.mxu0 0.0
      %456 = vmatmul.mubr.f32.gmra.mrb[0].mxu0 %v280
      %v457 = vpop.f32.mrb[0].mxu0
      %v458 = vadd.f32 %v252, %v457
      %v459 = vpop.f32.mrb[0].mxu0
      %460 = vmatprep.mubr.f32.mxu0 0.0
      %461 = vmatmul.mubr.f32.gmra.mrb[0].mxu0 %v283
      %v462 = vpop.f32.mrb[0].mxu0
      %v463 = vadd.f32 %v252, %v462
      %v464 = vpop.f32.mrb[0].mxu0
      %465 = vmatprep.mubr.f32.mxu0 0.0
      %466 = vmatmul.mubr.f32.gmra.mrb[0].mxu0 %v286
      %v467 = vpop.f32.mrb[0].mxu0
      %v468 = vadd.f32 %v252, %v467
      %v469 = vpop.f32.mrb[0].mxu0
      %470 = vmatprep.mubr.f32.mxu0 0.0
      %471 = vmatmul.mubr.f32.gmra.mrb[0].mxu0 %v289
      %v472 = vpop.f32.mrb[0].mxu0
      %v473 = vadd.f32 %v252, %v472
      %v474 = vpop.f32.mrb[0].mxu0
      %475 = vmatprep.mubr.f32.mxu0 0.0
      %476 = vmatmul.mubr.f32.gmra.mrb[0].mxu0 %v292
      %v477 = vpop.f32.mrb[0].mxu0
      %v478 = vadd.f32 %v252, %v477
      %v479 = vpop.f32.mrb[0].mxu0
      %480 = vmatprep.mubr.f32.mxu0 0.0
      %481 = vmatmul.mubr.f32.gmra.mrb[0].mxu0 %v295
      %v482 = vpop.f32.mrb[0].mxu0
      %v483 = vadd.f32 %v252, %v482
      %v484 = vpop.f32.mrb[0].mxu0
      %485 = vmatprep.mubr.f32.mxu0 0.0
      %486 = vmatmul.mubr.f32.gmra.mrb[0].mxu0 %v298
      %v487 = vpop.f32.mrb[0].mxu0
      %v488 = vadd.f32 %v252, %v487
      %v489 = vpop.f32.mrb[0].mxu0
      %490 = vmatprep.mubr.f32.mxu0 0.0
      %491 = vmatmul.mubr.f32.gmra.mrb[0].mxu0 %v301
      %v492 = vpop.f32.mrb[0].mxu0
      %v493 = vadd.f32 %v252, %v492
      %v494 = vpop.f32.mrb[0].mxu0
      %495 = vmatprep.mubr.f32.mxu0 0.0
      %496 = vmatmul.mubr.f32.gmra.mrb[0].mxu0 %v304
      %v497 = vpop.f32.mrb[0].mxu0
      %v498 = vadd.f32 %v252, %v497
      %v499 = vpop.f32.mrb[0].mxu0
      %500 = vmatprep.mubr.f32.mxu0 0.0
      %501 = vmatmul.mubr.f32.gmra.mrb[0].mxu0 %v307
      %v502 = vpop.f32.mrb[0].mxu0
      %v503 = vadd.f32 %v252, %v502
      %v504 = vpop.f32.mrb[0].mxu0
      %505 = vmatprep.mubr.f32.mxu0 0.0
      %506 = vmatmul.mubr.f32.gmra.mrb[0].mxu0 %v310
      %v507 = vpop.f32.mrb[0].mxu0
      %v508 = vadd.f32 %v252, %v507
      %v509 = vpop.f32.mrb[0].mxu0
      %510 = vmatprep.mubr.f32.mxu0 0.0
      %511 = vmatmul.mubr.f32.gmra.mrb[0].mxu0 %v313
      %v512 = vpop.f32.mrb[0].mxu0
      %v513 = vadd.f32 %v252, %v512
      %v514 = vpop.f32.mrb[0].mxu0
      %515 = vmatprep.mubr.f32.mxu0 0.0
      %516 = vmatmul.mubr.f32.gmra.mrb[0].mxu0 %v316
      %v517 = vpop.f32.mrb[0].mxu0
      %v518 = vadd.f32 %v252, %v517
      %v519 = vpop.f32.mrb[0].mxu0
      %520 = vmatprep.mubr.f32.mxu0 0.0
      %521 = vmatmul.mubr.f32.gmra.mrb[0].mxu0 %v319
      %v522 = vpop.f32.mrb[0].mxu0
      %v523 = vadd.f32 %v252, %v522
      %v524 = vpop.f32.mrb[0].mxu0
      %525 = vmatprep.mubr.f32.mxu0 0.0
      %526 = vmatmul.mubr.f32.gmra.mrb[0].mxu0 %v322
      %v527 = vpop.f32.mrb[0].mxu0
      %v528 = vadd.f32 %v252, %v527
      %v529 = vpop.f32.mrb[0].mxu0
      %530 = vmatprep.mubr.f32.mxu0 0.0
      %531 = vmatmul.mubr.f32.gmra.mrb[0].mxu0 %v325
      %v532 = vpop.f32.mrb[0].mxu0
      %v533 = vadd.f32 %v252, %v532
      %v534 = vpop.f32.mrb[0].mxu0
      %535 = vmatprep.mubr.f32.mxu0 0.0
      %536 = vmatmul.mubr.f32.gmra.mrb[0].mxu0 %v328
      %v537 = vpop.f32.mrb[0].mxu0
      %v538 = vadd.f32 %v252, %v537
      %v539 = vpop.f32.mrb[0].mxu0
      %540 = vmatprep.mubr.f32.mxu0 0.0
      %541 = vmatmul.mubr.f32.gmra.mrb[0].mxu0 %v331
      %v542 = vpop.f32.mrb[0].mxu0
      %v543 = vadd.f32 %v252, %v542
      %v544 = vpop.f32.mrb[0].mxu0
      %545 = vmatprep.mubr.f32.mxu0 0.0
      %546 = vmatmul.mubr.f32.gmra.mrb[0].mxu0 %v334
      %v547 = vpop.f32.mrb[0].mxu0
      %v548 = vadd.f32 %v252, %v547
      %v549 = vpop.f32.mrb[0].mxu0
      %550 = vmatprep.mubr.f32.mxu0 0.0
      %551 = vmatmul.mubr.f32.gmra.mrb[0].mxu0 %v337
      %v552 = vpop.f32.mrb[0].mxu0
      %v553 = vadd.f32 %v252, %v552
      %v554 = vpop.f32.mrb[0].mxu0
      %555 = vmatprep.mubr.f32.mxu0 0.0
      %556 = vmatmul.mubr.f32.gmra.mrb[0].mxu0 %v340
      %v557 = vpop.f32.mrb[0].mxu0
      %v558 = vadd.f32 %v252, %v557
      %v559 = vpop.f32.mrb[0].mxu0
      %560 = vmatprep.mubr.f32.mxu0 0.0
      %561 = vmatmul.mubr.f32.gmra.mrb[0].mxu0 %v343
      %v562 = vpop.f32.mrb[0].mxu0
      %v563 = vadd.f32 %v252, %v562
      %v564 = vpop.f32.mrb[0].mxu0
      %565 = vmatprep.mubr.f32.mxu0 0.0
      %566 = vmatmul.mubr.f32.gmra.mrb[0].mxu0 %v346
      %v567 = vpop.f32.mrb[0].mxu0
      %v568 = vadd.f32 %v252, %v567
      %v569 = vpop.f32.mrb[0].mxu0
      %570 = vmatprep.mubr.f32.mxu0 0.0
      %571 = vmatmul.mubr.f32.gmra.mrb[0].mxu0 %v349
      %v572 = vpop.f32.mrb[0].mxu0
      %v573 = vadd.f32 %v252, %v572
      %v574 = vpop.f32.mrb[0].mxu0
      %575 = vdwg.mxu0
      %576 = vst [vmem:[%s212] sm:$0xff] %v418
      %577 = vst [vmem:[%s212 + $0x8] sm:$0xff] %v423
      %578 = vst [vmem:[%s212 + $0x10] sm:$0xff] %v428
      %579 = vst [vmem:[%s212 + $0x18] sm:$0xff] %v433
      %580 = vst [vmem:[%s212 + $0x20] sm:$0xff] %v438
      %581 = vst [vmem:[%s212 + $0x28] sm:$0xff] %v443
      %582 = vst [vmem:[%s212 + $0x30] sm:$0xff] %v448
      %583 = vst [vmem:[%s212 + $0x38] sm:$0xff] %v453
      %584 = vst [vmem:[%s212 + $0x40] sm:$0xff] %v458
      %585 = vst [vmem:[%s212 + $0x48] sm:$0xff] %v463
      %586 = vst [vmem:[%s212 + $0x50] sm:$0xff] %v468
      %587 = vst [vmem:[%s212 + $0x58] sm:$0xff] %v473
      %588 = vst [vmem:[%s212 + $0x60] sm:$0xff] %v478
      %589 = vst [vmem:[%s212 + $0x68] sm:$0xff] %v483
      %590 = vst [vmem:[%s212 + $0x70] sm:$0xff] %v488
      %591 = vst [vmem:[%s212 + $0x78] sm:$0xff] %v493
      %592 = vst [vmem:[%s212 + $0x80] sm:$0xff] %v498
      %593 = vst [vmem:[%s212 + $0x88] sm:$0xff] %v503
      %594 = vst [vmem:[%s212 + $0x90] sm:$0xff] %v508
      %595 = vst [vmem:[%s212 + $0x98] sm:$0xff] %v513
      %596 = vst [vmem:[%s212 + $0xa0] sm:$0xff] %v518
      %597 = vst [vmem:[%s212 + $0xa8] sm:$0xff] %v523
      %598 = vst [vmem:[%s212 + $0xb0] sm:$0xff] %v528
      %599 = vst [vmem:[%s212 + $0xb8] sm:$0xff] %v533
      %600 = vst [vmem:[%s212 + $0xc0] sm:$0xff] %v538
      %601 = vst [vmem:[%s212 + $0xc8] sm:$0xff] %v543
      %602 = vst [vmem:[%s212 + $0xd0] sm:$0xff] %v548
      %603 = vst [vmem:[%s212 + $0xd8] sm:$0xff] %v553
      %604 = vst [vmem:[%s212 + $0xe0] sm:$0xff] %v558
      %605 = vst [vmem:[%s212 + $0xe8] sm:$0xff] %v563
      %606 = vst [vmem:[%s212 + $0xf0] sm:$0xff] %v568
      %607 = vst [vmem:[%s212 + $0xf8] sm:$0xff] %v573
      %s608 = smul.u32 32, %s18
      %p609 = scmp.lt.s32.totalorder %s608, 63
      %s610 = scalar_select %p609, %s608, 63
      %s611 = smul.addr %s610, 8
      %s612 = scalar_lea.vmem %s3, %s611
      // Predicated region
      $region33: #{multiscale_internal_fwd.10} parent=31 // pred_check
        %p613 = pneg %p119
      $region34: #{multiscale_internal_fwd.10} parent=31 // pred_check_branch
        %615 = sbr.rel (%p613) target = $region36
      $region35: #{multiscale_internal_fwd.10} parent=31 // pred_region
        %s616 = smul.u32 32, %s18
      $region36: #{multiscale_internal_fwd.10} parent=31 // pred_fallthru
        _
    $region32: #{multiscale_internal_fwd.10} parent=5 // pred_fallthru
      _
    %p617 = scmp.le.s32.totalorder 2, %s9
    // Predicated region
    $region37: #{multiscale_internal_fwd.10} parent=5 // pred_check
      %p618 = pneg %p617
    $region38: #{multiscale_internal_fwd.10} parent=5 // pred_check_branch
      %620 = sbr.rel (%p618) target = $region40
    $region39: #{multiscale_internal_fwd.10} parent=5 // pred_region
      %s621 = ssub.s32 %s9, 2
      // Predicated region
      $region41: #{multiscale_internal_fwd.10} parent=39 // pred_check
        %p622 = pneg %p125
      $region42: #{multiscale_internal_fwd.10} parent=39 // pred_check_branch
        %624 = sbr.rel (%p622) target = $region44
      $region43: #{multiscale_internal_fwd.10} parent=39 // pred_region
        %s625 = smul.u32 32, %s20
        %p626 = scmp.lt.s32.totalorder %s625, 63
        %s627 = scalar_select %p626, %s625, 63
        %s628 = smul.addr %s627, 8
        %s629 = scalar_lea.vmem %s3, %s628
      $region44: #{multiscale_internal_fwd.10} parent=39 // pred_fallthru
        _
    $region40: #{multiscale_internal_fwd.10} parent=5 // pred_fallthru
      _
  $region6: #{multiscale_internal_fwd.10} parent=0 // loop_footer
    %s13 = sadd.s32 1, %s9
  $region7: #{multiscale_internal_fwd.10} parent=0 // loop_footer_branch
    %8 = sbr.rel target = $region3
  $region8: #{multiscale_internal_fwd.10} parent=0 // loop_exit
    _

// kernel: multiscale_internal_fwd.11
$region0: #{multiscale_internal_fwd.11}
  #allocation0 [shape = 'u32[]', space=smem, size = 0x4, offset = 0x4, fixed_abs, tag = 'smem constant byte address 0x4 - core index']
  #allocation1 [shape = 'u32[144,128]{1,0:T(1,128)}', space=vmem, size = 0x12000, scoped, tag = 'internal scratch']
  %s0 = inlined_call_operand.vmem [shape: bf16[512,40], index: 0, kind: input, shape index: {}]
  %s1 = inlined_call_operand.vmem [shape: bf16[40,128], index: 1, kind: input, shape index: {}]
  %s2 = inlined_call_operand.vmem [shape: f32[1,128], index: 2, kind: input, shape index: {}]
  %s3 = inlined_call_operand.vmem [shape: bf16[128,128], index: 3, kind: input, shape index: {}]
  %s4 = inlined_call_operand.vmem [shape: f32[1,128], index: 4, kind: input, shape index: {}]
  %s5 = inlined_call_operand.vmem [shape: bf16[512,128], index: 5, kind: output, shape index: {}]
  %s6 = sld [smem:[#allocation0]]
  $region53: #{multiscale_internal_fwd.11} parent=0
    _
  %s8 = ssub.s32 1, %s6
  %s9 = scalar_select 0, %s8, %s6
  loop: start=0, step=1, limit=4
  $region2: #{multiscale_internal_fwd.11} parent=0 // loop_pre_header
    _
  $region3: #{multiscale_internal_fwd.11} parent=0 // loop_header
    %s11 = sphi 0, %s15
    %p12 = scmp.ge.s32.totalorder %s11, 4
    %s18 = sphi 0, %s30
    %s19 = sphi 0, %s26
    %s20 = sphi 0, %s18
    %s21 = sphi 0, %s19
    %s22 = sphi 0, %s20
    %s23 = sphi 0, %s21
    %s35 = sphi 0, %s37
    %s38 = sphi 0, %s35
    %s39 = sphi 0, %s38
    %s55 = sphi 0, %s39
    %s61 = sphi 0, %s63
    %s64 = sphi 0, %s61
    %s65 = sphi 0, %s64
    %s81 = sphi 0, %s65
    %s85 = sphi 0, %s85
    %s87 = sphi 0, %s85
    %s88 = sphi 0, %s87
    %s102 = sphi 0, %s88
    %s106 = sphi 0, %s106
    %s108 = sphi 0, %s106
    %s109 = sphi 0, %s108
    %s123 = sphi 0, %s109
    %s127 = sphi 0, %s127
    %s129 = sphi 0, %s127
    %s130 = sphi 0, %s129
    %s144 = sphi 0, %s130
    %s150 = sphi 0, %s152
    %s153 = sphi 0, %s150
    %s154 = sphi 0, %s153
    %s170 = sphi 0, %s154
  $region4: #{multiscale_internal_fwd.11} parent=0 // loop_header_branch
    %14 = sbr.rel (%p12) target = $region8
  $region5: #{multiscale_internal_fwd.11} parent=0 // loop_body
    %s16 = ssub.s32 %s11, 1
    %s17 = ssub.s32 %s11, 2
    %s24 = sadd.s32 1, %s19
    %p25 = scmp.ge.s32.totalorder %s24, 1
    %s26 = scalar_select %p25, 0, %s24
    %s27 = sadd.s32 1, %s18
    %s28 = scalar_select %p25, %s27, %s18
    %p29 = scmp.ge.s32.totalorder %s28, 2
    %s30 = scalar_select %p29, 0, %s28
    %s31 = ssub.s32 %s18, %s30
    %s32 = ssub.s32 %s19, %s26
    %s33 = sor.u32 %s31, %s32
    %p34 = scmp.eq.s32.totalorder %s33, 0
    %s36 = sadd.s32 %s35, 1
    %s37 = scalar_select %p34, %s35, %s36
    %p40 = pneg %p34
    %p41 = scmp.eq.s32.totalorder %s11, 1
    %p42 = por %p40, %p41
    %p43 = scmp.ne.s32.totalorder %s35, %s38
    %p44 = scmp.eq.s32.totalorder %s11, 0
    %p45 = por %p43, %p44
    %p46 = scmp.ne.s32.totalorder %s35, %s38
    %p47 = scmp.eq.s32.totalorder %s16, 1
    %p48 = por %p46, %p47
    %p49 = scmp.ne.s32.totalorder %s38, %s39
    %p50 = scmp.eq.s32.totalorder %s16, 0
    %p51 = por %p49, %p50
    %p52 = scmp.ne.s32.totalorder %s38, %s39
    %p53 = scmp.eq.s32.totalorder %s17, 1
    %p54 = por %p52, %p53
    %p56 = scmp.ne.s32.totalorder %s39, %s55
    %p57 = scmp.eq.s32.totalorder %s17, 0
    %p58 = por %p56, %p57
    %s59 = ssub.s32 %s19, %s26
    %p60 = scmp.eq.s32.totalorder %s59, 0
    %s62 = sadd.s32 %s61, 1
    %s63 = scalar_select %p60, %s61, %s62
    %p66 = pneg %p60
    %p67 = scmp.eq.s32.totalorder %s11, 1
    %p68 = por %p66, %p67
    %p69 = scmp.ne.s32.totalorder %s61, %s64
    %p70 = scmp.eq.s32.totalorder %s11, 0
    %p71 = por %p69, %p70
    %p72 = scmp.ne.s32.totalorder %s61, %s64
    %p73 = scmp.eq.s32.totalorder %s16, 1
    %p74 = por %p72, %p73
    %p75 = scmp.ne.s32.totalorder %s64, %s65
    %p76 = scmp.eq.s32.totalorder %s16, 0
    %p77 = por %p75, %p76
    %p78 = scmp.ne.s32.totalorder %s64, %s65
    %p79 = scmp.eq.s32.totalorder %s17, 1
    %p80 = por %p78, %p79
    %p82 = scmp.ne.s32.totalorder %s65, %s81
    %p83 = scmp.eq.s32.totalorder %s17, 0
    %p84 = por %p82, %p83
    %s86 = sadd.s32 %s85, 1
    %p89 = scmp.eq.s32.totalorder %s11, 1
    %p90 = scmp.ne.s32.totalorder %s85, %s87
    %p91 = scmp.eq.s32.totalorder %s11, 0
    %p92 = por %p90, %p91
    %p93 = scmp.ne.s32.totalorder %s85, %s87
    %p94 = scmp.eq.s32.totalorder %s16, 1
    %p95 = por %p93, %p94
    %p96 = scmp.ne.s32.totalorder %s87, %s88
    %p97 = scmp.eq.s32.totalorder %s16, 0
    %p98 = por %p96, %p97
    %p99 = scmp.ne.s32.totalorder %s87, %s88
    %p100 = scmp.eq.s32.totalorder %s17, 1
    %p101 = por %p99, %p100
    %p103 = scmp.ne.s32.totalorder %s88, %s102
    %p104 = scmp.eq.s32.totalorder %s17, 0
    %p105 = por %p103, %p104
    %s107 = sadd.s32 %s106, 1
    %p110 = scmp.eq.s32.totalorder %s11, 1
    %p111 = scmp.ne.s32.totalorder %s106, %s108
    %p112 = scmp.eq.s32.totalorder %s11, 0
    %p113 = por %p111, %p112
    %p114 = scmp.ne.s32.totalorder %s106, %s108
    %p115 = scmp.eq.s32.totalorder %s16, 1
    %p116 = por %p114, %p115
    %p117 = scmp.ne.s32.totalorder %s108, %s109
    %p118 = scmp.eq.s32.totalorder %s16, 0
    %p119 = por %p117, %p118
    %p120 = scmp.ne.s32.totalorder %s108, %s109
    %p121 = scmp.eq.s32.totalorder %s17, 1
    %p122 = por %p120, %p121
    %p124 = scmp.ne.s32.totalorder %s109, %s123
    %p125 = scmp.eq.s32.totalorder %s17, 0
    %p126 = por %p124, %p125
    %s128 = sadd.s32 %s127, 1
    %p131 = scmp.eq.s32.totalorder %s11, 1
    %p132 = scmp.ne.s32.totalorder %s127, %s129
    %p133 = scmp.eq.s32.totalorder %s11, 0
    %p134 = por %p132, %p133
    %p135 = scmp.ne.s32.totalorder %s127, %s129
    %p136 = scmp.eq.s32.totalorder %s16, 1
    %p137 = por %p135, %p136
    %p138 = scmp.ne.s32.totalorder %s129, %s130
    %p139 = scmp.eq.s32.totalorder %s16, 0
    %p140 = por %p138, %p139
    %p141 = scmp.ne.s32.totalorder %s129, %s130
    %p142 = scmp.eq.s32.totalorder %s17, 1
    %p143 = por %p141, %p142
    %p145 = scmp.ne.s32.totalorder %s130, %s144
    %p146 = scmp.eq.s32.totalorder %s17, 0
    %p147 = por %p145, %p146
    %s148 = ssub.s32 %s18, %s30
    %p149 = scmp.eq.s32.totalorder %s148, 0
    %s151 = sadd.s32 %s150, 1
    %s152 = scalar_select %p149, %s150, %s151
    %p155 = pneg %p149
    %p156 = scmp.eq.s32.totalorder %s11, 1
    %p157 = por %p155, %p156
    %p158 = scmp.ne.s32.totalorder %s150, %s153
    %p159 = scmp.eq.s32.totalorder %s11, 0
    %p160 = por %p158, %p159
    %p161 = scmp.ne.s32.totalorder %s150, %s153
    %p162 = scmp.eq.s32.totalorder %s16, 1
    %p163 = por %p161, %p162
    %p164 = scmp.ne.s32.totalorder %s153, %s154
    %p165 = scmp.eq.s32.totalorder %s16, 0
    %p166 = por %p164, %p165
    %p167 = scmp.ne.s32.totalorder %s153, %s154
    %p168 = scmp.eq.s32.totalorder %s17, 1
    %p169 = por %p167, %p168
    %p171 = scmp.ne.s32.totalorder %s154, %s170
    %p172 = scmp.eq.s32.totalorder %s17, 0
    %p173 = por %p171, %p172
    %p174 = scmp.le.s32.totalorder 1, %s11
    %p175 = scmp.lt.s32.totalorder %s11, 3
    %p176 = pnand %p174, %p175
    %p177 = pneg %p176
    // Predicated region
    $region9: #{multiscale_internal_fwd.11} parent=5 // pred_check
      _
    $region10: #{multiscale_internal_fwd.11} parent=5 // pred_check_branch
      %179 = sbr.rel (%p176) target = $region12
    $region11: #{multiscale_internal_fwd.11} parent=5 // pred_region
      %s180 = ssub.s32 %s11, 1
      // Predicated region
      $region13: #{multiscale_internal_fwd.11} parent=11 // pred_check
        %p181 = pneg %p77
      $region14: #{multiscale_internal_fwd.11} parent=11 // pred_check_branch
        %183 = sbr.rel (%p181) target = $region16
      $region15: #{multiscale_internal_fwd.11} parent=11 // pred_region
        %s184 = smul.u32 5, %s21
        %p185 = scmp.lt.s32.totalorder %s184, 4
        %s186 = scalar_select %p185, %s184, 4
        %s187 = smul.addr %s186, 4
        %s188 = scalar_lea.vmem %s1, %s187
        %s189 = smul.u32 5, %s21
      $region16: #{multiscale_internal_fwd.11} parent=11 // pred_fallthru
        _
      // Predicated region
      $region17: #{multiscale_internal_fwd.11} parent=11 // pred_check
        %p190 = pneg %p98
      $region18: #{multiscale_internal_fwd.11} parent=11 // pred_check_branch
        %192 = sbr.rel (%p190) target = $region20
      $region19: #{multiscale_internal_fwd.11} parent=11 // pred_region
        _
      $region20: #{multiscale_internal_fwd.11} parent=11 // pred_fallthru
        _
      // Predicated region
      $region21: #{multiscale_internal_fwd.11} parent=11 // pred_check
        %p193 = pneg %p119
      $region22: #{multiscale_internal_fwd.11} parent=11 // pred_check_branch
        %195 = sbr.rel (%p193) target = $region24
      $region23: #{multiscale_internal_fwd.11} parent=11 // pred_region
        _
      $region24: #{multiscale_internal_fwd.11} parent=11 // pred_fallthru
        _
      // Predicated region
      $region25: #{multiscale_internal_fwd.11} parent=11 // pred_check
        %p196 = pneg %p140
      $region26: #{multiscale_internal_fwd.11} parent=11 // pred_check_branch
        %198 = sbr.rel (%p196) target = $region28
      $region27: #{multiscale_internal_fwd.11} parent=11 // pred_region
        _
      $region28: #{multiscale_internal_fwd.11} parent=11 // pred_fallthru
        _
    $region12: #{multiscale_internal_fwd.11} parent=5 // pred_fallthru
      _
    %p199 = scmp.lt.s32.totalorder %s11, 2
    // Predicated region
    $region29: #{multiscale_internal_fwd.11} parent=5 // pred_check
      %p200 = pneg %p199
    $region30: #{multiscale_internal_fwd.11} parent=5 // pred_check_branch
      %202 = sbr.rel (%p200) target = $region32
    $region31: #{multiscale_internal_fwd.11} parent=5 // pred_region
      // Predicated region
      $region33: #{multiscale_internal_fwd.11} parent=31 // pred_check
        %p203 = pneg %p45
      $region34: #{multiscale_internal_fwd.11} parent=31 // pred_check_branch
        %205 = sbr.rel (%p203) target = $region36
      $region35: #{multiscale_internal_fwd.11} parent=31 // pred_region
        %s206 = smul.u32 32, %s18
        %p207 = scmp.lt.s32.totalorder %s206, 63
        %s208 = scalar_select %p207, %s206, 63
        %p209 = scmp.lt.s32.totalorder %s19, 0
        %s210 = scalar_select %p209, %s19, 0
        %s211 = sadd.s32 %s210, %s208
        %s212 = smul.addr %s211, 4
        %s213 = scalar_lea.vmem %s0, %s212
        %s214 = smul.u32 32, %s18
      $region36: #{multiscale_internal_fwd.11} parent=31 // pred_fallthru
        _
    $region32: #{multiscale_internal_fwd.11} parent=5 // pred_fallthru
      _
    %p215 = scmp.le.s32.totalorder 1, %s11
    %p216 = scmp.lt.s32.totalorder %s11, 3
    %p217 = pnand %p215, %p216
    %p218 = pneg %p217
    // Predicated region
    $region37: #{multiscale_internal_fwd.11} parent=5 // pred_check
      _
    $region38: #{multiscale_internal_fwd.11} parent=5 // pred_check_branch
      %220 = sbr.rel (%p217) target = $region40
    $region39: #{multiscale_internal_fwd.11} parent=5 // pred_region
      %s221 = ssub.s32 %s11, 1
      %s222 = smul.u32 32, %s20
      %p223 = scmp.lt.s32.totalorder %s222, 63
      %s224 = scalar_select %p223, %s222, 63
      %p225 = scmp.lt.s32.totalorder %s21, 0
      %s226 = scalar_select %p225, %s21, 0
      %s227 = sadd.s32 %s226, %s224
      %s228 = smul.addr %s227, 4
      %s229 = scalar_lea.vmem %s0, %s228
      %p230 = pneg %p51
      %p231 = pneg %p48
      %s232 = smul.u32 5, %s21
      %p233 = scmp.lt.s32.totalorder %s232, 4
      %s234 = scalar_select %p233, %s232, 4
      %s235 = smul.addr %s234, 4
      %s236 = scalar_lea.vmem %s1, %s235
      %p237 = pneg %p77
      %p238 = pneg %p74
      %p239 = pneg %p98
      %p240 = pneg %p95
      %p241 = pneg %p119
      %p242 = pneg %p116
      %p243 = pneg %p140
      %p244 = pneg %p137
      %p245 = pneg %p166
      %p246 = pneg %p163
      %s247 = smul.u32 32, %s20
      %p248 = scmp.lt.s32.totalorder %s247, 63
      %s249 = scalar_select %p248, %s247, 63
      %s250 = smul.addr %s249, 4
      %s251 = scalar_lea.vmem %s5, %s250
      %s252 = smul.u32 32, %s20
      %p253 = scmp.lt.s32.totalorder %s252, 63
      %s254 = scalar_select %p253, %s252, 63
      %p255 = scmp.lt.s32.totalorder %s21, 0
      %s256 = scalar_select %p255, %s21, 0
      %s257 = sadd.s32 %s256, %s254
      %s258 = smul.addr %s257, 4
      %s259 = scalar_lea.vmem %s0, %s258
      %s260 = smul.u32 32, %s20
      %s261 = smul.u32 5, %s21
      %p262 = scmp.lt.s32.totalorder %s261, 4
      %s263 = scalar_select %p262, %s261, 4
      %s264 = smul.addr %s263, 4
      %s265 = scalar_lea.vmem %s1, %s264
      %s266 = smul.u32 5, %s21
      %s267 = smul.u32 32, %s20
      %p268 = scmp.lt.s32.totalorder %s267, 63
      %s269 = scalar_select %p268, %s267, 63
      %s270 = smul.addr %s269, 4
      %s271 = scalar_lea.vmem %s5, %s270
      %s272 = smul.u32 32, %s20
      %v274 = vld [vmem:[%s259] sm:$0xf]
      %v275 = vld [vmem:[%s259 + $0x4] sm:$0xf]
      %v276 = vld [vmem:[%s259 + $0x8] sm:$0xf]
      %v277 = vld [vmem:[%s259 + $0xc] sm:$0xf]
      %v278 = vld [vmem:[%s259 + $0x10] sm:$0xf]
      %v279 = vld [vmem:[%s259 + $0x14] sm:$0xf]
      %v280 = vld [vmem:[%s259 + $0x18] sm:$0xf]
      %v281 = vld [vmem:[%s259 + $0x1c] sm:$0xf]
      %v282 = vld [vmem:[%s259 + $0x20] sm:$0xf]
      %v283 = vld [vmem:[%s259 + $0x24] sm:$0xf]
      %v284 = vld [vmem:[%s259 + $0x28] sm:$0xf]
      %v285 = vld [vmem:[%s259 + $0x2c] sm:$0xf]
      %v286 = vld [vmem:[%s259 + $0x30] sm:$0xf]
      %v287 = vld [vmem:[%s259 + $0x34] sm:$0xf]
      %v288 = vld [vmem:[%s259 + $0x38] sm:$0xf]
      %v289 = vld [vmem:[%s259 + $0x3c] sm:$0xf]
      %v290 = vld [vmem:[%s259 + $0x40] sm:$0xf]
      %v291 = vld [vmem:[%s259 + $0x44] sm:$0xf]
      %v292 = vld [vmem:[%s259 + $0x48] sm:$0xf]
      %v293 = vld [vmem:[%s259 + $0x4c] sm:$0xf]
      %v294 = vld [vmem:[%s259 + $0x50] sm:$0xf]
      %v295 = vld [vmem:[%s259 + $0x54] sm:$0xf]
      %v296 = vld [vmem:[%s259 + $0x58] sm:$0xf]
      %v297 = vld [vmem:[%s259 + $0x5c] sm:$0xf]
      %v298 = vld [vmem:[%s259 + $0x60] sm:$0xf]
      %v299 = vld [vmem:[%s259 + $0x64] sm:$0xf]
      %v300 = vld [vmem:[%s259 + $0x68] sm:$0xf]
      %v301 = vld [vmem:[%s259 + $0x6c] sm:$0xf]
      %v302 = vld [vmem:[%s259 + $0x70] sm:$0xf]
      %v303 = vld [vmem:[%s259 + $0x74] sm:$0xf]
      %v304 = vld [vmem:[%s259 + $0x78] sm:$0xf]
      %v305 = vld [vmem:[%s259 + $0x7c] sm:$0xf]
      %v306 = vld [vmem:[%s265] sm:$0xf]
      %v307 = vld [vmem:[%s265 + $0x4] sm:$0xf]
      %v308 = vld [vmem:[%s265 + $0x8] sm:$0xf]
      %v309 = vld [vmem:[%s265 + $0xc] sm:$0xf]
      %v310 = vld [vmem:[%s265 + $0x10] sm:$0xf]
      %v311 = vld [vmem:[%s2] sm:$0x1]
      %v313 = vlaneseq
      %v314 = vshrl.u32 %v313, 7
      %v315 = vsub.s32 0, %v314
      %v316 = vrot.slane %v311, %v315
      %v350 = vunpack.c.l.b16 %v274
      %v351 = vunpack.c.l.b16 %v275
      %v352 = vunpack.c.l.b16 %v276
      %v353 = vunpack.c.l.b16 %v277
      %v354 = vunpack.c.l.b16 %v278
      %v355 = vunpack.c.l.b16 %v279
      %v356 = vunpack.c.l.b16 %v280
      %v357 = vunpack.c.l.b16 %v281
      %v358 = vunpack.c.l.b16 %v282
      %v359 = vunpack.c.l.b16 %v283
      %v360 = vunpack.c.l.b16 %v284
      %v361 = vunpack.c.l.b16 %v285
      %v362 = vunpack.c.l.b16 %v286
      %v363 = vunpack.c.l.b16 %v287
      %v364 = vunpack.c.l.b16 %v288
      %v365 = vunpack.c.l.b16 %v289
      %v366 = vunpack.c.l.b16 %v290
      %v367 = vunpack.c.l.b16 %v291
      %v368 = vunpack.c.l.b16 %v292
      %v369 = vunpack.c.l.b16 %v293
      %v370 = vunpack.c.l.b16 %v294
      %v371 = vunpack.c.l.b16 %v295
      %v372 = vunpack.c.l.b16 %v296
      %v373 = vunpack.c.l.b16 %v297
      %v374 = vunpack.c.l.b16 %v298
      %v375 = vunpack.c.l.b16 %v299
      %v376 = vunpack.c.l.b16 %v300
      %v377 = vunpack.c.l.b16 %v301
      %v378 = vunpack.c.l.b16 %v302
      %v379 = vunpack.c.l.b16 %v303
      %v380 = vunpack.c.l.b16 %v304
      %v381 = vunpack.c.l.b16 %v305
      %v382 = vpack.c.b16 %v351, %v350
      %v383 = vpack.c.b16 %v353, %v352
      %v384 = vpack.c.b16 %v355, %v354
      %v385 = vpack.c.b16 %v357, %v356
      %v386 = vpack.c.b16 %v359, %v358
      %v387 = vpack.c.b16 %v361, %v360
      %v388 = vpack.c.b16 %v363, %v362
      %v389 = vpack.c.b16 %v365, %v364
      %v390 = vpack.c.b16 %v367, %v366
      %v391 = vpack.c.b16 %v369, %v368
      %v392 = vpack.c.b16 %v371, %v370
      %v393 = vpack.c.b16 %v373, %v372
      %v394 = vpack.c.b16 %v375, %v374
      %v395 = vpack.c.b16 %v377, %v376
      %v396 = vpack.c.b16 %v379, %v378
      %v397 = vpack.c.b16 %v381, %v380
      %v403 = vunpack.c.l.b16 %v306
      %v404 = vunpack.c.l.b16 %v307
      %v405 = vunpack.c.l.b16 %v308
      %v406 = vunpack.c.l.b16 %v309
      %v407 = vunpack.c.l.b16 %v310
      %v408 = vpack.c.b16 %v404, %v403
      %v409 = vpack.c.b16 %v406, %v405
      %v410 = vpack.c.b16 %v407, %v407
      %vm413 = vcmask 326656
      %v415 = vsel %vm413, %v382, 0
      %v418 = vsel %vm413, %v383, 0
      %v421 = vsel %vm413, %v384, 0
      %v424 = vsel %vm413, %v385, 0
      %v427 = vsel %vm413, %v386, 0
      %v430 = vsel %vm413, %v387, 0
      %v433 = vsel %vm413, %v388, 0
      %v436 = vsel %vm413, %v389, 0
      %v439 = vsel %vm413, %v390, 0
      %v442 = vsel %vm413, %v391, 0
      %v445 = vsel %vm413, %v392, 0
      %v448 = vsel %vm413, %v393, 0
      %v451 = vsel %vm413, %v394, 0
      %v454 = vsel %vm413, %v395, 0
      %v457 = vsel %vm413, %v396, 0
      %v460 = vsel %vm413, %v397, 0
      %vm462 = vcmask 1043456
      %v464 = vsel %vm462, %v410, 0
      %466 = vmatprep.subr.bf16.mxu0 0
      %467 = vmatpush1.bf16.msra.mxu0 %v408
      %468 = vmatprep.subr.bf16.mxu0 0
      %469 = vmatpush1.bf16.msra.mxu0 %v409
      %470 = vmatprep.subr.bf16.mxu0 0
      %471 = vmatpush1.bf16.msra.mxu0 %v464
      %472 = vmatprep.subr.bf16.mxu0 0
      %473 = vmatpush1.bf16.msra.mxu0 0
      %474 = vmatprep.subr.bf16.mxu0 0
      %475 = vmatpush1.bf16.msra.mxu0 0
      %476 = vmatprep.subr.bf16.mxu0 0
      %477 = vmatpush1.bf16.msra.mxu0 0
      %478 = vmatprep.subr.bf16.mxu0 0
      %479 = vmatpush1.bf16.msra.mxu0 0
      %480 = vmatprep.subr.bf16.mxu0 0
      %481 = vmatpush1.bf16.msra.mxu0 0
      %482 = vmatprep.subr.bf16.mxu0 0
      %483 = vmatpush1.bf16.msra.mxu0 0
      %484 = vmatprep.subr.bf16.mxu0 0
      %485 = vmatpush1.bf16.msra.mxu0 0
      %486 = vmatprep.subr.bf16.mxu0 0
      %487 = vmatpush1.bf16.msra.mxu0 0
      %488 = vmatprep.subr.bf16.mxu0 0
      %489 = vmatpush1.bf16.msra.mxu0 0
      %490 = vmatprep.subr.bf16.mxu0 0
      %491 = vmatpush1.bf16.msra.mxu0 0
      %492 = vmatprep.subr.bf16.mxu0 0
      %493 = vmatpush1.bf16.msra.mxu0 0
      %494 = vmatprep.subr.bf16.mxu0 0
      %495 = vmatpush1.bf16.msra.mxu0 0
      %496 = vmatprep.subr.bf16.mxu0 0
      %497 = vmatpush1.bf16.msra.mxu0 0
      %498 = vmatprep.mubr.bf16.mxu0 0
      %499 = vmatmul.mubr.bf16.gmra.mrb[0].mxu0 %v415
      %v500 = vpop.f32.mrb[0].mxu0
      %v501 = vadd.f32 %v316, %v500
      %v502 = vpop.f32.mrb[0].mxu0
      %v503 = vpop.f32.mrb[0].mxu0
      %v504 = vadd.f32 %v316, %v503
      %v505 = vpop.f32.mrb[0].mxu0
      %506 = vmatprep.mubr.bf16.mxu0 0
      %507 = vmatmul.mubr.bf16.gmra.mrb[0].mxu0 %v418
      %v508 = vpop.f32.mrb[0].mxu0
      %v509 = vadd.f32 %v316, %v508
      %v510 = vpop.f32.mrb[0].mxu0
      %v511 = vpop.f32.mrb[0].mxu0
      %v512 = vadd.f32 %v316, %v511
      %v513 = vpop.f32.mrb[0].mxu0
      %514 = vmatprep.mubr.bf16.mxu0 0
      %515 = vmatmul.mubr.bf16.gmra.mrb[0].mxu0 %v421
      %v516 = vpop.f32.mrb[0].mxu0
      %v517 = vadd.f32 %v316, %v516
      %v518 = vpop.f32.mrb[0].mxu0
      %v519 = vpop.f32.mrb[0].mxu0
      %v520 = vadd.f32 %v316, %v519
      %v521 = vpop.f32.mrb[0].mxu0
      %522 = vmatprep.mubr.bf16.mxu0 0
      %523 = vmatmul.mubr.bf16.gmra.mrb[0].mxu0 %v424
      %v524 = vpop.f32.mrb[0].mxu0
      %v525 = vadd.f32 %v316, %v524
      %v526 = vpop.f32.mrb[0].mxu0
      %v527 = vpop.f32.mrb[0].mxu0
      %v528 = vadd.f32 %v316, %v527
      %v529 = vpop.f32.mrb[0].mxu0
      %530 = vmatprep.mubr.bf16.mxu0 0
      %531 = vmatmul.mubr.bf16.gmra.mrb[0].mxu0 %v427
      %v532 = vpop.f32.mrb[0].mxu0
      %v533 = vadd.f32 %v316, %v532
      %v534 = vpop.f32.mrb[0].mxu0
      %v535 = vpop.f32.mrb[0].mxu0
      %v536 = vadd.f32 %v316, %v535
      %v537 = vpop.f32.mrb[0].mxu0
      %538 = vmatprep.mubr.bf16.mxu0 0
      %539 = vmatmul.mubr.bf16.gmra.mrb[0].mxu0 %v430
      %v540 = vpop.f32.mrb[0].mxu0
      %v541 = vadd.f32 %v316, %v540
      %v542 = vpop.f32.mrb[0].mxu0
      %v543 = vpop.f32.mrb[0].mxu0
      %v544 = vadd.f32 %v316, %v543
      %v545 = vpop.f32.mrb[0].mxu0
      %546 = vmatprep.mubr.bf16.mxu0 0
      %547 = vmatmul.mubr.bf16.gmra.mrb[0].mxu0 %v433
      %v548 = vpop.f32.mrb[0].mxu0
      %v549 = vadd.f32 %v316, %v548
      %v550 = vpop.f32.mrb[0].mxu0
      %v551 = vpop.f32.mrb[0].mxu0
      %v552 = vadd.f32 %v316, %v551
      %v553 = vpop.f32.mrb[0].mxu0
      %554 = vmatprep.mubr.bf16.mxu0 0
      %555 = vmatmul.mubr.bf16.gmra.mrb[0].mxu0 %v436
      %v556 = vpop.f32.mrb[0].mxu0
      %v557 = vadd.f32 %v316, %v556
      %v558 = vpop.f32.mrb[0].mxu0
      %v559 = vpop.f32.mrb[0].mxu0
      %v560 = vadd.f32 %v316, %v559
      %v561 = vpop.f32.mrb[0].mxu0
      %562 = vmatprep.mubr.bf16.mxu0 0
      %563 = vmatmul.mubr.bf16.gmra.mrb[0].mxu0 %v439
      %v564 = vpop.f32.mrb[0].mxu0
      %v565 = vadd.f32 %v316, %v564
      %v566 = vpop.f32.mrb[0].mxu0
      %v567 = vpop.f32.mrb[0].mxu0
      %v568 = vadd.f32 %v316, %v567
      %v569 = vpop.f32.mrb[0].mxu0
      %570 = vmatprep.mubr.bf16.mxu0 0
      %571 = vmatmul.mubr.bf16.gmra.mrb[0].mxu0 %v442
      %v572 = vpop.f32.mrb[0].mxu0
      %v573 = vadd.f32 %v316, %v572
      %v574 = vpop.f32.mrb[0].mxu0
      %v575 = vpop.f32.mrb[0].mxu0
      %v576 = vadd.f32 %v316, %v575
      %v577 = vpop.f32.mrb[0].mxu0
      %578 = vmatprep.mubr.bf16.mxu0 0
      %579 = vmatmul.mubr.bf16.gmra.mrb[0].mxu0 %v445
      %v580 = vpop.f32.mrb[0].mxu0
      %v581 = vadd.f32 %v316, %v580
      %v582 = vpop.f32.mrb[0].mxu0
      %v583 = vpop.f32.mrb[0].mxu0
      %v584 = vadd.f32 %v316, %v583
      %v585 = vpop.f32.mrb[0].mxu0
      %586 = vmatprep.mubr.bf16.mxu0 0
      %587 = vmatmul.mubr.bf16.gmra.mrb[0].mxu0 %v448
      %v588 = vpop.f32.mrb[0].mxu0
      %v589 = vadd.f32 %v316, %v588
      %v590 = vpop.f32.mrb[0].mxu0
      %v591 = vpop.f32.mrb[0].mxu0
      %v592 = vadd.f32 %v316, %v591
      %v593 = vpop.f32.mrb[0].mxu0
      %594 = vmatprep.mubr.bf16.mxu0 0
      %595 = vmatmul.mubr.bf16.gmra.mrb[0].mxu0 %v451
      %v596 = vpop.f32.mrb[0].mxu0
      %v597 = vadd.f32 %v316, %v596
      %v598 = vpop.f32.mrb[0].mxu0
      %v599 = vpop.f32.mrb[0].mxu0
      %v600 = vadd.f32 %v316, %v599
      %v601 = vpop.f32.mrb[0].mxu0
      %602 = vmatprep.mubr.bf16.mxu0 0
      %603 = vmatmul.mubr.bf16.gmra.mrb[0].mxu0 %v454
      %v604 = vpop.f32.mrb[0].mxu0
      %v605 = vadd.f32 %v316, %v604
      %v606 = vpop.f32.mrb[0].mxu0
      %v607 = vpop.f32.mrb[0].mxu0
      %v608 = vadd.f32 %v316, %v607
      %v609 = vpop.f32.mrb[0].mxu0
      %610 = vmatprep.mubr.bf16.mxu0 0
      %611 = vmatmul.mubr.bf16.gmra.mrb[0].mxu0 %v457
      %v612 = vpop.f32.mrb[0].mxu0
      %v613 = vadd.f32 %v316, %v612
      %v614 = vpop.f32.mrb[0].mxu0
      %v615 = vpop.f32.mrb[0].mxu0
      %v616 = vadd.f32 %v316, %v615
      %v617 = vpop.f32.mrb[0].mxu0
      %618 = vmatprep.mubr.bf16.mxu0 0
      %619 = vmatmul.mubr.bf16.gmra.mrb[0].mxu0 %v460
      %v620 = vpop.f32.mrb[0].mxu0
      %v621 = vadd.f32 %v316, %v620
      %v622 = vpop.f32.mrb[0].mxu0
      %v623 = vpop.f32.mrb[0].mxu0
      %v624 = vadd.f32 %v316, %v623
      %v625 = vpop.f32.mrb[0].mxu0
      %626 = vdwg.mxu0
      %v627 = vmax.f32 %v501, 0.0
      %v628 = vmax.f32 %v504, 0.0
      %v629 = vmax.f32 %v509, 0.0
      %v630 = vmax.f32 %v512, 0.0
      %v631 = vmax.f32 %v517, 0.0
      %v632 = vmax.f32 %v520, 0.0
      %v633 = vmax.f32 %v525, 0.0
      %v634 = vmax.f32 %v528, 0.0
      %v635 = vmax.f32 %v533, 0.0
      %v636 = vmax.f32 %v536, 0.0
      %v637 = vmax.f32 %v541, 0.0
      %v638 = vmax.f32 %v544, 0.0
      %v639 = vmax.f32 %v549, 0.0
      %v640 = vmax.f32 %v552, 0.0
      %v641 = vmax.f32 %v557, 0.0
      %v642 = vmax.f32 %v560, 0.0
      %v643 = vmax.f32 %v565, 0.0
      %v644 = vmax.f32 %v568, 0.0
      %v645 = vmax.f32 %v573, 0.0
      %v646 = vmax.f32 %v576, 0.0
      %v647 = vmax.f32 %v581, 0.0
      %v648 = vmax.f32 %v584, 0.0
      %v649 = vmax.f32 %v589, 0.0
      %v650 = vmax.f32 %v592, 0.0
      %v651 = vmax.f32 %v597, 0.0
      %v652 = vmax.f32 %v600, 0.0
      %v653 = vmax.f32 %v605, 0.0
      %v654 = vmax.f32 %v608, 0.0
      %v655 = vmax.f32 %v613, 0.0
      %v656 = vmax.f32 %v616, 0.0
      %v657 = vmax.f32 %v621, 0.0
      %v658 = vmax.f32 %v624, 0.0
      %v659 = vpack.c.bf16 %v628, %v627
      %v660 = vpack.c.bf16 %v630, %v629
      %v661 = vpack.c.bf16 %v632, %v631
      %v662 = vpack.c.bf16 %v634, %v633
      %v663 = vpack.c.bf16 %v636, %v635
      %v664 = vpack.c.bf16 %v638, %v637
      %v665 = vpack.c.bf16 %v640, %v639
      %v666 = vpack.c.bf16 %v642, %v641
      %v667 = vpack.c.bf16 %v644, %v643
      %v668 = vpack.c.bf16 %v646, %v645
      %v669 = vpack.c.bf16 %v648, %v647
      %v670 = vpack.c.bf16 %v650, %v649
      %v671 = vpack.c.bf16 %v652, %v651
      %v672 = vpack.c.bf16 %v654, %v653
      %v673 = vpack.c.bf16 %v656, %v655
      %v674 = vpack.c.bf16 %v658, %v657
      %v675 = vld [vmem:[%s3] sm:$0xf]
      %v676 = vld [vmem:[%s3 + $0x4] sm:$0xf]
      %v677 = vld [vmem:[%s3 + $0x8] sm:$0xf]
      %v678 = vld [vmem:[%s3 + $0xc] sm:$0xf]
      %v679 = vld [vmem:[%s3 + $0x10] sm:$0xf]
      %v680 = vld [vmem:[%s3 + $0x14] sm:$0xf]
      %v681 = vld [vmem:[%s3 + $0x18] sm:$0xf]
      %v682 = vld [vmem:[%s3 + $0x1c] sm:$0xf]
      %v683 = vld [vmem:[%s3 + $0x20] sm:$0xf]
      %v684 = vld [vmem:[%s3 + $0x24] sm:$0xf]
      %v685 = vld [vmem:[%s3 + $0x28] sm:$0xf]
      %v686 = vld [vmem:[%s3 + $0x2c] sm:$0xf]
      %v687 = vld [vmem:[%s3 + $0x30] sm:$0xf]
      %v688 = vld [vmem:[%s3 + $0x34] sm:$0xf]
      %v689 = vld [vmem:[%s3 + $0x38] sm:$0xf]
      %v690 = vld [vmem:[%s3 + $0x3c] sm:$0xf]
      %v691 = vld [vmem:[%s4] sm:$0x1]
      %v693 = vlaneseq
      %v694 = vshrl.u32 %v693, 7
      %v695 = vsub.s32 0, %v694
      %v696 = vrot.slane %v691, %v695
      %v714 = vunpack.c.l.b16 %v675
      %v715 = vunpack.c.l.b16 %v676
      %v716 = vunpack.c.l.b16 %v677
      %v717 = vunpack.c.l.b16 %v678
      %v718 = vunpack.c.l.b16 %v679
      %v719 = vunpack.c.l.b16 %v680
      %v720 = vunpack.c.l.b16 %v681
      %v721 = vunpack.c.l.b16 %v682
      %v722 = vunpack.c.l.b16 %v683
      %v723 = vunpack.c.l.b16 %v684
      %v724 = vunpack.c.l.b16 %v685
      %v725 = vunpack.c.l.b16 %v686
      %v726 = vunpack.c.l.b16 %v687
      %v727 = vunpack.c.l.b16 %v688
      %v728 = vunpack.c.l.b16 %v689
      %v729 = vunpack.c.l.b16 %v690
      %v730 = vpack.c.b16 %v715, %v714
      %v731 = vpack.c.b16 %v717, %v716
      %v732 = vpack.c.b16 %v719, %v718
      %v733 = vpack.c.b16 %v721, %v720
      %v734 = vpack.c.b16 %v723, %v722
      %v735 = vpack.c.b16 %v725, %v724
      %v736 = vpack.c.b16 %v727, %v726
      %v737 = vpack.c.b16 %v729, %v728
      %746 = vmatprep.subr.bf16.mxu0 0
      %747 = vmatpush1.bf16.msra.mxu0 %v730
      %748 = vmatprep.subr.bf16.mxu0 0
      %749 = vmatpush1.bf16.msra.mxu0 %v731
      %750 = vmatprep.subr.bf16.mxu0 0
      %751 = vmatpush1.bf16.msra.mxu0 %v732
      %752 = vmatprep.subr.bf16.mxu0 0
      %753 = vmatpush1.bf16.msra.mxu0 %v733
      %754 = vmatprep.subr.bf16.mxu0 0
      %755 = vmatpush1.bf16.msra.mxu0 %v734
      %756 = vmatprep.subr.bf16.mxu0 0
      %757 = vmatpush1.bf16.msra.mxu0 %v735
      %758 = vmatprep.subr.bf16.mxu0 0
      %759 = vmatpush1.bf16.msra.mxu0 %v736
      %760 = vmatprep.subr.bf16.mxu0 0
      %761 = vmatpush1.bf16.msra.mxu0 %v737
      %762 = vmatprep.subr.bf16.mxu0 0
      %763 = vmatpush1.bf16.msra.mxu0 0
      %764 = vmatprep.subr.bf16.mxu0 0
      %765 = vmatpush1.bf16.msra.mxu0 0
      %766 = vmatprep.subr.bf16.mxu0 0
      %767 = vmatpush1.bf16.msra.mxu0 0
      %768 = vmatprep.subr.bf16.mxu0 0
      %769 = vmatpush1.bf16.msra.mxu0 0
      %770 = vmatprep.subr.bf16.mxu0 0
      %771 = vmatpush1.bf16.msra.mxu0 0
      %772 = vmatprep.subr.bf16.mxu0 0
      %773 = vmatpush1.bf16.msra.mxu0 0
      %774 = vmatprep.subr.bf16.mxu0 0
      %775 = vmatpush1.bf16.msra.mxu0 0
      %776 = vmatprep.subr.bf16.mxu0 0
      %777 = vmatpush1.bf16.msra.mxu0 0
      %778 = vmatprep.mubr.bf16.mxu0 0
      %779 = vmatmul.mubr.bf16.gmra.mrb[0].mxu0 %v659
      %v780 = vpop.f32.mrb[0].mxu0
      %v781 = vadd.f32 %v696, %v780
      %v782 = vpop.f32.mrb[0].mxu0
      %v783 = vpop.f32.mrb[0].mxu0
      %v784 = vadd.f32 %v696, %v783
      %v785 = vpop.f32.mrb[0].mxu0
      %786 = vmatprep.mubr.bf16.mxu0 0
      %787 = vmatmul.mubr.bf16.gmra.mrb[0].mxu0 %v660
      %v788 = vpop.f32.mrb[0].mxu0
      %v789 = vadd.f32 %v696, %v788
      %v790 = vpop.f32.mrb[0].mxu0
      %v791 = vpop.f32.mrb[0].mxu0
      %v792 = vadd.f32 %v696, %v791
      %v793 = vpop.f32.mrb[0].mxu0
      %794 = vmatprep.mubr.bf16.mxu0 0
      %795 = vmatmul.mubr.bf16.gmra.mrb[0].mxu0 %v661
      %v796 = vpop.f32.mrb[0].mxu0
      %v797 = vadd.f32 %v696, %v796
      %v798 = vpop.f32.mrb[0].mxu0
      %v799 = vpop.f32.mrb[0].mxu0
      %v800 = vadd.f32 %v696, %v799
      %v801 = vpop.f32.mrb[0].mxu0
      %802 = vmatprep.mubr.bf16.mxu0 0
      %803 = vmatmul.mubr.bf16.gmra.mrb[0].mxu0 %v662
      %v804 = vpop.f32.mrb[0].mxu0
      %v805 = vadd.f32 %v696, %v804
      %v806 = vpop.f32.mrb[0].mxu0
      %v807 = vpop.f32.mrb[0].mxu0
      %v808 = vadd.f32 %v696, %v807
      %v809 = vpop.f32.mrb[0].mxu0
      %810 = vmatprep.mubr.bf16.mxu0 0
      %811 = vmatmul.mubr.bf16.gmra.mrb[0].mxu0 %v663
      %v812 = vpop.f32.mrb[0].mxu0
      %v813 = vadd.f32 %v696, %v812
      %v814 = vpop.f32.mrb[0].mxu0
      %v815 = vpop.f32.mrb[0].mxu0
      %v816 = vadd.f32 %v696, %v815
      %v817 = vpop.f32.mrb[0].mxu0
      %818 = vmatprep.mubr.bf16.mxu0 0
      %819 = vmatmul.mubr.bf16.gmra.mrb[0].mxu0 %v664
      %v820 = vpop.f32.mrb[0].mxu0
      %v821 = vadd.f32 %v696, %v820
      %v822 = vpop.f32.mrb[0].mxu0
      %v823 = vpop.f32.mrb[0].mxu0
      %v824 = vadd.f32 %v696, %v823
      %v825 = vpop.f32.mrb[0].mxu0
      %826 = vmatprep.mubr.bf16.mxu0 0
      %827 = vmatmul.mubr.bf16.gmra.mrb[0].mxu0 %v665
      %v828 = vpop.f32.mrb[0].mxu0
      %v829 = vadd.f32 %v696, %v828
      %v830 = vpop.f32.mrb[0].mxu0
      %v831 = vpop.f32.mrb[0].mxu0
      %v832 = vadd.f32 %v696, %v831
      %v833 = vpop.f32.mrb[0].mxu0
      %834 = vmatprep.mubr.bf16.mxu0 0
      %835 = vmatmul.mubr.bf16.gmra.mrb[0].mxu0 %v666
      %v836 = vpop.f32.mrb[0].mxu0
      %v837 = vadd.f32 %v696, %v836
      %v838 = vpop.f32.mrb[0].mxu0
      %v839 = vpop.f32.mrb[0].mxu0
      %v840 = vadd.f32 %v696, %v839
      %v841 = vpop.f32.mrb[0].mxu0
      %842 = vmatprep.mubr.bf16.mxu0 0
      %843 = vmatmul.mubr.bf16.gmra.mrb[0].mxu0 %v667
      %v844 = vpop.f32.mrb[0].mxu0
      %v845 = vadd.f32 %v696, %v844
      %v846 = vpop.f32.mrb[0].mxu0
      %v847 = vpop.f32.mrb[0].mxu0
      %v848 = vadd.f32 %v696, %v847
      %v849 = vpop.f32.mrb[0].mxu0
      %850 = vmatprep.mubr.bf16.mxu0 0
      %851 = vmatmul.mubr.bf16.gmra.mrb[0].mxu0 %v668
      %v852 = vpop.f32.mrb[0].mxu0
      %v853 = vadd.f32 %v696, %v852
      %v854 = vpop.f32.mrb[0].mxu0
      %v855 = vpop.f32.mrb[0].mxu0
      %v856 = vadd.f32 %v696, %v855
      %v857 = vpop.f32.mrb[0].mxu0
      %858 = vmatprep.mubr.bf16.mxu0 0
      %859 = vmatmul.mubr.bf16.gmra.mrb[0].mxu0 %v669
      %v860 = vpop.f32.mrb[0].mxu0
      %v861 = vadd.f32 %v696, %v860
      %v862 = vpop.f32.mrb[0].mxu0
      %v863 = vpop.f32.mrb[0].mxu0
      %v864 = vadd.f32 %v696, %v863
      %v865 = vpop.f32.mrb[0].mxu0
      %866 = vmatprep.mubr.bf16.mxu0 0
      %867 = vmatmul.mubr.bf16.gmra.mrb[0].mxu0 %v670
      %v868 = vpop.f32.mrb[0].mxu0
      %v869 = vadd.f32 %v696, %v868
      %v870 = vpop.f32.mrb[0].mxu0
      %v871 = vpop.f32.mrb[0].mxu0
      %v872 = vadd.f32 %v696, %v871
      %v873 = vpop.f32.mrb[0].mxu0
      %874 = vmatprep.mubr.bf16.mxu0 0
      %875 = vmatmul.mubr.bf16.gmra.mrb[0].mxu0 %v671
      %v876 = vpop.f32.mrb[0].mxu0
      %v877 = vadd.f32 %v696, %v876
      %v878 = vpop.f32.mrb[0].mxu0
      %v879 = vpop.f32.mrb[0].mxu0
      %v880 = vadd.f32 %v696, %v879
      %v881 = vpop.f32.mrb[0].mxu0
      %882 = vmatprep.mubr.bf16.mxu0 0
      %883 = vmatmul.mubr.bf16.gmra.mrb[0].mxu0 %v672
      %v884 = vpop.f32.mrb[0].mxu0
      %v885 = vadd.f32 %v696, %v884
      %v886 = vpop.f32.mrb[0].mxu0
      %v887 = vpop.f32.mrb[0].mxu0
      %v888 = vadd.f32 %v696, %v887
      %v889 = vpop.f32.mrb[0].mxu0
      %890 = vmatprep.mubr.bf16.mxu0 0
      %891 = vmatmul.mubr.bf16.gmra.mrb[0].mxu0 %v673
      %v892 = vpop.f32.mrb[0].mxu0
      %v893 = vadd.f32 %v696, %v892
      %v894 = vpop.f32.mrb[0].mxu0
      %v895 = vpop.f32.mrb[0].mxu0
      %v896 = vadd.f32 %v696, %v895
      %v897 = vpop.f32.mrb[0].mxu0
      %898 = vmatprep.mubr.bf16.mxu0 0
      %899 = vmatmul.mubr.bf16.gmra.mrb[0].mxu0 %v674
      %v900 = vpop.f32.mrb[0].mxu0
      %v901 = vadd.f32 %v696, %v900
      %v902 = vpop.f32.mrb[0].mxu0
      %v903 = vpop.f32.mrb[0].mxu0
      %v904 = vadd.f32 %v696, %v903
      %v905 = vpop.f32.mrb[0].mxu0
      %906 = vdwg.mxu0
      %v907 = vmax.f32 %v781, 0.0
      %v908 = vmax.f32 %v784, 0.0
      %v909 = vmax.f32 %v789, 0.0
      %v910 = vmax.f32 %v792, 0.0
      %v911 = vmax.f32 %v797, 0.0
      %v912 = vmax.f32 %v800, 0.0
      %v913 = vmax.f32 %v805, 0.0
      %v914 = vmax.f32 %v808, 0.0
      %v915 = vmax.f32 %v813, 0.0
      %v916 = vmax.f32 %v816, 0.0
      %v917 = vmax.f32 %v821, 0.0
      %v918 = vmax.f32 %v824, 0.0
      %v919 = vmax.f32 %v829, 0.0
      %v920 = vmax.f32 %v832, 0.0
      %v921 = vmax.f32 %v837, 0.0
      %v922 = vmax.f32 %v840, 0.0
      %v923 = vmax.f32 %v845, 0.0
      %v924 = vmax.f32 %v848, 0.0
      %v925 = vmax.f32 %v853, 0.0
      %v926 = vmax.f32 %v856, 0.0
      %v927 = vmax.f32 %v861, 0.0
      %v928 = vmax.f32 %v864, 0.0
      %v929 = vmax.f32 %v869, 0.0
      %v930 = vmax.f32 %v872, 0.0
      %v931 = vmax.f32 %v877, 0.0
      %v932 = vmax.f32 %v880, 0.0
      %v933 = vmax.f32 %v885, 0.0
      %v934 = vmax.f32 %v888, 0.0
      %v935 = vmax.f32 %v893, 0.0
      %v936 = vmax.f32 %v896, 0.0
      %v937 = vmax.f32 %v901, 0.0
      %v938 = vmax.f32 %v904, 0.0
      %v939 = vpack.c.bf16 %v908, %v907
      %v940 = vpack.c.bf16 %v910, %v909
      %v941 = vpack.c.bf16 %v912, %v911
      %v942 = vpack.c.bf16 %v914, %v913
      %v943 = vpack.c.bf16 %v916, %v915
      %v944 = vpack.c.bf16 %v918, %v917
      %v945 = vpack.c.bf16 %v920, %v919
      %v946 = vpack.c.bf16 %v922, %v921
      %v947 = vpack.c.bf16 %v924, %v923
      %v948 = vpack.c.bf16 %v926, %v925
      %v949 = vpack.c.bf16 %v928, %v927
      %v950 = vpack.c.bf16 %v930, %v929
      %v951 = vpack.c.bf16 %v932, %v931
      %v952 = vpack.c.bf16 %v934, %v933
      %v953 = vpack.c.bf16 %v936, %v935
      %v954 = vpack.c.bf16 %v938, %v937
      %v971 = vunpack.c.l.b16 %v939
      %v972 = vunpack.c.h.b16 %v939
      %v973 = vunpack.c.l.b16 %v940
      %v974 = vunpack.c.h.b16 %v940
      %v975 = vunpack.c.l.b16 %v941
      %v976 = vunpack.c.h.b16 %v941
      %v977 = vunpack.c.l.b16 %v942
      %v978 = vunpack.c.h.b16 %v942
      %v979 = vunpack.c.l.b16 %v943
      %v980 = vunpack.c.h.b16 %v943
      %v981 = vunpack.c.l.b16 %v944
      %v982 = vunpack.c.h.b16 %v944
      %v983 = vunpack.c.l.b16 %v945
      %v984 = vunpack.c.h.b16 %v945
      %v985 = vunpack.c.l.b16 %v946
      %v986 = vunpack.c.h.b16 %v946
      %v987 = vunpack.c.l.b16 %v947
      %v988 = vunpack.c.h.b16 %v947
      %v989 = vunpack.c.l.b16 %v948
      %v990 = vunpack.c.h.b16 %v948
      %v991 = vunpack.c.l.b16 %v949
      %v992 = vunpack.c.h.b16 %v949
      %v993 = vunpack.c.l.b16 %v950
      %v994 = vunpack.c.h.b16 %v950
      %v995 = vunpack.c.l.b16 %v951
      %v996 = vunpack.c.h.b16 %v951
      %v997 = vunpack.c.l.b16 %v952
      %v998 = vunpack.c.h.b16 %v952
      %v999 = vunpack.c.l.b16 %v953
      %v1000 = vunpack.c.h.b16 %v953
      %v1001 = vunpack.c.l.b16 %v954
      %v1002 = vunpack.c.h.b16 %v954
      %v1003 = vpack.c.b16 %v971, %v971
      %v1004 = vpack.c.b16 %v972, %v972
      %v1005 = vpack.c.b16 %v973, %v973
      %v1006 = vpack.c.b16 %v974, %v974
      %v1007 = vpack.c.b16 %v975, %v975
      %v1008 = vpack.c.b16 %v976, %v976
      %v1009 = vpack.c.b16 %v977, %v977
      %v1010 = vpack.c.b16 %v978, %v978
      %v1011 = vpack.c.b16 %v979, %v979
      %v1012 = vpack.c.b16 %v980, %v980
      %v1013 = vpack.c.b16 %v981, %v981
      %v1014 = vpack.c.b16 %v982, %v982
      %v1015 = vpack.c.b16 %v983, %v983
      %v1016 = vpack.c.b16 %v984, %v984
      %v1017 = vpack.c.b16 %v985, %v985
      %v1018 = vpack.c.b16 %v986, %v986
      %v1019 = vpack.c.b16 %v987, %v987
      %v1020 = vpack.c.b16 %v988, %v988
      %v1021 = vpack.c.b16 %v989, %v989
      %v1022 = vpack.c.b16 %v990, %v990
      %v1023 = vpack.c.b16 %v991, %v991
      %v1024 = vpack.c.b16 %v992, %v992
      %v1025 = vpack.c.b16 %v993, %v993
      %v1026 = vpack.c.b16 %v994, %v994
      %v1027 = vpack.c.b16 %v995, %v995
      %v1028 = vpack.c.b16 %v996, %v996
      %v1029 = vpack.c.b16 %v997, %v997
      %v1030 = vpack.c.b16 %v998, %v998
      %v1031 = vpack.c.b16 %v999, %v999
      %v1032 = vpack.c.b16 %v1000, %v1000
      %v1033 = vpack.c.b16 %v1001, %v1001
      %v1034 = vpack.c.b16 %v1002, %v1002
      %1067 = vst [vmem:[%s271] sm:$0xf] %v1003
      %1068 = vst [vmem:[%s271 + $0x4] sm:$0xf] %v1004
      %1069 = vst [vmem:[%s271 + $0x8] sm:$0xf] %v1005
      %1070 = vst [vmem:[%s271 + $0xc] sm:$0xf] %v1006
      %1071 = vst [vmem:[%s271 + $0x10] sm:$0xf] %v1007
      %1072 = vst [vmem:[%s271 + $0x14] sm:$0xf] %v1008
      %1073 = vst [vmem:[%s271 + $0x18] sm:$0xf] %v1009
      %1074 = vst [vmem:[%s271 + $0x1c] sm:$0xf] %v1010
      %1075 = vst [vmem:[%s271 + $0x20] sm:$0xf] %v1011
      %1076 = vst [vmem:[%s271 + $0x24] sm:$0xf] %v1012
      %1077 = vst [vmem:[%s271 + $0x28] sm:$0xf] %v1013
      %1078 = vst [vmem:[%s271 + $0x2c] sm:$0xf] %v1014
      %1079 = vst [vmem:[%s271 + $0x30] sm:$0xf] %v1015
      %1080 = vst [vmem:[%s271 + $0x34] sm:$0xf] %v1016
      %1081 = vst [vmem:[%s271 + $0x38] sm:$0xf] %v1017
      %1082 = vst [vmem:[%s271 + $0x3c] sm:$0xf] %v1018
      %1083 = vst [vmem:[%s271 + $0x40] sm:$0xf] %v1019
      %1084 = vst [vmem:[%s271 + $0x44] sm:$0xf] %v1020
      %1085 = vst [vmem:[%s271 + $0x48] sm:$0xf] %v1021
      %1086 = vst [vmem:[%s271 + $0x4c] sm:$0xf] %v1022
      %1087 = vst [vmem:[%s271 + $0x50] sm:$0xf] %v1023
      %1088 = vst [vmem:[%s271 + $0x54] sm:$0xf] %v1024
      %1089 = vst [vmem:[%s271 + $0x58] sm:$0xf] %v1025
      %1090 = vst [vmem:[%s271 + $0x5c] sm:$0xf] %v1026
      %1091 = vst [vmem:[%s271 + $0x60] sm:$0xf] %v1027
      %1092 = vst [vmem:[%s271 + $0x64] sm:$0xf] %v1028
      %1093 = vst [vmem:[%s271 + $0x68] sm:$0xf] %v1029
      %1094 = vst [vmem:[%s271 + $0x6c] sm:$0xf] %v1030
      %1095 = vst [vmem:[%s271 + $0x70] sm:$0xf] %v1031
      %1096 = vst [vmem:[%s271 + $0x74] sm:$0xf] %v1032
      %1097 = vst [vmem:[%s271 + $0x78] sm:$0xf] %v1033
      %1098 = vst [vmem:[%s271 + $0x7c] sm:$0xf] %v1034
      %s1099 = smul.u32 32, %s20
      %p1100 = scmp.lt.s32.totalorder %s1099, 63
      %s1101 = scalar_select %p1100, %s1099, 63
      %s1102 = smul.addr %s1101, 4
      %s1103 = scalar_lea.vmem %s5, %s1102
      // Predicated region
      $region41: #{multiscale_internal_fwd.11} parent=39 // pred_check
        %p1104 = pneg %p163
      $region42: #{multiscale_internal_fwd.11} parent=39 // pred_check_branch
        %1106 = sbr.rel (%p1104) target = $region44
      $region43: #{multiscale_internal_fwd.11} parent=39 // pred_region
        %s1107 = smul.u32 32, %s20
      $region44: #{multiscale_internal_fwd.11} parent=39 // pred_fallthru
        _
    $region40: #{multiscale_internal_fwd.11} parent=5 // pred_fallthru
      _
    %p1108 = scmp.le.s32.totalorder 2, %s11
    // Predicated region
    $region45: #{multiscale_internal_fwd.11} parent=5 // pred_check
      %p1109 = pneg %p1108
    $region46: #{multiscale_internal_fwd.11} parent=5 // pred_check_branch
      %1111 = sbr.rel (%p1109) target = $region48
    $region47: #{multiscale_internal_fwd.11} parent=5 // pred_region
      %s1112 = ssub.s32 %s11, 2
      // Predicated region
      $region49: #{multiscale_internal_fwd.11} parent=47 // pred_check
        %p1113 = pneg %p169
      $region50: #{multiscale_internal_fwd.11} parent=47 // pred_check_branch
        %1115 = sbr.rel (%p1113) target = $region52
      $region51: #{multiscale_internal_fwd.11} parent=47 // pred_region
        %s1116 = smul.u32 32, %s22
        %p1117 = scmp.lt.s32.totalorder %s1116, 63
        %s1118 = scalar_select %p1117, %s1116, 63
        %s1119 = smul.addr %s1118, 4
        %s1120 = scalar_lea.vmem %s5, %s1119
      $region52: #{multiscale_internal_fwd.11} parent=47 // pred_fallthru
        _
    $region48: #{multiscale_internal_fwd.11} parent=5 // pred_fallthru
      _
  $region6: #{multiscale_internal_fwd.11} parent=0 // loop_footer
    %s15 = sadd.s32 1, %s11
  $region7: #{multiscale_internal_fwd.11} parent=0 // loop_footer_branch
    %10 = sbr.rel target = $region3
  $region8: #{multiscale_internal_fwd.11} parent=0 // loop_exit
    _

// kernel: squeeze.5
$region0: #{squeeze.5}
  %s0 = inlined_call_operand.vmem [shape: f32[512], index: 0, kind: input, shape index: {}]
  %s1 = inlined_call_operand.vmem [shape: f32[2,256], index: 1, kind: output, shape index: {}]
  $region1: #{squeeze.5} parent=0
    #allocation0 [shape = 'u8[8192]{0}', space=vmem, size = 0x2000, scoped, tag = 'scoped mem for output reshape']
    #allocation1 [shape = 'u8[4096]{0}', space=vmem, size = 0x1000, scoped, tag = 'scoped mem for input reshape']
    %s3 = sshllo.u32 0, 4
    %v4 = vld [vmem:[%s0] sm:%s3]
    %5 = vst [vmem:[#allocation1] sm:%s3] %v4
    %v6 = vld [vmem:[#allocation1] sm:$0xf]
    %7 = vst [vmem:[#allocation0] ss:$8 sm:$0x3] %v6
    %s8 = scalar_lea.vmem [#allocation0], 4294967281
    %9 = vst [vmem:[%s8] ss:$8 sm:$0xc] %v6
    %s11 = sshllo.u32 0, 2
    %v13 = vld [vmem:[#allocation0] sm:%s11]
    %s14 = sshllo.u32 0, 2
    %15 = vst [vmem:[%s1] sm:%s14] %v13
    %s16 = scalar_lea.vmem [#allocation0], 8
    %v17 = vld [vmem:[%s16] sm:%s11]
    %s18 = sshllo.u32 0, 2
    %s19 = scalar_lea.vmem %s1, 2
    %20 = vst [vmem:[%s19] sm:%s18] %v17

// kernel: multiscale_internal_fwd.12
$region0: #{multiscale_internal_fwd.12}
  #allocation0 [shape = 'u32[]', space=smem, size = 0x4, offset = 0x4, fixed_abs, tag = 'smem constant byte address 0x4 - core index']
  #allocation1 [shape = 'u32[144,128]{1,0:T(1,128)}', space=vmem, size = 0x12000, scoped, tag = 'internal scratch']
  %s0 = inlined_call_operand.vmem [shape: bf16[512,288], index: 0, kind: input, shape index: {}]
  %s1 = inlined_call_operand.vmem [shape: bf16[288,256], index: 1, kind: input, shape index: {}]
  %s2 = inlined_call_operand.vmem [shape: f32[1,256], index: 2, kind: input, shape index: {}]
  %s3 = inlined_call_operand.vmem [shape: f32[512,128], index: 3, kind: input, shape index: {}]
  %s4 = inlined_call_operand.vmem [shape: f32[512,128], index: 4, kind: output, shape index: {0}]
  %s5 = inlined_call_operand.vmem [shape: f32[512,1], index: 5, kind: output, shape index: {1}]
  %6 = xla_tuple %s4, %s5
  %s7 = sld [smem:[#allocation0]]
  $region57: #{multiscale_internal_fwd.12} parent=0
    _
  %s9 = ssub.s32 1, %s7
  %s10 = scalar_select 0, %s9, %s7
  loop: start=0, step=1, limit=4
  $region2: #{multiscale_internal_fwd.12} parent=0 // loop_pre_header
    _
  $region3: #{multiscale_internal_fwd.12} parent=0 // loop_header
    %s12 = sphi 0, %s16
    %p13 = scmp.ge.s32.totalorder %s12, 4
    %s19 = sphi 0, %s31
    %s20 = sphi 0, %s27
    %s21 = sphi 0, %s19
    %s22 = sphi 0, %s20
    %s23 = sphi 0, %s21
    %s24 = sphi 0, %s22
    %s36 = sphi 0, %s38
    %s39 = sphi 0, %s36
    %s40 = sphi 0, %s39
    %s56 = sphi 0, %s40
    %s62 = sphi 0, %s64
    %s65 = sphi 0, %s62
    %s66 = sphi 0, %s65
    %s82 = sphi 0, %s66
    %s86 = sphi 0, %s86
    %s88 = sphi 0, %s86
    %s89 = sphi 0, %s88
    %s103 = sphi 0, %s89
    %s109 = sphi 0, %s111
    %s112 = sphi 0, %s109
    %s113 = sphi 0, %s112
    %s129 = sphi 0, %s113
    %s135 = sphi 0, %s137
    %s138 = sphi 0, %s135
    %s139 = sphi 0, %s138
    %s155 = sphi 0, %s139
    %s161 = sphi 0, %s163
    %s164 = sphi 0, %s161
    %s165 = sphi 0, %s164
    %s181 = sphi 0, %s165
  $region4: #{multiscale_internal_fwd.12} parent=0 // loop_header_branch
    %15 = sbr.rel (%p13) target = $region8
  $region5: #{multiscale_internal_fwd.12} parent=0 // loop_body
    %s17 = ssub.s32 %s12, 1
    %s18 = ssub.s32 %s12, 2
    %s25 = sadd.s32 1, %s20
    %p26 = scmp.ge.s32.totalorder %s25, 1
    %s27 = scalar_select %p26, 0, %s25
    %s28 = sadd.s32 1, %s19
    %s29 = scalar_select %p26, %s28, %s19
    %p30 = scmp.ge.s32.totalorder %s29, 2
    %s31 = scalar_select %p30, 0, %s29
    %s32 = ssub.s32 %s19, %s31
    %s33 = ssub.s32 %s20, %s27
    %s34 = sor.u32 %s32, %s33
    %p35 = scmp.eq.s32.totalorder %s34, 0
    %s37 = sadd.s32 %s36, 1
    %s38 = scalar_select %p35, %s36, %s37
    %p41 = pneg %p35
    %p42 = scmp.eq.s32.totalorder %s12, 1
    %p43 = por %p41, %p42
    %p44 = scmp.ne.s32.totalorder %s36, %s39
    %p45 = scmp.eq.s32.totalorder %s12, 0
    %p46 = por %p44, %p45
    %p47 = scmp.ne.s32.totalorder %s36, %s39
    %p48 = scmp.eq.s32.totalorder %s17, 1
    %p49 = por %p47, %p48
    %p50 = scmp.ne.s32.totalorder %s39, %s40
    %p51 = scmp.eq.s32.totalorder %s17, 0
    %p52 = por %p50, %p51
    %p53 = scmp.ne.s32.totalorder %s39, %s40
    %p54 = scmp.eq.s32.totalorder %s18, 1
    %p55 = por %p53, %p54
    %p57 = scmp.ne.s32.totalorder %s40, %s56
    %p58 = scmp.eq.s32.totalorder %s18, 0
    %p59 = por %p57, %p58
    %s60 = ssub.s32 %s20, %s27
    %p61 = scmp.eq.s32.totalorder %s60, 0
    %s63 = sadd.s32 %s62, 1
    %s64 = scalar_select %p61, %s62, %s63
    %p67 = pneg %p61
    %p68 = scmp.eq.s32.totalorder %s12, 1
    %p69 = por %p67, %p68
    %p70 = scmp.ne.s32.totalorder %s62, %s65
    %p71 = scmp.eq.s32.totalorder %s12, 0
    %p72 = por %p70, %p71
    %p73 = scmp.ne.s32.totalorder %s62, %s65
    %p74 = scmp.eq.s32.totalorder %s17, 1
    %p75 = por %p73, %p74
    %p76 = scmp.ne.s32.totalorder %s65, %s66
    %p77 = scmp.eq.s32.totalorder %s17, 0
    %p78 = por %p76, %p77
    %p79 = scmp.ne.s32.totalorder %s65, %s66
    %p80 = scmp.eq.s32.totalorder %s18, 1
    %p81 = por %p79, %p80
    %p83 = scmp.ne.s32.totalorder %s66, %s82
    %p84 = scmp.eq.s32.totalorder %s18, 0
    %p85 = por %p83, %p84
    %s87 = sadd.s32 %s86, 1
    %p90 = scmp.eq.s32.totalorder %s12, 1
    %p91 = scmp.ne.s32.totalorder %s86, %s88
    %p92 = scmp.eq.s32.totalorder %s12, 0
    %p93 = por %p91, %p92
    %p94 = scmp.ne.s32.totalorder %s86, %s88
    %p95 = scmp.eq.s32.totalorder %s17, 1
    %p96 = por %p94, %p95
    %p97 = scmp.ne.s32.totalorder %s88, %s89
    %p98 = scmp.eq.s32.totalorder %s17, 0
    %p99 = por %p97, %p98
    %p100 = scmp.ne.s32.totalorder %s88, %s89
    %p101 = scmp.eq.s32.totalorder %s18, 1
    %p102 = por %p100, %p101
    %p104 = scmp.ne.s32.totalorder %s89, %s103
    %p105 = scmp.eq.s32.totalorder %s18, 0
    %p106 = por %p104, %p105
    %s107 = ssub.s32 %s19, %s31
    %p108 = scmp.eq.s32.totalorder %s107, 0
    %s110 = sadd.s32 %s109, 1
    %s111 = scalar_select %p108, %s109, %s110
    %p114 = pneg %p108
    %p115 = scmp.eq.s32.totalorder %s12, 1
    %p116 = por %p114, %p115
    %p117 = scmp.ne.s32.totalorder %s109, %s112
    %p118 = scmp.eq.s32.totalorder %s12, 0
    %p119 = por %p117, %p118
    %p120 = scmp.ne.s32.totalorder %s109, %s112
    %p121 = scmp.eq.s32.totalorder %s17, 1
    %p122 = por %p120, %p121
    %p123 = scmp.ne.s32.totalorder %s112, %s113
    %p124 = scmp.eq.s32.totalorder %s17, 0
    %p125 = por %p123, %p124
    %p126 = scmp.ne.s32.totalorder %s112, %s113
    %p127 = scmp.eq.s32.totalorder %s18, 1
    %p128 = por %p126, %p127
    %p130 = scmp.ne.s32.totalorder %s113, %s129
    %p131 = scmp.eq.s32.totalorder %s18, 0
    %p132 = por %p130, %p131
    %s133 = ssub.s32 %s19, %s31
    %p134 = scmp.eq.s32.totalorder %s133, 0
    %s136 = sadd.s32 %s135, 1
    %s137 = scalar_select %p134, %s135, %s136
    %p140 = pneg %p134
    %p141 = scmp.eq.s32.totalorder %s12, 1
    %p142 = por %p140, %p141
    %p143 = scmp.ne.s32.totalorder %s135, %s138
    %p144 = scmp.eq.s32.totalorder %s12, 0
    %p145 = por %p143, %p144
    %p146 = scmp.ne.s32.totalorder %s135, %s138
    %p147 = scmp.eq.s32.totalorder %s17, 1
    %p148 = por %p146, %p147
    %p149 = scmp.ne.s32.totalorder %s138, %s139
    %p150 = scmp.eq.s32.totalorder %s17, 0
    %p151 = por %p149, %p150
    %p152 = scmp.ne.s32.totalorder %s138, %s139
    %p153 = scmp.eq.s32.totalorder %s18, 1
    %p154 = por %p152, %p153
    %p156 = scmp.ne.s32.totalorder %s139, %s155
    %p157 = scmp.eq.s32.totalorder %s18, 0
    %p158 = por %p156, %p157
    %s159 = ssub.s32 %s19, %s31
    %p160 = scmp.eq.s32.totalorder %s159, 0
    %s162 = sadd.s32 %s161, 1
    %s163 = scalar_select %p160, %s161, %s162
    %p166 = pneg %p160
    %p167 = scmp.eq.s32.totalorder %s12, 1
    %p168 = por %p166, %p167
    %p169 = scmp.ne.s32.totalorder %s161, %s164
    %p170 = scmp.eq.s32.totalorder %s12, 0
    %p171 = por %p169, %p170
    %p172 = scmp.ne.s32.totalorder %s161, %s164
    %p173 = scmp.eq.s32.totalorder %s17, 1
    %p174 = por %p172, %p173
    %p175 = scmp.ne.s32.totalorder %s164, %s165
    %p176 = scmp.eq.s32.totalorder %s17, 0
    %p177 = por %p175, %p176
    %p178 = scmp.ne.s32.totalorder %s164, %s165
    %p179 = scmp.eq.s32.totalorder %s18, 1
    %p180 = por %p178, %p179
    %p182 = scmp.ne.s32.totalorder %s165, %s181
    %p183 = scmp.eq.s32.totalorder %s18, 0
    %p184 = por %p182, %p183
    %p185 = scmp.le.s32.totalorder 1, %s12
    %p186 = scmp.lt.s32.totalorder %s12, 3
    %p187 = pnand %p185, %p186
    %p188 = pneg %p187
    // Predicated region
    $region9: #{multiscale_internal_fwd.12} parent=5 // pred_check
      _
    $region10: #{multiscale_internal_fwd.12} parent=5 // pred_check_branch
      %190 = sbr.rel (%p187) target = $region12
    $region11: #{multiscale_internal_fwd.12} parent=5 // pred_region
      %s191 = ssub.s32 %s12, 1
      // Predicated region
      $region13: #{multiscale_internal_fwd.12} parent=11 // pred_check
        %p192 = pneg %p78
      $region14: #{multiscale_internal_fwd.12} parent=11 // pred_check_branch
        %194 = sbr.rel (%p192) target = $region16
      $region15: #{multiscale_internal_fwd.12} parent=11 // pred_region
        %s195 = smul.u32 36, %s22
        %p196 = scmp.lt.s32.totalorder %s195, 35
        %s197 = scalar_select %p196, %s195, 35
        %s198 = smul.addr %s197, 2
        %s199 = smul.addr %s198, 4
        %s200 = scalar_lea.vmem %s1, %s199
        %s201 = smul.u32 36, %s22
      $region16: #{multiscale_internal_fwd.12} parent=11 // pred_fallthru
        _
      // Predicated region
      $region17: #{multiscale_internal_fwd.12} parent=11 // pred_check
        %p202 = pneg %p99
      $region18: #{multiscale_internal_fwd.12} parent=11 // pred_check_branch
        %204 = sbr.rel (%p202) target = $region20
      $region19: #{multiscale_internal_fwd.12} parent=11 // pred_region
        _
      $region20: #{multiscale_internal_fwd.12} parent=11 // pred_fallthru
        _
    $region12: #{multiscale_internal_fwd.12} parent=5 // pred_fallthru
      _
    %p205 = scmp.lt.s32.totalorder %s12, 2
    // Predicated region
    $region21: #{multiscale_internal_fwd.12} parent=5 // pred_check
      %p206 = pneg %p205
    $region22: #{multiscale_internal_fwd.12} parent=5 // pred_check_branch
      %208 = sbr.rel (%p206) target = $region24
    $region23: #{multiscale_internal_fwd.12} parent=5 // pred_region
      // Predicated region
      $region25: #{multiscale_internal_fwd.12} parent=23 // pred_check
        %p209 = pneg %p46
      $region26: #{multiscale_internal_fwd.12} parent=23 // pred_check_branch
        %211 = sbr.rel (%p209) target = $region28
      $region27: #{multiscale_internal_fwd.12} parent=23 // pred_region
        %s212 = smul.u32 32, %s19
        %s213 = smul.u32 3, %s20
        %p214 = scmp.lt.s32.totalorder %s212, 63
        %s215 = scalar_select %p214, %s212, 63
        %p216 = scmp.lt.s32.totalorder %s213, 2
        %s217 = scalar_select %p216, %s213, 2
        %s218 = smul.addr %s215, 3
        %s219 = sadd.s32 %s217, %s218
        %s220 = smul.addr %s219, 4
        %s221 = scalar_lea.vmem %s0, %s220
        %s222 = smul.u32 32, %s19
        %s223 = smul.u32 3, %s20
      $region28: #{multiscale_internal_fwd.12} parent=23 // pred_fallthru
        _
      // Predicated region
      $region29: #{multiscale_internal_fwd.12} parent=23 // pred_check
        %p224 = pneg %p119
      $region30: #{multiscale_internal_fwd.12} parent=23 // pred_check_branch
        %226 = sbr.rel (%p224) target = $region32
      $region31: #{multiscale_internal_fwd.12} parent=23 // pred_region
        %s227 = smul.u32 32, %s19
        %p228 = scmp.lt.s32.totalorder %s227, 63
        %s229 = scalar_select %p228, %s227, 63
        %s230 = smul.addr %s229, 8
        %s231 = scalar_lea.vmem %s3, %s230
        %s232 = smul.u32 32, %s19
      $region32: #{multiscale_internal_fwd.12} parent=23 // pred_fallthru
        _
    $region24: #{multiscale_internal_fwd.12} parent=5 // pred_fallthru
      _
    %p233 = scmp.le.s32.totalorder 1, %s12
    %p234 = scmp.lt.s32.totalorder %s12, 3
    %p235 = pnand %p233, %p234
    %p236 = pneg %p235
    // Predicated region
    $region33: #{multiscale_internal_fwd.12} parent=5 // pred_check
      _
    $region34: #{multiscale_internal_fwd.12} parent=5 // pred_check_branch
      %238 = sbr.rel (%p235) target = $region36
    $region35: #{multiscale_internal_fwd.12} parent=5 // pred_region
      %s239 = ssub.s32 %s12, 1
      %s240 = smul.u32 32, %s21
      %s241 = smul.u32 3, %s22
      %p242 = scmp.lt.s32.totalorder %s240, 63
      %s243 = scalar_select %p242, %s240, 63
      %p244 = scmp.lt.s32.totalorder %s241, 2
      %s245 = scalar_select %p244, %s241, 2
      %s246 = smul.addr %s243, 3
      %s247 = sadd.s32 %s245, %s246
      %s248 = smul.addr %s247, 4
      %s249 = scalar_lea.vmem %s0, %s248
      %p250 = pneg %p52
      %p251 = pneg %p49
      %s252 = smul.u32 36, %s22
      %p253 = scmp.lt.s32.totalorder %s252, 35
      %s254 = scalar_select %p253, %s252, 35
      %s255 = smul.addr %s254, 2
      %s256 = smul.addr %s255, 4
      %s257 = scalar_lea.vmem %s1, %s256
      %p258 = pneg %p78
      %p259 = pneg %p75
      %p260 = pneg %p99
      %p261 = pneg %p96
      %s262 = smul.u32 32, %s21
      %p263 = scmp.lt.s32.totalorder %s262, 63
      %s264 = scalar_select %p263, %s262, 63
      %s265 = smul.addr %s264, 8
      %s266 = scalar_lea.vmem %s3, %s265
      %p267 = pneg %p125
      %p268 = pneg %p122
      %p269 = pneg %p151
      %p270 = pneg %p148
      %s271 = smul.u32 32, %s21
      %p272 = scmp.lt.s32.totalorder %s271, 63
      %s273 = scalar_select %p272, %s271, 63
      %s274 = smul.addr %s273, 8
      %s275 = scalar_lea.vmem %s4, %s274
      %p276 = pneg %p177
      %p277 = pneg %p174
      %s278 = smul.u32 32, %s21
      %p279 = scmp.lt.s32.totalorder %s278, 63
      %s280 = scalar_select %p279, %s278, 63
      %s281 = smul.addr %s280, 8
      %s282 = scalar_lea.vmem %s5, %s281
      %s283 = smul.u32 32, %s21
      %s284 = smul.u32 3, %s22
      %p285 = scmp.lt.s32.totalorder %s283, 63
      %s286 = scalar_select %p285, %s283, 63
      %p287 = scmp.lt.s32.totalorder %s284, 2
      %s288 = scalar_select %p287, %s284, 2
      %s289 = smul.addr %s286, 3
      %s290 = sadd.s32 %s288, %s289
      %s291 = smul.addr %s290, 4
      %s292 = scalar_lea.vmem %s0, %s291
      %s293 = smul.u32 32, %s21
      %s294 = smul.u32 3, %s22
      %s295 = smul.u32 36, %s22
      %p296 = scmp.lt.s32.totalorder %s295, 35
      %s297 = scalar_select %p296, %s295, 35
      %s298 = smul.addr %s297, 2
      %s299 = smul.addr %s298, 4
      %s300 = scalar_lea.vmem %s1, %s299
      %s301 = smul.u32 36, %s22
      %s302 = smul.u32 32, %s21
      %p303 = scmp.lt.s32.totalorder %s302, 63
      %s304 = scalar_select %p303, %s302, 63
      %s305 = smul.addr %s304, 8
      %s306 = scalar_lea.vmem %s3, %s305
      %s307 = smul.u32 32, %s21
      %s308 = smul.u32 32, %s21
      %p309 = scmp.lt.s32.totalorder %s308, 63
      %s310 = scalar_select %p309, %s308, 63
      %s311 = smul.addr %s310, 8
      %s312 = scalar_lea.vmem %s4, %s311
      %s313 = smul.u32 32, %s21
      %s314 = smul.u32 32, %s21
      %p315 = scmp.lt.s32.totalorder %s314, 63
      %s316 = scalar_select %p315, %s314, 63
      %s317 = smul.addr %s316, 8
      %s318 = scalar_lea.vmem %s5, %s317
      %s319 = smul.u32 32, %s21
      %v321 = vld [vmem:[%s292] sm:$0xff]
      %v322 = vld [vmem:[%s292 + $0x8] sm:$0xf]
      %v323 = vld [vmem:[%s292 + $0xc] sm:$0xff]
      %v324 = vld [vmem:[%s292 + $0x14] sm:$0xf]
      %v325 = vld [vmem:[%s292 + $0x18] sm:$0xff]
      %v326 = vld [vmem:[%s292 + $0x20] sm:$0xf]
      %v327 = vld [vmem:[%s292 + $0x24] sm:$0xff]
      %v328 = vld [vmem:[%s292 + $0x2c] sm:$0xf]
      %v329 = vld [vmem:[%s292 + $0x30] sm:$0xff]
      %v330 = vld [vmem:[%s292 + $0x38] sm:$0xf]
      %v331 = vld [vmem:[%s292 + $0x3c] sm:$0xff]
      %v332 = vld [vmem:[%s292 + $0x44] sm:$0xf]
      %v333 = vld [vmem:[%s292 + $0x48] sm:$0xff]
      %v334 = vld [vmem:[%s292 + $0x50] sm:$0xf]
      %v335 = vld [vmem:[%s292 + $0x54] sm:$0xff]
      %v336 = vld [vmem:[%s292 + $0x5c] sm:$0xf]
      %v337 = vld [vmem:[%s292 + $0x60] sm:$0xff]
      %v338 = vld [vmem:[%s292 + $0x68] sm:$0xf]
      %v339 = vld [vmem:[%s292 + $0x6c] sm:$0xff]
      %v340 = vld [vmem:[%s292 + $0x74] sm:$0xf]
      %v341 = vld [vmem:[%s292 + $0x78] sm:$0xff]
      %v342 = vld [vmem:[%s292 + $0x80] sm:$0xf]
      %v343 = vld [vmem:[%s292 + $0x84] sm:$0xff]
      %v344 = vld [vmem:[%s292 + $0x8c] sm:$0xf]
      %v345 = vld [vmem:[%s292 + $0x90] sm:$0xff]
      %v346 = vld [vmem:[%s292 + $0x98] sm:$0xf]
      %v347 = vld [vmem:[%s292 + $0x9c] sm:$0xff]
      %v348 = vld [vmem:[%s292 + $0xa4] sm:$0xf]
      %v349 = vld [vmem:[%s292 + $0xa8] sm:$0xff]
      %v350 = vld [vmem:[%s292 + $0xb0] sm:$0xf]
      %v351 = vld [vmem:[%s292 + $0xb4] sm:$0xff]
      %v352 = vld [vmem:[%s292 + $0xbc] sm:$0xf]
      %v353 = vld [vmem:[%s292 + $0xc0] sm:$0xff]
      %v354 = vld [vmem:[%s292 + $0xc8] sm:$0xf]
      %v355 = vld [vmem:[%s292 + $0xcc] sm:$0xff]
      %v356 = vld [vmem:[%s292 + $0xd4] sm:$0xf]
      %v357 = vld [vmem:[%s292 + $0xd8] sm:$0xff]
      %v358 = vld [vmem:[%s292 + $0xe0] sm:$0xf]
      %v359 = vld [vmem:[%s292 + $0xe4] sm:$0xff]
      %v360 = vld [vmem:[%s292 + $0xec] sm:$0xf]
      %v361 = vld [vmem:[%s292 + $0xf0] sm:$0xff]
      %v362 = vld [vmem:[%s292 + $0xf8] sm:$0xf]
      %v363 = vld [vmem:[%s292 + $0xfc] sm:$0xff]
      %v364 = vld [vmem:[%s292 + $0x104] sm:$0xf]
      %v365 = vld [vmem:[%s292 + $0x108] sm:$0xff]
      %v366 = vld [vmem:[%s292 + $0x110] sm:$0xf]
      %v367 = vld [vmem:[%s292 + $0x114] sm:$0xff]
      %v368 = vld [vmem:[%s292 + $0x11c] sm:$0xf]
      %v369 = vld [vmem:[%s292 + $0x120] sm:$0xff]
      %v370 = vld [vmem:[%s292 + $0x128] sm:$0xf]
      %v371 = vld [vmem:[%s292 + $0x12c] sm:$0xff]
      %v372 = vld [vmem:[%s292 + $0x134] sm:$0xf]
      %v373 = vld [vmem:[%s292 + $0x138] sm:$0xff]
      %v374 = vld [vmem:[%s292 + $0x140] sm:$0xf]
      %v375 = vld [vmem:[%s292 + $0x144] sm:$0xff]
      %v376 = vld [vmem:[%s292 + $0x14c] sm:$0xf]
      %v377 = vld [vmem:[%s292 + $0x150] sm:$0xff]
      %v378 = vld [vmem:[%s292 + $0x158] sm:$0xf]
      %v379 = vld [vmem:[%s292 + $0x15c] sm:$0xff]
      %v380 = vld [vmem:[%s292 + $0x164] sm:$0xf]
      %v381 = vld [vmem:[%s292 + $0x168] sm:$0xff]
      %v382 = vld [vmem:[%s292 + $0x170] sm:$0xf]
      %v383 = vld [vmem:[%s292 + $0x174] sm:$0xff]
      %v384 = vld [vmem:[%s292 + $0x17c] sm:$0xf]
      %v385 = vld [vmem:[%s300] sm:$0xff]
      %v386 = vld [vmem:[%s300 + $0x8] sm:$0xff]
      %v387 = vld [vmem:[%s300 + $0x10] sm:$0xff]
      %v388 = vld [vmem:[%s300 + $0x18] sm:$0xff]
      %v389 = vld [vmem:[%s300 + $0x20] sm:$0xff]
      %v390 = vld [vmem:[%s300 + $0x28] sm:$0xff]
      %v391 = vld [vmem:[%s300 + $0x30] sm:$0xff]
      %v392 = vld [vmem:[%s300 + $0x38] sm:$0xff]
      %v393 = vld [vmem:[%s300 + $0x40] sm:$0xff]
      %v394 = vld [vmem:[%s300 + $0x48] sm:$0xff]
      %v395 = vld [vmem:[%s300 + $0x50] sm:$0xff]
      %v396 = vld [vmem:[%s300 + $0x58] sm:$0xff]
      %v397 = vld [vmem:[%s300 + $0x60] sm:$0xff]
      %v398 = vld [vmem:[%s300 + $0x68] sm:$0xff]
      %v399 = vld [vmem:[%s300 + $0x70] sm:$0xff]
      %v400 = vld [vmem:[%s300 + $0x78] sm:$0xff]
      %v401 = vld [vmem:[%s300 + $0x80] sm:$0xff]
      %v402 = vld [vmem:[%s300 + $0x88] sm:$0xff]
      %v403 = vld [vmem:[%s300 + $0x90] sm:$0xff]
      %v404 = vld [vmem:[%s300 + $0x98] sm:$0xff]
      %v405 = vld [vmem:[%s300 + $0xa0] sm:$0xff]
      %v406 = vld [vmem:[%s300 + $0xa8] sm:$0xff]
      %v407 = vld [vmem:[%s300 + $0xb0] sm:$0xff]
      %v408 = vld [vmem:[%s300 + $0xb8] sm:$0xff]
      %v409 = vld [vmem:[%s300 + $0xc0] sm:$0xff]
      %v410 = vld [vmem:[%s300 + $0xc8] sm:$0xff]
      %v411 = vld [vmem:[%s300 + $0xd0] sm:$0xff]
      %v412 = vld [vmem:[%s300 + $0xd8] sm:$0xff]
      %v413 = vld [vmem:[%s300 + $0xe0] sm:$0xff]
      %v414 = vld [vmem:[%s300 + $0xe8] sm:$0xff]
      %v415 = vld [vmem:[%s300 + $0xf0] sm:$0xff]
      %v416 = vld [vmem:[%s300 + $0xf8] sm:$0xff]
      %v417 = vld [vmem:[%s300 + $0x100] sm:$0xff]
      %v418 = vld [vmem:[%s300 + $0x108] sm:$0xff]
      %v419 = vld [vmem:[%s300 + $0x110] sm:$0xff]
      %v420 = vld [vmem:[%s300 + $0x118] sm:$0xff]
      %v421 = vld [vmem:[%s2] sm:$0x3]
      %v423 = vlaneseq
      %v424 = vshrl.u32 %v423, 7
      %v425 = vsub.s32 0, %v424
      %v426 = vrot.slane %v421, %v425
      %v427 = vlaneseq
      %v428 = vshrl.u32 %v427, 7
      %v429 = vsub.s32 1, %v428
      %v430 = vrot.slane %v421, %v429
      %v497 = vunpack.c.l.b16 %v321
      %v498 = vunpack.c.h.b16 %v321
      %v499 = vunpack.c.l.b16 %v322
      %v500 = vunpack.c.l.b16 %v323
      %v501 = vunpack.c.h.b16 %v323
      %v502 = vunpack.c.l.b16 %v324
      %v503 = vunpack.c.l.b16 %v325
      %v504 = vunpack.c.h.b16 %v325
      %v505 = vunpack.c.l.b16 %v326
      %v506 = vunpack.c.l.b16 %v327
      %v507 = vunpack.c.h.b16 %v327
      %v508 = vunpack.c.l.b16 %v328
      %v509 = vunpack.c.l.b16 %v329
      %v510 = vunpack.c.h.b16 %v329
      %v511 = vunpack.c.l.b16 %v330
      %v512 = vunpack.c.l.b16 %v331
      %v513 = vunpack.c.h.b16 %v331
      %v514 = vunpack.c.l.b16 %v332
      %v515 = vunpack.c.l.b16 %v333
      %v516 = vunpack.c.h.b16 %v333
      %v517 = vunpack.c.l.b16 %v334
      %v518 = vunpack.c.l.b16 %v335
      %v519 = vunpack.c.h.b16 %v335
      %v520 = vunpack.c.l.b16 %v336
      %v521 = vunpack.c.l.b16 %v337
      %v522 = vunpack.c.h.b16 %v337
      %v523 = vunpack.c.l.b16 %v338
      %v524 = vunpack.c.l.b16 %v339
      %v525 = vunpack.c.h.b16 %v339
      %v526 = vunpack.c.l.b16 %v340
      %v527 = vunpack.c.l.b16 %v341
      %v528 = vunpack.c.h.b16 %v341
      %v529 = vunpack.c.l.b16 %v342
      %v530 = vunpack.c.l.b16 %v343
      %v531 = vunpack.c.h.b16 %v343
      %v532 = vunpack.c.l.b16 %v344
      %v533 = vunpack.c.l.b16 %v345
      %v534 = vunpack.c.h.b16 %v345
      %v535 = vunpack.c.l.b16 %v346
      %v536 = vunpack.c.l.b16 %v347
      %v537 = vunpack.c.h.b16 %v347
      %v538 = vunpack.c.l.b16 %v348
      %v539 = vunpack.c.l.b16 %v349
      %v540 = vunpack.c.h.b16 %v349
      %v541 = vunpack.c.l.b16 %v350
      %v542 = vunpack.c.l.b16 %v351
      %v543 = vunpack.c.h.b16 %v351
      %v544 = vunpack.c.l.b16 %v352
      %v545 = vunpack.c.l.b16 %v353
      %v546 = vunpack.c.h.b16 %v353
      %v547 = vunpack.c.l.b16 %v354
      %v548 = vunpack.c.l.b16 %v355
      %v549 = vunpack.c.h.b16 %v355
      %v550 = vunpack.c.l.b16 %v356
      %v551 = vunpack.c.l.b16 %v357
      %v552 = vunpack.c.h.b16 %v357
      %v553 = vunpack.c.l.b16 %v358
      %v554 = vunpack.c.l.b16 %v359
      %v555 = vunpack.c.h.b16 %v359
      %v556 = vunpack.c.l.b16 %v360
      %v557 = vunpack.c.l.b16 %v361
      %v558 = vunpack.c.h.b16 %v361
      %v559 = vunpack.c.l.b16 %v362
      %v560 = vunpack.c.l.b16 %v363
      %v561 = vunpack.c.h.b16 %v363
      %v562 = vunpack.c.l.b16 %v364
      %v563 = vunpack.c.l.b16 %v365
      %v564 = vunpack.c.h.b16 %v365
      %v565 = vunpack.c.l.b16 %v366
      %v566 = vunpack.c.l.b16 %v367
      %v567 = vunpack.c.h.b16 %v367
      %v568 = vunpack.c.l.b16 %v368
      %v569 = vunpack.c.l.b16 %v369
      %v570 = vunpack.c.h.b16 %v369
      %v571 = vunpack.c.l.b16 %v370
      %v572 = vunpack.c.l.b16 %v371
      %v573 = vunpack.c.h.b16 %v371
      %v574 = vunpack.c.l.b16 %v372
      %v575 = vunpack.c.l.b16 %v373
      %v576 = vunpack.c.h.b16 %v373
      %v577 = vunpack.c.l.b16 %v374
      %v578 = vunpack.c.l.b16 %v375
      %v579 = vunpack.c.h.b16 %v375
      %v580 = vunpack.c.l.b16 %v376
      %v581 = vunpack.c.l.b16 %v377
      %v582 = vunpack.c.h.b16 %v377
      %v583 = vunpack.c.l.b16 %v378
      %v584 = vunpack.c.l.b16 %v379
      %v585 = vunpack.c.h.b16 %v379
      %v586 = vunpack.c.l.b16 %v380
      %v587 = vunpack.c.l.b16 %v381
      %v588 = vunpack.c.h.b16 %v381
      %v589 = vunpack.c.l.b16 %v382
      %v590 = vunpack.c.l.b16 %v383
      %v591 = vunpack.c.h.b16 %v383
      %v592 = vunpack.c.l.b16 %v384
      %v593 = vpack.c.b16 %v500, %v497
      %v594 = vpack.c.b16 %v501, %v498
      %v595 = vpack.c.b16 %v502, %v499
      %v596 = vpack.c.b16 %v506, %v503
      %v597 = vpack.c.b16 %v507, %v504
      %v598 = vpack.c.b16 %v508, %v505
      %v599 = vpack.c.b16 %v512, %v509
      %v600 = vpack.c.b16 %v513, %v510
      %v601 = vpack.c.b16 %v514, %v511
      %v602 = vpack.c.b16 %v518, %v515
      %v603 = vpack.c.b16 %v519, %v516
      %v604 = vpack.c.b16 %v520, %v517
      %v605 = vpack.c.b16 %v524, %v521
      %v606 = vpack.c.b16 %v525, %v522
      %v607 = vpack.c.b16 %v526, %v523
      %v608 = vpack.c.b16 %v530, %v527
      %v609 = vpack.c.b16 %v531, %v528
      %v610 = vpack.c.b16 %v532, %v529
      %v611 = vpack.c.b16 %v536, %v533
      %v612 = vpack.c.b16 %v537, %v534
      %v613 = vpack.c.b16 %v538, %v535
      %v614 = vpack.c.b16 %v542, %v539
      %v615 = vpack.c.b16 %v543, %v540
      %v616 = vpack.c.b16 %v544, %v541
      %v617 = vpack.c.b16 %v548, %v545
      %v618 = vpack.c.b16 %v549, %v546
      %v619 = vpack.c.b16 %v550, %v547
      %v620 = vpack.c.b16 %v554, %v551
      %v621 = vpack.c.b16 %v555, %v552
      %v622 = vpack.c.b16 %v556, %v553
      %v623 = vpack.c.b16 %v560, %v557
      %v624 = vpack.c.b16 %v561, %v558
      %v625 = vpack.c.b16 %v562, %v559
      %v626 = vpack.c.b16 %v566, %v563
      %v627 = vpack.c.b16 %v567, %v564
      %v628 = vpack.c.b16 %v568, %v565
      %v629 = vpack.c.b16 %v572, %v569
      %v630 = vpack.c.b16 %v573, %v570
      %v631 = vpack.c.b16 %v574, %v571
      %v632 = vpack.c.b16 %v578, %v575
      %v633 = vpack.c.b16 %v579, %v576
      %v634 = vpack.c.b16 %v580, %v577
      %v635 = vpack.c.b16 %v584, %v581
      %v636 = vpack.c.b16 %v585, %v582
      %v637 = vpack.c.b16 %v586, %v583
      %v638 = vpack.c.b16 %v590, %v587
      %v639 = vpack.c.b16 %v591, %v588
      %v640 = vpack.c.b16 %v592, %v589
      %v709 = vunpack.c.l.b16 %v385
      %v710 = vunpack.c.h.b16 %v385
      %v711 = vunpack.c.l.b16 %v386
      %v712 = vunpack.c.h.b16 %v386
      %v713 = vunpack.c.l.b16 %v387
      %v714 = vunpack.c.h.b16 %v387
      %v715 = vunpack.c.l.b16 %v388
      %v716 = vunpack.c.h.b16 %v388
      %v717 = vunpack.c.l.b16 %v389
      %v718 = vunpack.c.h.b16 %v389
      %v719 = vunpack.c.l.b16 %v390
      %v720 = vunpack.c.h.b16 %v390
      %v721 = vunpack.c.l.b16 %v391
      %v722 = vunpack.c.h.b16 %v391
      %v723 = vunpack.c.l.b16 %v392
      %v724 = vunpack.c.h.b16 %v392
      %v725 = vunpack.c.l.b16 %v393
      %v726 = vunpack.c.h.b16 %v393
      %v727 = vunpack.c.l.b16 %v394
      %v728 = vunpack.c.h.b16 %v394
      %v729 = vunpack.c.l.b16 %v395
      %v730 = vunpack.c.h.b16 %v395
      %v731 = vunpack.c.l.b16 %v396
      %v732 = vunpack.c.h.b16 %v396
      %v733 = vunpack.c.l.b16 %v397
      %v734 = vunpack.c.h.b16 %v397
      %v735 = vunpack.c.l.b16 %v398
      %v736 = vunpack.c.h.b16 %v398
      %v737 = vunpack.c.l.b16 %v399
      %v738 = vunpack.c.h.b16 %v399
      %v739 = vunpack.c.l.b16 %v400
      %v740 = vunpack.c.h.b16 %v400
      %v741 = vunpack.c.l.b16 %v401
      %v742 = vunpack.c.h.b16 %v401
      %v743 = vunpack.c.l.b16 %v402
      %v744 = vunpack.c.h.b16 %v402
      %v745 = vunpack.c.l.b16 %v403
      %v746 = vunpack.c.h.b16 %v403
      %v747 = vunpack.c.l.b16 %v404
      %v748 = vunpack.c.h.b16 %v404
      %v749 = vunpack.c.l.b16 %v405
      %v750 = vunpack.c.h.b16 %v405
      %v751 = vunpack.c.l.b16 %v406
      %v752 = vunpack.c.h.b16 %v406
      %v753 = vunpack.c.l.b16 %v407
      %v754 = vunpack.c.h.b16 %v407
      %v755 = vunpack.c.l.b16 %v408
      %v756 = vunpack.c.h.b16 %v408
      %v757 = vunpack.c.l.b16 %v409
      %v758 = vunpack.c.h.b16 %v409
      %v759 = vunpack.c.l.b16 %v410
      %v760 = vunpack.c.h.b16 %v410
      %v761 = vunpack.c.l.b16 %v411
      %v762 = vunpack.c.h.b16 %v411
      %v763 = vunpack.c.l.b16 %v412
      %v764 = vunpack.c.h.b16 %v412
      %v765 = vunpack.c.l.b16 %v413
      %v766 = vunpack.c.h.b16 %v413
      %v767 = vunpack.c.l.b16 %v414
      %v768 = vunpack.c.h.b16 %v414
      %v769 = vunpack.c.l.b16 %v415
      %v770 = vunpack.c.h.b16 %v415
      %v771 = vunpack.c.l.b16 %v416
      %v772 = vunpack.c.h.b16 %v416
      %v773 = vunpack.c.l.b16 %v417
      %v774 = vunpack.c.h.b16 %v417
      %v775 = vunpack.c.l.b16 %v418
      %v776 = vunpack.c.h.b16 %v418
      %v777 = vunpack.c.l.b16 %v419
      %v778 = vunpack.c.h.b16 %v419
      %v779 = vunpack.c.l.b16 %v420
      %v780 = vunpack.c.h.b16 %v420
      %v781 = vpack.c.b16 %v711, %v709
      %v782 = vpack.c.b16 %v712, %v710
      %v783 = vpack.c.b16 %v715, %v713
      %v784 = vpack.c.b16 %v716, %v714
      %v785 = vpack.c.b16 %v719, %v717
      %v786 = vpack.c.b16 %v720, %v718
      %v787 = vpack.c.b16 %v723, %v721
      %v788 = vpack.c.b16 %v724, %v722
      %v789 = vpack.c.b16 %v727, %v725
      %v790 = vpack.c.b16 %v728, %v726
      %v791 = vpack.c.b16 %v731, %v729
      %v792 = vpack.c.b16 %v732, %v730
      %v793 = vpack.c.b16 %v735, %v733
      %v794 = vpack.c.b16 %v736, %v734
      %v795 = vpack.c.b16 %v739, %v737
      %v796 = vpack.c.b16 %v740, %v738
      %v797 = vpack.c.b16 %v743, %v741
      %v798 = vpack.c.b16 %v744, %v742
      %v799 = vpack.c.b16 %v747, %v745
      %v800 = vpack.c.b16 %v748, %v746
      %v801 = vpack.c.b16 %v751, %v749
      %v802 = vpack.c.b16 %v752, %v750
      %v803 = vpack.c.b16 %v755, %v753
      %v804 = vpack.c.b16 %v756, %v754
      %v805 = vpack.c.b16 %v759, %v757
      %v806 = vpack.c.b16 %v760, %v758
      %v807 = vpack.c.b16 %v763, %v761
      %v808 = vpack.c.b16 %v764, %v762
      %v809 = vpack.c.b16 %v767, %v765
      %v810 = vpack.c.b16 %v768, %v766
      %v811 = vpack.c.b16 %v771, %v769
      %v812 = vpack.c.b16 %v772, %v770
      %v813 = vpack.c.b16 %v775, %v773
      %v814 = vpack.c.b16 %v776, %v774
      %v815 = vpack.c.b16 %v779, %v777
      %v816 = vpack.c.b16 %v780, %v778
      %vm853 = vcmask 261120
      %v855 = vsel %vm853, %v595, 0
      %v858 = vsel %vm853, %v598, 0
      %v861 = vsel %vm853, %v601, 0
      %v864 = vsel %vm853, %v604, 0
      %v867 = vsel %vm853, %v607, 0
      %v870 = vsel %vm853, %v610, 0
      %v873 = vsel %vm853, %v613, 0
      %v876 = vsel %vm853, %v616, 0
      %v879 = vsel %vm853, %v619, 0
      %v882 = vsel %vm853, %v622, 0
      %v885 = vsel %vm853, %v625, 0
      %v888 = vsel %vm853, %v628, 0
      %v891 = vsel %vm853, %v631, 0
      %v894 = vsel %vm853, %v634, 0
      %v897 = vsel %vm853, %v637, 0
      %v900 = vsel %vm853, %v640, 0
      %902 = vmatprep.subr.bf16.mxu0 %v782
      %903 = vmatpush1.bf16.msra.mxu0 %v781
      %904 = vmatprep.subr.bf16.mxu0 %v784
      %905 = vmatpush1.bf16.msra.mxu0 %v783
      %906 = vmatprep.subr.bf16.mxu0 %v786
      %907 = vmatpush1.bf16.msra.mxu0 %v785
      %908 = vmatprep.subr.bf16.mxu0 %v788
      %909 = vmatpush1.bf16.msra.mxu0 %v787
      %910 = vmatprep.subr.bf16.mxu0 %v790
      %911 = vmatpush1.bf16.msra.mxu0 %v789
      %912 = vmatprep.subr.bf16.mxu0 %v792
      %913 = vmatpush1.bf16.msra.mxu0 %v791
      %914 = vmatprep.subr.bf16.mxu0 %v794
      %915 = vmatpush1.bf16.msra.mxu0 %v793
      %916 = vmatprep.subr.bf16.mxu0 %v796
      %917 = vmatpush1.bf16.msra.mxu0 %v795
      %918 = vmatprep.subr.bf16.mxu0 %v798
      %919 = vmatpush1.bf16.msra.mxu0 %v797
      %920 = vmatprep.subr.bf16.mxu0 %v800
      %921 = vmatpush1.bf16.msra.mxu0 %v799
      %922 = vmatprep.subr.bf16.mxu0 %v802
      %923 = vmatpush1.bf16.msra.mxu0 %v801
      %924 = vmatprep.subr.bf16.mxu0 %v804
      %925 = vmatpush1.bf16.msra.mxu0 %v803
      %926 = vmatprep.subr.bf16.mxu0 %v806
      %927 = vmatpush1.bf16.msra.mxu0 %v805
      %928 = vmatprep.subr.bf16.mxu0 %v808
      %929 = vmatpush1.bf16.msra.mxu0 %v807
      %930 = vmatprep.subr.bf16.mxu0 %v810
      %931 = vmatpush1.bf16.msra.mxu0 %v809
      %932 = vmatprep.subr.bf16.mxu0 %v812
      %933 = vmatpush1.bf16.msra.mxu0 %v811
      %934 = vmatprep.mubr.bf16.mxu0 %v594
      %935 = vmatmul.mubr.bf16.gmra.mrb[0].mxu0 %v593
      %v936 = vpop.f32.mrb[0].mxu0
      %v937 = vadd.f32 %v426, %v936
      %v938 = vpop.f32.mrb[0].mxu0
      %v939 = vadd.f32 %v430, %v938
      %v940 = vpop.f32.mrb[0].mxu0
      %v941 = vadd.f32 %v426, %v940
      %v942 = vpop.f32.mrb[0].mxu0
      %v943 = vadd.f32 %v430, %v942
      %944 = vmatprep.mubr.bf16.mxu0 %v597
      %945 = vmatmul.mubr.bf16.gmra.mrb[0].mxu0 %v596
      %v946 = vpop.f32.mrb[0].mxu0
      %v947 = vadd.f32 %v426, %v946
      %v948 = vpop.f32.mrb[0].mxu0
      %v949 = vadd.f32 %v430, %v948
      %v950 = vpop.f32.mrb[0].mxu0
      %v951 = vadd.f32 %v426, %v950
      %v952 = vpop.f32.mrb[0].mxu0
      %v953 = vadd.f32 %v430, %v952
      %954 = vmatprep.mubr.bf16.mxu0 %v600
      %955 = vmatmul.mubr.bf16.gmra.mrb[0].mxu0 %v599
      %v956 = vpop.f32.mrb[0].mxu0
      %v957 = vadd.f32 %v426, %v956
      %v958 = vpop.f32.mrb[0].mxu0
      %v959 = vadd.f32 %v430, %v958
      %v960 = vpop.f32.mrb[0].mxu0
      %v961 = vadd.f32 %v426, %v960
      %v962 = vpop.f32.mrb[0].mxu0
      %v963 = vadd.f32 %v430, %v962
      %964 = vmatprep.mubr.bf16.mxu0 %v603
      %965 = vmatmul.mubr.bf16.gmra.mrb[0].mxu0 %v602
      %v966 = vpop.f32.mrb[0].mxu0
      %v967 = vadd.f32 %v426, %v966
      %v968 = vpop.f32.mrb[0].mxu0
      %v969 = vadd.f32 %v430, %v968
      %v970 = vpop.f32.mrb[0].mxu0
      %v971 = vadd.f32 %v426, %v970
      %v972 = vpop.f32.mrb[0].mxu0
      %v973 = vadd.f32 %v430, %v972
      %974 = vmatprep.mubr.bf16.mxu0 %v606
      %975 = vmatmul.mubr.bf16.gmra.mrb[0].mxu0 %v605
      %v976 = vpop.f32.mrb[0].mxu0
      %v977 = vadd.f32 %v426, %v976
      %v978 = vpop.f32.mrb[0].mxu0
      %v979 = vadd.f32 %v430, %v978
      %v980 = vpop.f32.mrb[0].mxu0
      %v981 = vadd.f32 %v426, %v980
      %v982 = vpop.f32.mrb[0].mxu0
      %v983 = vadd.f32 %v430, %v982
      %984 = vmatprep.mubr.bf16.mxu0 %v609
      %985 = vmatmul.mubr.bf16.gmra.mrb[0].mxu0 %v608
      %v986 = vpop.f32.mrb[0].mxu0
      %v987 = vadd.f32 %v426, %v986
      %v988 = vpop.f32.mrb[0].mxu0
      %v989 = vadd.f32 %v430, %v988
      %v990 = vpop.f32.mrb[0].mxu0
      %v991 = vadd.f32 %v426, %v990
      %v992 = vpop.f32.mrb[0].mxu0
      %v993 = vadd.f32 %v430, %v992
      %994 = vmatprep.mubr.bf16.mxu0 %v612
      %995 = vmatmul.mubr.bf16.gmra.mrb[0].mxu0 %v611
      %v996 = vpop.f32.mrb[0].mxu0
      %v997 = vadd.f32 %v426, %v996
      %v998 = vpop.f32.mrb[0].mxu0
      %v999 = vadd.f32 %v430, %v998
      %v1000 = vpop.f32.mrb[0].mxu0
      %v1001 = vadd.f32 %v426, %v1000
      %v1002 = vpop.f32.mrb[0].mxu0
      %v1003 = vadd.f32 %v430, %v1002
      %1004 = vmatprep.mubr.bf16.mxu0 %v615
      %1005 = vmatmul.mubr.bf16.gmra.mrb[0].mxu0 %v614
      %v1006 = vpop.f32.mrb[0].mxu0
      %v1007 = vadd.f32 %v426, %v1006
      %v1008 = vpop.f32.mrb[0].mxu0
      %v1009 = vadd.f32 %v430, %v1008
      %v1010 = vpop.f32.mrb[0].mxu0
      %v1011 = vadd.f32 %v426, %v1010
      %v1012 = vpop.f32.mrb[0].mxu0
      %v1013 = vadd.f32 %v430, %v1012
      %1014 = vmatprep.mubr.bf16.mxu0 %v618
      %1015 = vmatmul.mubr.bf16.gmra.mrb[0].mxu0 %v617
      %v1016 = vpop.f32.mrb[0].mxu0
      %v1017 = vadd.f32 %v426, %v1016
      %v1018 = vpop.f32.mrb[0].mxu0
      %v1019 = vadd.f32 %v430, %v1018
      %v1020 = vpop.f32.mrb[0].mxu0
      %v1021 = vadd.f32 %v426, %v1020
      %v1022 = vpop.f32.mrb[0].mxu0
      %v1023 = vadd.f32 %v430, %v1022
      %1024 = vmatprep.mubr.bf16.mxu0 %v621
      %1025 = vmatmul.mubr.bf16.gmra.mrb[0].mxu0 %v620
      %v1026 = vpop.f32.mrb[0].mxu0
      %v1027 = vadd.f32 %v426, %v1026
      %v1028 = vpop.f32.mrb[0].mxu0
      %v1029 = vadd.f32 %v430, %v1028
      %v1030 = vpop.f32.mrb[0].mxu0
      %v1031 = vadd.f32 %v426, %v1030
      %v1032 = vpop.f32.mrb[0].mxu0
      %v1033 = vadd.f32 %v430, %v1032
      %1034 = vmatprep.mubr.bf16.mxu0 %v624
      %1035 = vmatmul.mubr.bf16.gmra.mrb[0].mxu0 %v623
      %v1036 = vpop.f32.mrb[0].mxu0
      %v1037 = vadd.f32 %v426, %v1036
      %v1038 = vpop.f32.mrb[0].mxu0
      %v1039 = vadd.f32 %v430, %v1038
      %v1040 = vpop.f32.mrb[0].mxu0
      %v1041 = vadd.f32 %v426, %v1040
      %v1042 = vpop.f32.mrb[0].mxu0
      %v1043 = vadd.f32 %v430, %v1042
      %1044 = vmatprep.mubr.bf16.mxu0 %v627
      %1045 = vmatmul.mubr.bf16.gmra.mrb[0].mxu0 %v626
      %v1046 = vpop.f32.mrb[0].mxu0
      %v1047 = vadd.f32 %v426, %v1046
      %v1048 = vpop.f32.mrb[0].mxu0
      %v1049 = vadd.f32 %v430, %v1048
      %v1050 = vpop.f32.mrb[0].mxu0
      %v1051 = vadd.f32 %v426, %v1050
      %v1052 = vpop.f32.mrb[0].mxu0
      %v1053 = vadd.f32 %v430, %v1052
      %1054 = vmatprep.mubr.bf16.mxu0 %v630
      %1055 = vmatmul.mubr.bf16.gmra.mrb[0].mxu0 %v629
      %v1056 = vpop.f32.mrb[0].mxu0
      %v1057 = vadd.f32 %v426, %v1056
      %v1058 = vpop.f32.mrb[0].mxu0
      %v1059 = vadd.f32 %v430, %v1058
      %v1060 = vpop.f32.mrb[0].mxu0
      %v1061 = vadd.f32 %v426, %v1060
      %v1062 = vpop.f32.mrb[0].mxu0
      %v1063 = vadd.f32 %v430, %v1062
      %1064 = vmatprep.mubr.bf16.mxu0 %v633
      %1065 = vmatmul.mubr.bf16.gmra.mrb[0].mxu0 %v632
      %v1066 = vpop.f32.mrb[0].mxu0
      %v1067 = vadd.f32 %v426, %v1066
      %v1068 = vpop.f32.mrb[0].mxu0
      %v1069 = vadd.f32 %v430, %v1068
      %v1070 = vpop.f32.mrb[0].mxu0
      %v1071 = vadd.f32 %v426, %v1070
      %v1072 = vpop.f32.mrb[0].mxu0
      %v1073 = vadd.f32 %v430, %v1072
      %1074 = vmatprep.mubr.bf16.mxu0 %v636
      %1075 = vmatmul.mubr.bf16.gmra.mrb[0].mxu0 %v635
      %v1076 = vpop.f32.mrb[0].mxu0
      %v1077 = vadd.f32 %v426, %v1076
      %v1078 = vpop.f32.mrb[0].mxu0
      %v1079 = vadd.f32 %v430, %v1078
      %v1080 = vpop.f32.mrb[0].mxu0
      %v1081 = vadd.f32 %v426, %v1080
      %v1082 = vpop.f32.mrb[0].mxu0
      %v1083 = vadd.f32 %v430, %v1082
      %1084 = vmatprep.mubr.bf16.mxu0 %v639
      %1085 = vmatmul.mubr.bf16.gmra.mrb[0].mxu0 %v638
      %v1086 = vpop.f32.mrb[0].mxu0
      %v1087 = vadd.f32 %v426, %v1086
      %v1088 = vpop.f32.mrb[0].mxu0
      %v1089 = vadd.f32 %v430, %v1088
      %v1090 = vpop.f32.mrb[0].mxu0
      %v1091 = vadd.f32 %v426, %v1090
      %v1092 = vpop.f32.mrb[0].mxu0
      %v1093 = vadd.f32 %v430, %v1092
      %1094 = vdwg.mxu0
      %1095 = vmatprep.subr.bf16.mxu0 %v814
      %1096 = vmatpush1.bf16.msra.mxu0 %v813
      %1097 = vmatprep.subr.bf16.mxu0 %v816
      %1098 = vmatpush1.bf16.msra.mxu0 %v815
      %1099 = vmatprep.subr.bf16.mxu0 0
      %1100 = vmatpush1.bf16.msra.mxu0 0
      %1101 = vmatprep.subr.bf16.mxu0 0
      %1102 = vmatpush1.bf16.msra.mxu0 0
      %1103 = vmatprep.subr.bf16.mxu0 0
      %1104 = vmatpush1.bf16.msra.mxu0 0
      %1105 = vmatprep.subr.bf16.mxu0 0
      %1106 = vmatpush1.bf16.msra.mxu0 0
      %1107 = vmatprep.subr.bf16.mxu0 0
      %1108 = vmatpush1.bf16.msra.mxu0 0
      %1109 = vmatprep.subr.bf16.mxu0 0
      %1110 = vmatpush1.bf16.msra.mxu0 0
      %1111 = vmatprep.subr.bf16.mxu0 0
      %1112 = vmatpush1.bf16.msra.mxu0 0
      %1113 = vmatprep.subr.bf16.mxu0 0
      %1114 = vmatpush1.bf16.msra.mxu0 0
      %1115 = vmatprep.subr.bf16.mxu0 0
      %1116 = vmatpush1.bf16.msra.mxu0 0
      %1117 = vmatprep.subr.bf16.mxu0 0
      %1118 = vmatpush1.bf16.msra.mxu0 0
      %1119 = vmatprep.subr.bf16.mxu0 0
      %1120 = vmatpush1.bf16.msra.mxu0 0
      %1121 = vmatprep.subr.bf16.mxu0 0
      %1122 = vmatpush1.bf16.msra.mxu0 0
      %1123 = vmatprep.subr.bf16.mxu0 0
      %1124 = vmatpush1.bf16.msra.mxu0 0
      %1125 = vmatprep.subr.bf16.mxu0 0
      %1126 = vmatpush1.bf16.msra.mxu0 0
      %1127 = vmatprep.mubr.bf16.mxu0 0
      %1128 = vmatmul.mubr.bf16.gmra.mrb[0].mxu0 %v855
      %v1129 = vpop.f32.mrb[0].mxu0
      %v1130 = vadd.f32 %v937, %v1129
      %v1131 = vpop.f32.mrb[0].mxu0
      %v1132 = vadd.f32 %v939, %v1131
      %v1133 = vpop.f32.mrb[0].mxu0
      %v1134 = vadd.f32 %v941, %v1133
      %v1135 = vpop.f32.mrb[0].mxu0
      %v1136 = vadd.f32 %v943, %v1135
      %1137 = vmatprep.mubr.bf16.mxu0 0
      %1138 = vmatmul.mubr.bf16.gmra.mrb[0].mxu0 %v858
      %v1139 = vpop.f32.mrb[0].mxu0
      %v1140 = vadd.f32 %v947, %v1139
      %v1141 = vpop.f32.mrb[0].mxu0
      %v1142 = vadd.f32 %v949, %v1141
      %v1143 = vpop.f32.mrb[0].mxu0
      %v1144 = vadd.f32 %v951, %v1143
      %v1145 = vpop.f32.mrb[0].mxu0
      %v1146 = vadd.f32 %v953, %v1145
      %1147 = vmatprep.mubr.bf16.mxu0 0
      %1148 = vmatmul.mubr.bf16.gmra.mrb[0].mxu0 %v861
      %v1149 = vpop.f32.mrb[0].mxu0
      %v1150 = vadd.f32 %v957, %v1149
      %v1151 = vpop.f32.mrb[0].mxu0
      %v1152 = vadd.f32 %v959, %v1151
      %v1153 = vpop.f32.mrb[0].mxu0
      %v1154 = vadd.f32 %v961, %v1153
      %v1155 = vpop.f32.mrb[0].mxu0
      %v1156 = vadd.f32 %v963, %v1155
      %1157 = vmatprep.mubr.bf16.mxu0 0
      %1158 = vmatmul.mubr.bf16.gmra.mrb[0].mxu0 %v864
      %v1159 = vpop.f32.mrb[0].mxu0
      %v1160 = vadd.f32 %v967, %v1159
      %v1161 = vpop.f32.mrb[0].mxu0
      %v1162 = vadd.f32 %v969, %v1161
      %v1163 = vpop.f32.mrb[0].mxu0
      %v1164 = vadd.f32 %v971, %v1163
      %v1165 = vpop.f32.mrb[0].mxu0
      %v1166 = vadd.f32 %v973, %v1165
      %1167 = vmatprep.mubr.bf16.mxu0 0
      %1168 = vmatmul.mubr.bf16.gmra.mrb[0].mxu0 %v867
      %v1169 = vpop.f32.mrb[0].mxu0
      %v1170 = vadd.f32 %v977, %v1169
      %v1171 = vpop.f32.mrb[0].mxu0
      %v1172 = vadd.f32 %v979, %v1171
      %v1173 = vpop.f32.mrb[0].mxu0
      %v1174 = vadd.f32 %v981, %v1173
      %v1175 = vpop.f32.mrb[0].mxu0
      %v1176 = vadd.f32 %v983, %v1175
      %1177 = vmatprep.mubr.bf16.mxu0 0
      %1178 = vmatmul.mubr.bf16.gmra.mrb[0].mxu0 %v870
      %v1179 = vpop.f32.mrb[0].mxu0
      %v1180 = vadd.f32 %v987, %v1179
      %v1181 = vpop.f32.mrb[0].mxu0
      %v1182 = vadd.f32 %v989, %v1181
      %v1183 = vpop.f32.mrb[0].mxu0
      %v1184 = vadd.f32 %v991, %v1183
      %v1185 = vpop.f32.mrb[0].mxu0
      %v1186 = vadd.f32 %v993, %v1185
      %1187 = vmatprep.mubr.bf16.mxu0 0
      %1188 = vmatmul.mubr.bf16.gmra.mrb[0].mxu0 %v873
      %v1189 = vpop.f32.mrb[0].mxu0
      %v1190 = vadd.f32 %v997, %v1189
      %v1191 = vpop.f32.mrb[0].mxu0
      %v1192 = vadd.f32 %v999, %v1191
      %v1193 = vpop.f32.mrb[0].mxu0
      %v1194 = vadd.f32 %v1001, %v1193
      %v1195 = vpop.f32.mrb[0].mxu0
      %v1196 = vadd.f32 %v1003, %v1195
      %1197 = vmatprep.mubr.bf16.mxu0 0
      %1198 = vmatmul.mubr.bf16.gmra.mrb[0].mxu0 %v876
      %v1199 = vpop.f32.mrb[0].mxu0
      %v1200 = vadd.f32 %v1007, %v1199
      %v1201 = vpop.f32.mrb[0].mxu0
      %v1202 = vadd.f32 %v1009, %v1201
      %v1203 = vpop.f32.mrb[0].mxu0
      %v1204 = vadd.f32 %v1011, %v1203
      %v1205 = vpop.f32.mrb[0].mxu0
      %v1206 = vadd.f32 %v1013, %v1205
      %1207 = vmatprep.mubr.bf16.mxu0 0
      %1208 = vmatmul.mubr.bf16.gmra.mrb[0].mxu0 %v879
      %v1209 = vpop.f32.mrb[0].mxu0
      %v1210 = vadd.f32 %v1017, %v1209
      %v1211 = vpop.f32.mrb[0].mxu0
      %v1212 = vadd.f32 %v1019, %v1211
      %v1213 = vpop.f32.mrb[0].mxu0
      %v1214 = vadd.f32 %v1021, %v1213
      %v1215 = vpop.f32.mrb[0].mxu0
      %v1216 = vadd.f32 %v1023, %v1215
      %1217 = vmatprep.mubr.bf16.mxu0 0
      %1218 = vmatmul.mubr.bf16.gmra.mrb[0].mxu0 %v882
      %v1219 = vpop.f32.mrb[0].mxu0
      %v1220 = vadd.f32 %v1027, %v1219
      %v1221 = vpop.f32.mrb[0].mxu0
      %v1222 = vadd.f32 %v1029, %v1221
      %v1223 = vpop.f32.mrb[0].mxu0
      %v1224 = vadd.f32 %v1031, %v1223
      %v1225 = vpop.f32.mrb[0].mxu0
      %v1226 = vadd.f32 %v1033, %v1225
      %1227 = vmatprep.mubr.bf16.mxu0 0
      %1228 = vmatmul.mubr.bf16.gmra.mrb[0].mxu0 %v885
      %v1229 = vpop.f32.mrb[0].mxu0
      %v1230 = vadd.f32 %v1037, %v1229
      %v1231 = vpop.f32.mrb[0].mxu0
      %v1232 = vadd.f32 %v1039, %v1231
      %v1233 = vpop.f32.mrb[0].mxu0
      %v1234 = vadd.f32 %v1041, %v1233
      %v1235 = vpop.f32.mrb[0].mxu0
      %v1236 = vadd.f32 %v1043, %v1235
      %1237 = vmatprep.mubr.bf16.mxu0 0
      %1238 = vmatmul.mubr.bf16.gmra.mrb[0].mxu0 %v888
      %v1239 = vpop.f32.mrb[0].mxu0
      %v1240 = vadd.f32 %v1047, %v1239
      %v1241 = vpop.f32.mrb[0].mxu0
      %v1242 = vadd.f32 %v1049, %v1241
      %v1243 = vpop.f32.mrb[0].mxu0
      %v1244 = vadd.f32 %v1051, %v1243
      %v1245 = vpop.f32.mrb[0].mxu0
      %v1246 = vadd.f32 %v1053, %v1245
      %1247 = vmatprep.mubr.bf16.mxu0 0
      %1248 = vmatmul.mubr.bf16.gmra.mrb[0].mxu0 %v891
      %v1249 = vpop.f32.mrb[0].mxu0
      %v1250 = vadd.f32 %v1057, %v1249
      %v1251 = vpop.f32.mrb[0].mxu0
      %v1252 = vadd.f32 %v1059, %v1251
      %v1253 = vpop.f32.mrb[0].mxu0
      %v1254 = vadd.f32 %v1061, %v1253
      %v1255 = vpop.f32.mrb[0].mxu0
      %v1256 = vadd.f32 %v1063, %v1255
      %1257 = vmatprep.mubr.bf16.mxu0 0
      %1258 = vmatmul.mubr.bf16.gmra.mrb[0].mxu0 %v894
      %v1259 = vpop.f32.mrb[0].mxu0
      %v1260 = vadd.f32 %v1067, %v1259
      %v1261 = vpop.f32.mrb[0].mxu0
      %v1262 = vadd.f32 %v1069, %v1261
      %v1263 = vpop.f32.mrb[0].mxu0
      %v1264 = vadd.f32 %v1071, %v1263
      %v1265 = vpop.f32.mrb[0].mxu0
      %v1266 = vadd.f32 %v1073, %v1265
      %1267 = vmatprep.mubr.bf16.mxu0 0
      %1268 = vmatmul.mubr.bf16.gmra.mrb[0].mxu0 %v897
      %v1269 = vpop.f32.mrb[0].mxu0
      %v1270 = vadd.f32 %v1077, %v1269
      %v1271 = vpop.f32.mrb[0].mxu0
      %v1272 = vadd.f32 %v1079, %v1271
      %v1273 = vpop.f32.mrb[0].mxu0
      %v1274 = vadd.f32 %v1081, %v1273
      %v1275 = vpop.f32.mrb[0].mxu0
      %v1276 = vadd.f32 %v1083, %v1275
      %1277 = vmatprep.mubr.bf16.mxu0 0
      %1278 = vmatmul.mubr.bf16.gmra.mrb[0].mxu0 %v900
      %v1279 = vpop.f32.mrb[0].mxu0
      %v1280 = vadd.f32 %v1087, %v1279
      %v1281 = vpop.f32.mrb[0].mxu0
      %v1282 = vadd.f32 %v1089, %v1281
      %v1283 = vpop.f32.mrb[0].mxu0
      %v1284 = vadd.f32 %v1091, %v1283
      %v1285 = vpop.f32.mrb[0].mxu0
      %v1286 = vadd.f32 %v1093, %v1285
      %1287 = vdwg.mxu0
      %v1288 = vadd.f32 %v1132, 2.0
      %v1289 = vadd.f32 %v1136, 2.0
      %v1290 = vadd.f32 %v1142, 2.0
      %v1291 = vadd.f32 %v1146, 2.0
      %v1292 = vadd.f32 %v1152, 2.0
      %v1293 = vadd.f32 %v1156, 2.0
      %v1294 = vadd.f32 %v1162, 2.0
      %v1295 = vadd.f32 %v1166, 2.0
      %v1296 = vadd.f32 %v1172, 2.0
      %v1297 = vadd.f32 %v1176, 2.0
      %v1298 = vadd.f32 %v1182, 2.0
      %v1299 = vadd.f32 %v1186, 2.0
      %v1300 = vadd.f32 %v1192, 2.0
      %v1301 = vadd.f32 %v1196, 2.0
      %v1302 = vadd.f32 %v1202, 2.0
      %v1303 = vadd.f32 %v1206, 2.0
      %v1304 = vadd.f32 %v1212, 2.0
      %v1305 = vadd.f32 %v1216, 2.0
      %v1306 = vadd.f32 %v1222, 2.0
      %v1307 = vadd.f32 %v1226, 2.0
      %v1308 = vadd.f32 %v1232, 2.0
      %v1309 = vadd.f32 %v1236, 2.0
      %v1310 = vadd.f32 %v1242, 2.0
      %v1311 = vadd.f32 %v1246, 2.0
      %v1312 = vadd.f32 %v1252, 2.0
      %v1313 = vadd.f32 %v1256, 2.0
      %v1314 = vadd.f32 %v1262, 2.0
      %v1315 = vadd.f32 %v1266, 2.0
      %v1316 = vadd.f32 %v1272, 2.0
      %v1317 = vadd.f32 %v1276, 2.0
      %v1318 = vadd.f32 %v1282, 2.0
      %v1319 = vadd.f32 %v1286, 2.0
      %v1320 = vand.u32 2147483647, %v1288
      %v1321 = vand.u32 2147483647, %v1289
      %v1322 = vand.u32 2147483647, %v1290
      %v1323 = vand.u32 2147483647, %v1291
      %v1324 = vand.u32 2147483647, %v1292
      %v1325 = vand.u32 2147483647, %v1293
      %v1326 = vand.u32 2147483647, %v1294
      %v1327 = vand.u32 2147483647, %v1295
      %v1328 = vand.u32 2147483647, %v1296
      %v1329 = vand.u32 2147483647, %v1297
      %v1330 = vand.u32 2147483647, %v1298
      %v1331 = vand.u32 2147483647, %v1299
      %v1332 = vand.u32 2147483647, %v1300
      %v1333 = vand.u32 2147483647, %v1301
      %v1334 = vand.u32 2147483647, %v1302
      %v1335 = vand.u32 2147483647, %v1303
      %v1336 = vand.u32 2147483647, %v1304
      %v1337 = vand.u32 2147483647, %v1305
      %v1338 = vand.u32 2147483647, %v1306
      %v1339 = vand.u32 2147483647, %v1307
      %v1340 = vand.u32 2147483647, %v1308
      %v1341 = vand.u32 2147483647, %v1309
      %v1342 = vand.u32 2147483647, %v1310
      %v1343 = vand.u32 2147483647, %v1311
      %v1344 = vand.u32 2147483647, %v1312
      %v1345 = vand.u32 2147483647, %v1313
      %v1346 = vand.u32 2147483647, %v1314
      %v1347 = vand.u32 2147483647, %v1315
      %v1348 = vand.u32 2147483647, %v1316
      %v1349 = vand.u32 2147483647, %v1317
      %v1350 = vand.u32 2147483647, %v1318
      %v1351 = vand.u32 2147483647, %v1319
      %v1352 = vsub.f32 0.0, %v1320
      %v1353 = vsub.f32 0.0, %v1321
      %v1354 = vsub.f32 0.0, %v1322
      %v1355 = vsub.f32 0.0, %v1323
      %v1356 = vsub.f32 0.0, %v1324
      %v1357 = vsub.f32 0.0, %v1325
      %v1358 = vsub.f32 0.0, %v1326
      %v1359 = vsub.f32 0.0, %v1327
      %v1360 = vsub.f32 0.0, %v1328
      %v1361 = vsub.f32 0.0, %v1329
      %v1362 = vsub.f32 0.0, %v1330
      %v1363 = vsub.f32 0.0, %v1331
      %v1364 = vsub.f32 0.0, %v1332
      %v1365 = vsub.f32 0.0, %v1333
      %v1366 = vsub.f32 0.0, %v1334
      %v1367 = vsub.f32 0.0, %v1335
      %v1368 = vsub.f32 0.0, %v1336
      %v1369 = vsub.f32 0.0, %v1337
      %v1370 = vsub.f32 0.0, %v1338
      %v1371 = vsub.f32 0.0, %v1339
      %v1372 = vsub.f32 0.0, %v1340
      %v1373 = vsub.f32 0.0, %v1341
      %v1374 = vsub.f32 0.0, %v1342
      %v1375 = vsub.f32 0.0, %v1343
      %v1376 = vsub.f32 0.0, %v1344
      %v1377 = vsub.f32 0.0, %v1345
      %v1378 = vsub.f32 0.0, %v1346
      %v1379 = vsub.f32 0.0, %v1347
      %v1380 = vsub.f32 0.0, %v1348
      %v1381 = vsub.f32 0.0, %v1349
      %v1382 = vsub.f32 0.0, %v1350
      %v1383 = vsub.f32 0.0, %v1351
      %v1384 = vmul.f32 %v1352, 1.442695
      %v1385 = vpow.pop %v1384
      %v1386 = vmul.f32 %v1353, 1.442695
      %v1387 = vpow.pop %v1386
      %v1388 = vmul.f32 %v1354, 1.442695
      %v1389 = vpow.pop %v1388
      %v1390 = vmul.f32 %v1355, 1.442695
      %v1391 = vpow.pop %v1390
      %v1392 = vmul.f32 %v1356, 1.442695
      %v1393 = vpow.pop %v1392
      %v1394 = vmul.f32 %v1357, 1.442695
      %v1395 = vpow.pop %v1394
      %v1396 = vmul.f32 %v1358, 1.442695
      %v1397 = vpow.pop %v1396
      %v1398 = vmul.f32 %v1359, 1.442695
      %v1399 = vpow.pop %v1398
      %v1400 = vmul.f32 %v1360, 1.442695
      %v1401 = vpow.pop %v1400
      %v1402 = vmul.f32 %v1361, 1.442695
      %v1403 = vpow.pop %v1402
      %v1404 = vmul.f32 %v1362, 1.442695
      %v1405 = vpow.pop %v1404
      %v1406 = vmul.f32 %v1363, 1.442695
      %v1407 = vpow.pop %v1406
      %v1408 = vmul.f32 %v1364, 1.442695
      %v1409 = vpow.pop %v1408
      %v1410 = vmul.f32 %v1365, 1.442695
      %v1411 = vpow.pop %v1410
      %v1412 = vmul.f32 %v1366, 1.442695
      %v1413 = vpow.pop %v1412
      %v1414 = vmul.f32 %v1367, 1.442695
      %v1415 = vpow.pop %v1414
      %v1416 = vmul.f32 %v1368, 1.442695
      %v1417 = vpow.pop %v1416
      %v1418 = vmul.f32 %v1369, 1.442695
      %v1419 = vpow.pop %v1418
      %v1420 = vmul.f32 %v1370, 1.442695
      %v1421 = vpow.pop %v1420
      %v1422 = vmul.f32 %v1371, 1.442695
      %v1423 = vpow.pop %v1422
      %v1424 = vmul.f32 %v1372, 1.442695
      %v1425 = vpow.pop %v1424
      %v1426 = vmul.f32 %v1373, 1.442695
      %v1427 = vpow.pop %v1426
      %v1428 = vmul.f32 %v1374, 1.442695
      %v1429 = vpow.pop %v1428
      %v1430 = vmul.f32 %v1375, 1.442695
      %v1431 = vpow.pop %v1430
      %v1432 = vmul.f32 %v1376, 1.442695
      %v1433 = vpow.pop %v1432
      %v1434 = vmul.f32 %v1377, 1.442695
      %v1435 = vpow.pop %v1434
      %v1436 = vmul.f32 %v1378, 1.442695
      %v1437 = vpow.pop %v1436
      %v1438 = vmul.f32 %v1379, 1.442695
      %v1439 = vpow.pop %v1438
      %v1440 = vmul.f32 %v1380, 1.442695
      %v1441 = vpow.pop %v1440
      %v1442 = vmul.f32 %v1381, 1.442695
      %v1443 = vpow.pop %v1442
      %v1444 = vmul.f32 %v1382, 1.442695
      %v1445 = vpow.pop %v1444
      %v1446 = vmul.f32 %v1383, 1.442695
      %v1447 = vpow.pop %v1446
      %v1448 = vmin.f32 %v1288, 0.0
      %v1449 = vmin.f32 %v1289, 0.0
      %v1450 = vmin.f32 %v1290, 0.0
      %v1451 = vmin.f32 %v1291, 0.0
      %v1452 = vmin.f32 %v1292, 0.0
      %v1453 = vmin.f32 %v1293, 0.0
      %v1454 = vmin.f32 %v1294, 0.0
      %v1455 = vmin.f32 %v1295, 0.0
      %v1456 = vmin.f32 %v1296, 0.0
      %v1457 = vmin.f32 %v1297, 0.0
      %v1458 = vmin.f32 %v1298, 0.0
      %v1459 = vmin.f32 %v1299, 0.0
      %v1460 = vmin.f32 %v1300, 0.0
      %v1461 = vmin.f32 %v1301, 0.0
      %v1462 = vmin.f32 %v1302, 0.0
      %v1463 = vmin.f32 %v1303, 0.0
      %v1464 = vmin.f32 %v1304, 0.0
      %v1465 = vmin.f32 %v1305, 0.0
      %v1466 = vmin.f32 %v1306, 0.0
      %v1467 = vmin.f32 %v1307, 0.0
      %v1468 = vmin.f32 %v1308, 0.0
      %v1469 = vmin.f32 %v1309, 0.0
      %v1470 = vmin.f32 %v1310, 0.0
      %v1471 = vmin.f32 %v1311, 0.0
      %v1472 = vmin.f32 %v1312, 0.0
      %v1473 = vmin.f32 %v1313, 0.0
      %v1474 = vmin.f32 %v1314, 0.0
      %v1475 = vmin.f32 %v1315, 0.0
      %v1476 = vmin.f32 %v1316, 0.0
      %v1477 = vmin.f32 %v1317, 0.0
      %v1478 = vmin.f32 %v1318, 0.0
      %v1479 = vmin.f32 %v1319, 0.0
      %v1480 = vadd.f32 %v1385, 1.0
      %v1481 = vadd.f32 %v1387, 1.0
      %v1482 = vadd.f32 %v1389, 1.0
      %v1483 = vadd.f32 %v1391, 1.0
      %v1484 = vadd.f32 %v1393, 1.0
      %v1485 = vadd.f32 %v1395, 1.0
      %v1486 = vadd.f32 %v1397, 1.0
      %v1487 = vadd.f32 %v1399, 1.0
      %v1488 = vadd.f32 %v1401, 1.0
      %v1489 = vadd.f32 %v1403, 1.0
      %v1490 = vadd.f32 %v1405, 1.0
      %v1491 = vadd.f32 %v1407, 1.0
      %v1492 = vadd.f32 %v1409, 1.0
      %v1493 = vadd.f32 %v1411, 1.0
      %v1494 = vadd.f32 %v1413, 1.0
      %v1495 = vadd.f32 %v1415, 1.0
      %v1496 = vadd.f32 %v1417, 1.0
      %v1497 = vadd.f32 %v1419, 1.0
      %v1498 = vadd.f32 %v1421, 1.0
      %v1499 = vadd.f32 %v1423, 1.0
      %v1500 = vadd.f32 %v1425, 1.0
      %v1501 = vadd.f32 %v1427, 1.0
      %v1502 = vadd.f32 %v1429, 1.0
      %v1503 = vadd.f32 %v1431, 1.0
      %v1504 = vadd.f32 %v1433, 1.0
      %v1505 = vadd.f32 %v1435, 1.0
      %v1506 = vadd.f32 %v1437, 1.0
      %v1507 = vadd.f32 %v1439, 1.0
      %v1508 = vadd.f32 %v1441, 1.0
      %v1509 = vadd.f32 %v1443, 1.0
      %v1510 = vadd.f32 %v1445, 1.0
      %v1511 = vadd.f32 %v1447, 1.0
      %v1512 = vlog2.pop %v1480
      %v1513 = vmul.f32 %v1512, 0.6931472
      %v1514 = vlog2.pop %v1481
      %v1515 = vmul.f32 %v1514, 0.6931472
      %v1516 = vlog2.pop %v1482
      %v1517 = vmul.f32 %v1516, 0.6931472
      %v1518 = vlog2.pop %v1483
      %v1519 = vmul.f32 %v1518, 0.6931472
      %v1520 = vlog2.pop %v1484
      %v1521 = vmul.f32 %v1520, 0.6931472
      %v1522 = vlog2.pop %v1485
      %v1523 = vmul.f32 %v1522, 0.6931472
      %v1524 = vlog2.pop %v1486
      %v1525 = vmul.f32 %v1524, 0.6931472
      %v1526 = vlog2.pop %v1487
      %v1527 = vmul.f32 %v1526, 0.6931472
      %v1528 = vlog2.pop %v1488
      %v1529 = vmul.f32 %v1528, 0.6931472
      %v1530 = vlog2.pop %v1489
      %v1531 = vmul.f32 %v1530, 0.6931472
      %v1532 = vlog2.pop %v1490
      %v1533 = vmul.f32 %v1532, 0.6931472
      %v1534 = vlog2.pop %v1491
      %v1535 = vmul.f32 %v1534, 0.6931472
      %v1536 = vlog2.pop %v1492
      %v1537 = vmul.f32 %v1536, 0.6931472
      %v1538 = vlog2.pop %v1493
      %v1539 = vmul.f32 %v1538, 0.6931472
      %v1540 = vlog2.pop %v1494
      %v1541 = vmul.f32 %v1540, 0.6931472
      %v1542 = vlog2.pop %v1495
      %v1543 = vmul.f32 %v1542, 0.6931472
      %v1544 = vlog2.pop %v1496
      %v1545 = vmul.f32 %v1544, 0.6931472
      %v1546 = vlog2.pop %v1497
      %v1547 = vmul.f32 %v1546, 0.6931472
      %v1548 = vlog2.pop %v1498
      %v1549 = vmul.f32 %v1548, 0.6931472
      %v1550 = vlog2.pop %v1499
      %v1551 = vmul.f32 %v1550, 0.6931472
      %v1552 = vlog2.pop %v1500
      %v1553 = vmul.f32 %v1552, 0.6931472
      %v1554 = vlog2.pop %v1501
      %v1555 = vmul.f32 %v1554, 0.6931472
      %v1556 = vlog2.pop %v1502
      %v1557 = vmul.f32 %v1556, 0.6931472
      %v1558 = vlog2.pop %v1503
      %v1559 = vmul.f32 %v1558, 0.6931472
      %v1560 = vlog2.pop %v1504
      %v1561 = vmul.f32 %v1560, 0.6931472
      %v1562 = vlog2.pop %v1505
      %v1563 = vmul.f32 %v1562, 0.6931472
      %v1564 = vlog2.pop %v1506
      %v1565 = vmul.f32 %v1564, 0.6931472
      %v1566 = vlog2.pop %v1507
      %v1567 = vmul.f32 %v1566, 0.6931472
      %v1568 = vlog2.pop %v1508
      %v1569 = vmul.f32 %v1568, 0.6931472
      %v1570 = vlog2.pop %v1509
      %v1571 = vmul.f32 %v1570, 0.6931472
      %v1572 = vlog2.pop %v1510
      %v1573 = vmul.f32 %v1572, 0.6931472
      %v1574 = vlog2.pop %v1511
      %v1575 = vmul.f32 %v1574, 0.6931472
      %v1576 = vsub.f32 %v1448, %v1513
      %v1577 = vsub.f32 %v1449, %v1515
      %v1578 = vsub.f32 %v1450, %v1517
      %v1579 = vsub.f32 %v1451, %v1519
      %v1580 = vsub.f32 %v1452, %v1521
      %v1581 = vsub.f32 %v1453, %v1523
      %v1582 = vsub.f32 %v1454, %v1525
      %v1583 = vsub.f32 %v1455, %v1527
      %v1584 = vsub.f32 %v1456, %v1529
      %v1585 = vsub.f32 %v1457, %v1531
      %v1586 = vsub.f32 %v1458, %v1533
      %v1587 = vsub.f32 %v1459, %v1535
      %v1588 = vsub.f32 %v1460, %v1537
      %v1589 = vsub.f32 %v1461, %v1539
      %v1590 = vsub.f32 %v1462, %v1541
      %v1591 = vsub.f32 %v1463, %v1543
      %v1592 = vsub.f32 %v1464, %v1545
      %v1593 = vsub.f32 %v1465, %v1547
      %v1594 = vsub.f32 %v1466, %v1549
      %v1595 = vsub.f32 %v1467, %v1551
      %v1596 = vsub.f32 %v1468, %v1553
      %v1597 = vsub.f32 %v1469, %v1555
      %v1598 = vsub.f32 %v1470, %v1557
      %v1599 = vsub.f32 %v1471, %v1559
      %v1600 = vsub.f32 %v1472, %v1561
      %v1601 = vsub.f32 %v1473, %v1563
      %v1602 = vsub.f32 %v1474, %v1565
      %v1603 = vsub.f32 %v1475, %v1567
      %v1604 = vsub.f32 %v1476, %v1569
      %v1605 = vsub.f32 %v1477, %v1571
      %v1606 = vsub.f32 %v1478, %v1573
      %v1607 = vsub.f32 %v1479, %v1575
      %v1608 = vrcp.pop %v1480
      %v1609 = vrcp.pop %v1481
      %v1610 = vrcp.pop %v1482
      %v1611 = vrcp.pop %v1483
      %v1612 = vrcp.pop %v1484
      %v1613 = vrcp.pop %v1485
      %v1614 = vrcp.pop %v1486
      %v1615 = vrcp.pop %v1487
      %v1616 = vrcp.pop %v1488
      %v1617 = vrcp.pop %v1489
      %v1618 = vrcp.pop %v1490
      %v1619 = vrcp.pop %v1491
      %v1620 = vrcp.pop %v1492
      %v1621 = vrcp.pop %v1493
      %v1622 = vrcp.pop %v1494
      %v1623 = vrcp.pop %v1495
      %v1624 = vrcp.pop %v1496
      %v1625 = vrcp.pop %v1497
      %v1626 = vrcp.pop %v1498
      %v1627 = vrcp.pop %v1499
      %v1628 = vrcp.pop %v1500
      %v1629 = vrcp.pop %v1501
      %v1630 = vrcp.pop %v1502
      %v1631 = vrcp.pop %v1503
      %v1632 = vrcp.pop %v1504
      %v1633 = vrcp.pop %v1505
      %v1634 = vrcp.pop %v1506
      %v1635 = vrcp.pop %v1507
      %v1636 = vrcp.pop %v1508
      %v1637 = vrcp.pop %v1509
      %v1638 = vrcp.pop %v1510
      %v1639 = vrcp.pop %v1511
      %vm1640 = vcmp.ge.f32.partialorder %v1288, 0.0
      %vm1641 = vcmp.ge.f32.partialorder %v1289, 0.0
      %vm1642 = vcmp.ge.f32.partialorder %v1290, 0.0
      %vm1643 = vcmp.ge.f32.partialorder %v1291, 0.0
      %vm1644 = vcmp.ge.f32.partialorder %v1292, 0.0
      %vm1645 = vcmp.ge.f32.partialorder %v1293, 0.0
      %vm1646 = vcmp.ge.f32.partialorder %v1294, 0.0
      %vm1647 = vcmp.ge.f32.partialorder %v1295, 0.0
      %vm1648 = vcmp.ge.f32.partialorder %v1296, 0.0
      %vm1649 = vcmp.ge.f32.partialorder %v1297, 0.0
      %vm1650 = vcmp.ge.f32.partialorder %v1298, 0.0
      %vm1651 = vcmp.ge.f32.partialorder %v1299, 0.0
      %vm1652 = vcmp.ge.f32.partialorder %v1300, 0.0
      %vm1653 = vcmp.ge.f32.partialorder %v1301, 0.0
      %vm1654 = vcmp.ge.f32.partialorder %v1302, 0.0
      %vm1655 = vcmp.ge.f32.partialorder %v1303, 0.0
      %vm1656 = vcmp.ge.f32.partialorder %v1304, 0.0
      %vm1657 = vcmp.ge.f32.partialorder %v1305, 0.0
      %vm1658 = vcmp.ge.f32.partialorder %v1306, 0.0
      %vm1659 = vcmp.ge.f32.partialorder %v1307, 0.0
      %vm1660 = vcmp.ge.f32.partialorder %v1308, 0.0
      %vm1661 = vcmp.ge.f32.partialorder %v1309, 0.0
      %vm1662 = vcmp.ge.f32.partialorder %v1310, 0.0
      %vm1663 = vcmp.ge.f32.partialorder %v1311, 0.0
      %vm1664 = vcmp.ge.f32.partialorder %v1312, 0.0
      %vm1665 = vcmp.ge.f32.partialorder %v1313, 0.0
      %vm1666 = vcmp.ge.f32.partialorder %v1314, 0.0
      %vm1667 = vcmp.ge.f32.partialorder %v1315, 0.0
      %vm1668 = vcmp.ge.f32.partialorder %v1316, 0.0
      %vm1669 = vcmp.ge.f32.partialorder %v1317, 0.0
      %vm1670 = vcmp.ge.f32.partialorder %v1318, 0.0
      %vm1671 = vcmp.ge.f32.partialorder %v1319, 0.0
      %v1672 = vmul.f32 %v1385, %v1608
      %v1673 = vmul.f32 %v1387, %v1609
      %v1674 = vmul.f32 %v1389, %v1610
      %v1675 = vmul.f32 %v1391, %v1611
      %v1676 = vmul.f32 %v1393, %v1612
      %v1677 = vmul.f32 %v1395, %v1613
      %v1678 = vmul.f32 %v1397, %v1614
      %v1679 = vmul.f32 %v1399, %v1615
      %v1680 = vmul.f32 %v1401, %v1616
      %v1681 = vmul.f32 %v1403, %v1617
      %v1682 = vmul.f32 %v1405, %v1618
      %v1683 = vmul.f32 %v1407, %v1619
      %v1684 = vmul.f32 %v1409, %v1620
      %v1685 = vmul.f32 %v1411, %v1621
      %v1686 = vmul.f32 %v1413, %v1622
      %v1687 = vmul.f32 %v1415, %v1623
      %v1688 = vmul.f32 %v1417, %v1624
      %v1689 = vmul.f32 %v1419, %v1625
      %v1690 = vmul.f32 %v1421, %v1626
      %v1691 = vmul.f32 %v1423, %v1627
      %v1692 = vmul.f32 %v1425, %v1628
      %v1693 = vmul.f32 %v1427, %v1629
      %v1694 = vmul.f32 %v1429, %v1630
      %v1695 = vmul.f32 %v1431, %v1631
      %v1696 = vmul.f32 %v1433, %v1632
      %v1697 = vmul.f32 %v1435, %v1633
      %v1698 = vmul.f32 %v1437, %v1634
      %v1699 = vmul.f32 %v1439, %v1635
      %v1700 = vmul.f32 %v1441, %v1636
      %v1701 = vmul.f32 %v1443, %v1637
      %v1702 = vmul.f32 %v1445, %v1638
      %v1703 = vmul.f32 %v1447, %v1639
      %v1704 = vsel %vm1640, %v1608, %v1672
      %v1705 = vsel %vm1641, %v1609, %v1673
      %v1706 = vsel %vm1642, %v1610, %v1674
      %v1707 = vsel %vm1643, %v1611, %v1675
      %v1708 = vsel %vm1644, %v1612, %v1676
      %v1709 = vsel %vm1645, %v1613, %v1677
      %v1710 = vsel %vm1646, %v1614, %v1678
      %v1711 = vsel %vm1647, %v1615, %v1679
      %v1712 = vsel %vm1648, %v1616, %v1680
      %v1713 = vsel %vm1649, %v1617, %v1681
      %v1714 = vsel %vm1650, %v1618, %v1682
      %v1715 = vsel %vm1651, %v1619, %v1683
      %v1716 = vsel %vm1652, %v1620, %v1684
      %v1717 = vsel %vm1653, %v1621, %v1685
      %v1718 = vsel %vm1654, %v1622, %v1686
      %v1719 = vsel %vm1655, %v1623, %v1687
      %v1720 = vsel %vm1656, %v1624, %v1688
      %v1721 = vsel %vm1657, %v1625, %v1689
      %v1722 = vsel %vm1658, %v1626, %v1690
      %v1723 = vsel %vm1659, %v1627, %v1691
      %v1724 = vsel %vm1660, %v1628, %v1692
      %v1725 = vsel %vm1661, %v1629, %v1693
      %v1726 = vsel %vm1662, %v1630, %v1694
      %v1727 = vsel %vm1663, %v1631, %v1695
      %v1728 = vsel %vm1664, %v1632, %v1696
      %v1729 = vsel %vm1665, %v1633, %v1697
      %v1730 = vsel %vm1666, %v1634, %v1698
      %v1731 = vsel %vm1667, %v1635, %v1699
      %v1732 = vsel %vm1668, %v1636, %v1700
      %v1733 = vsel %vm1669, %v1637, %v1701
      %v1734 = vsel %vm1670, %v1638, %v1702
      %v1735 = vsel %vm1671, %v1639, %v1703
      %v1736 = vld [vmem:[%s306] sm:$0xff]
      %v1737 = vld [vmem:[%s306 + $0x8] sm:$0xff]
      %v1738 = vld [vmem:[%s306 + $0x10] sm:$0xff]
      %v1739 = vld [vmem:[%s306 + $0x18] sm:$0xff]
      %v1740 = vld [vmem:[%s306 + $0x20] sm:$0xff]
      %v1741 = vld [vmem:[%s306 + $0x28] sm:$0xff]
      %v1742 = vld [vmem:[%s306 + $0x30] sm:$0xff]
      %v1743 = vld [vmem:[%s306 + $0x38] sm:$0xff]
      %v1744 = vld [vmem:[%s306 + $0x40] sm:$0xff]
      %v1745 = vld [vmem:[%s306 + $0x48] sm:$0xff]
      %v1746 = vld [vmem:[%s306 + $0x50] sm:$0xff]
      %v1747 = vld [vmem:[%s306 + $0x58] sm:$0xff]
      %v1748 = vld [vmem:[%s306 + $0x60] sm:$0xff]
      %v1749 = vld [vmem:[%s306 + $0x68] sm:$0xff]
      %v1750 = vld [vmem:[%s306 + $0x70] sm:$0xff]
      %v1751 = vld [vmem:[%s306 + $0x78] sm:$0xff]
      %v1752 = vld [vmem:[%s306 + $0x80] sm:$0xff]
      %v1753 = vld [vmem:[%s306 + $0x88] sm:$0xff]
      %v1754 = vld [vmem:[%s306 + $0x90] sm:$0xff]
      %v1755 = vld [vmem:[%s306 + $0x98] sm:$0xff]
      %v1756 = vld [vmem:[%s306 + $0xa0] sm:$0xff]
      %v1757 = vld [vmem:[%s306 + $0xa8] sm:$0xff]
      %v1758 = vld [vmem:[%s306 + $0xb0] sm:$0xff]
      %v1759 = vld [vmem:[%s306 + $0xb8] sm:$0xff]
      %v1760 = vld [vmem:[%s306 + $0xc0] sm:$0xff]
      %v1761 = vld [vmem:[%s306 + $0xc8] sm:$0xff]
      %v1762 = vld [vmem:[%s306 + $0xd0] sm:$0xff]
      %v1763 = vld [vmem:[%s306 + $0xd8] sm:$0xff]
      %v1764 = vld [vmem:[%s306 + $0xe0] sm:$0xff]
      %v1765 = vld [vmem:[%s306 + $0xe8] sm:$0xff]
      %v1766 = vld [vmem:[%s306 + $0xf0] sm:$0xff]
      %v1767 = vld [vmem:[%s306 + $0xf8] sm:$0xff]
      %v1768 = vmul.f32 %v1736, %v1704
      %v1769 = vmul.f32 %v1737, %v1705
      %v1770 = vmul.f32 %v1738, %v1706
      %v1771 = vmul.f32 %v1739, %v1707
      %v1772 = vmul.f32 %v1740, %v1708
      %v1773 = vmul.f32 %v1741, %v1709
      %v1774 = vmul.f32 %v1742, %v1710
      %v1775 = vmul.f32 %v1743, %v1711
      %v1776 = vmul.f32 %v1744, %v1712
      %v1777 = vmul.f32 %v1745, %v1713
      %v1778 = vmul.f32 %v1746, %v1714
      %v1779 = vmul.f32 %v1747, %v1715
      %v1780 = vmul.f32 %v1748, %v1716
      %v1781 = vmul.f32 %v1749, %v1717
      %v1782 = vmul.f32 %v1750, %v1718
      %v1783 = vmul.f32 %v1751, %v1719
      %v1784 = vmul.f32 %v1752, %v1720
      %v1785 = vmul.f32 %v1753, %v1721
      %v1786 = vmul.f32 %v1754, %v1722
      %v1787 = vmul.f32 %v1755, %v1723
      %v1788 = vmul.f32 %v1756, %v1724
      %v1789 = vmul.f32 %v1757, %v1725
      %v1790 = vmul.f32 %v1758, %v1726
      %v1791 = vmul.f32 %v1759, %v1727
      %v1792 = vmul.f32 %v1760, %v1728
      %v1793 = vmul.f32 %v1761, %v1729
      %v1794 = vmul.f32 %v1762, %v1730
      %v1795 = vmul.f32 %v1763, %v1731
      %v1796 = vmul.f32 %v1764, %v1732
      %v1797 = vmul.f32 %v1765, %v1733
      %v1798 = vmul.f32 %v1766, %v1734
      %v1799 = vmul.f32 %v1767, %v1735
      %v1800 = vadd.f32 %v1768, %v1130
      %v1801 = vadd.f32 %v1769, %v1134
      %v1802 = vadd.f32 %v1770, %v1140
      %v1803 = vadd.f32 %v1771, %v1144
      %v1804 = vadd.f32 %v1772, %v1150
      %v1805 = vadd.f32 %v1773, %v1154
      %v1806 = vadd.f32 %v1774, %v1160
      %v1807 = vadd.f32 %v1775, %v1164
      %v1808 = vadd.f32 %v1776, %v1170
      %v1809 = vadd.f32 %v1777, %v1174
      %v1810 = vadd.f32 %v1778, %v1180
      %v1811 = vadd.f32 %v1779, %v1184
      %v1812 = vadd.f32 %v1780, %v1190
      %v1813 = vadd.f32 %v1781, %v1194
      %v1814 = vadd.f32 %v1782, %v1200
      %v1815 = vadd.f32 %v1783, %v1204
      %v1816 = vadd.f32 %v1784, %v1210
      %v1817 = vadd.f32 %v1785, %v1214
      %v1818 = vadd.f32 %v1786, %v1220
      %v1819 = vadd.f32 %v1787, %v1224
      %v1820 = vadd.f32 %v1788, %v1230
      %v1821 = vadd.f32 %v1789, %v1234
      %v1822 = vadd.f32 %v1790, %v1240
      %v1823 = vadd.f32 %v1791, %v1244
      %v1824 = vadd.f32 %v1792, %v1250
      %v1825 = vadd.f32 %v1793, %v1254
      %v1826 = vadd.f32 %v1794, %v1260
      %v1827 = vadd.f32 %v1795, %v1264
      %v1828 = vadd.f32 %v1796, %v1270
      %v1829 = vadd.f32 %v1797, %v1274
      %v1830 = vadd.f32 %v1798, %v1280
      %v1831 = vadd.f32 %v1799, %v1284
      %1832 = vst [vmem:[%s312] sm:$0xff] %v1800
      %1833 = vst [vmem:[%s312 + $0x8] sm:$0xff] %v1801
      %1834 = vst [vmem:[%s312 + $0x10] sm:$0xff] %v1802
      %1835 = vst [vmem:[%s312 + $0x18] sm:$0xff] %v1803
      %1836 = vst [vmem:[%s312 + $0x20] sm:$0xff] %v1804
      %1837 = vst [vmem:[%s312 + $0x28] sm:$0xff] %v1805
      %1838 = vst [vmem:[%s312 + $0x30] sm:$0xff] %v1806
      %1839 = vst [vmem:[%s312 + $0x38] sm:$0xff] %v1807
      %1840 = vst [vmem:[%s312 + $0x40] sm:$0xff] %v1808
      %1841 = vst [vmem:[%s312 + $0x48] sm:$0xff] %v1809
      %1842 = vst [vmem:[%s312 + $0x50] sm:$0xff] %v1810
      %1843 = vst [vmem:[%s312 + $0x58] sm:$0xff] %v1811
      %1844 = vst [vmem:[%s312 + $0x60] sm:$0xff] %v1812
      %1845 = vst [vmem:[%s312 + $0x68] sm:$0xff] %v1813
      %1846 = vst [vmem:[%s312 + $0x70] sm:$0xff] %v1814
      %1847 = vst [vmem:[%s312 + $0x78] sm:$0xff] %v1815
      %1848 = vst [vmem:[%s312 + $0x80] sm:$0xff] %v1816
      %1849 = vst [vmem:[%s312 + $0x88] sm:$0xff] %v1817
      %1850 = vst [vmem:[%s312 + $0x90] sm:$0xff] %v1818
      %1851 = vst [vmem:[%s312 + $0x98] sm:$0xff] %v1819
      %1852 = vst [vmem:[%s312 + $0xa0] sm:$0xff] %v1820
      %1853 = vst [vmem:[%s312 + $0xa8] sm:$0xff] %v1821
      %1854 = vst [vmem:[%s312 + $0xb0] sm:$0xff] %v1822
      %1855 = vst [vmem:[%s312 + $0xb8] sm:$0xff] %v1823
      %1856 = vst [vmem:[%s312 + $0xc0] sm:$0xff] %v1824
      %1857 = vst [vmem:[%s312 + $0xc8] sm:$0xff] %v1825
      %1858 = vst [vmem:[%s312 + $0xd0] sm:$0xff] %v1826
      %1859 = vst [vmem:[%s312 + $0xd8] sm:$0xff] %v1827
      %1860 = vst [vmem:[%s312 + $0xe0] sm:$0xff] %v1828
      %1861 = vst [vmem:[%s312 + $0xe8] sm:$0xff] %v1829
      %1862 = vst [vmem:[%s312 + $0xf0] sm:$0xff] %v1830
      %1863 = vst [vmem:[%s312 + $0xf8] sm:$0xff] %v1831
      %v1864 = vlaneseq
      %v1865 = vand.u32 %v1864, 127
      %vm1866 = vcmp.lt.s32.totalorder %v1865, 4
      %v1867 = vsel %vm1866, %v1576, 0.0
      %v1868 = vsel %vm1866, %v1577, 0.0
      %v1869 = vsel %vm1866, %v1578, 0.0
      %v1870 = vsel %vm1866, %v1579, 0.0
      %v1871 = vsel %vm1866, %v1580, 0.0
      %v1872 = vsel %vm1866, %v1581, 0.0
      %v1873 = vsel %vm1866, %v1582, 0.0
      %v1874 = vsel %vm1866, %v1583, 0.0
      %v1875 = vsel %vm1866, %v1584, 0.0
      %v1876 = vsel %vm1866, %v1585, 0.0
      %v1877 = vsel %vm1866, %v1586, 0.0
      %v1878 = vsel %vm1866, %v1587, 0.0
      %v1879 = vsel %vm1866, %v1588, 0.0
      %v1880 = vsel %vm1866, %v1589, 0.0
      %v1881 = vsel %vm1866, %v1590, 0.0
      %v1882 = vsel %vm1866, %v1591, 0.0
      %v1883 = vsel %vm1866, %v1592, 0.0
      %v1884 = vsel %vm1866, %v1593, 0.0
      %v1885 = vsel %vm1866, %v1594, 0.0
      %v1886 = vsel %vm1866, %v1595, 0.0
      %v1887 = vsel %vm1866, %v1596, 0.0
      %v1888 = vsel %vm1866, %v1597, 0.0
      %v1889 = vsel %vm1866, %v1598, 0.0
      %v1890 = vsel %vm1866, %v1599, 0.0
      %v1891 = vsel %vm1866, %v1600, 0.0
      %v1892 = vsel %vm1866, %v1601, 0.0
      %v1893 = vsel %vm1866, %v1602, 0.0
      %v1894 = vsel %vm1866, %v1603, 0.0
      %v1895 = vsel %vm1866, %v1604, 0.0
      %v1896 = vsel %vm1866, %v1605, 0.0
      %v1897 = vsel %vm1866, %v1606, 0.0
      %v1898 = vsel %vm1866, %v1607, 0.0
      %1899 = vadd.xlane.f32.xlu0 %v1867
      %v1900 = vpop.xlane.xlu0 %1899
      %1901 = vadd.xlane.f32.xlu0 %v1868
      %v1902 = vpop.xlane.xlu0 %1901
      %1903 = vadd.xlane.f32.xlu0 %v1869
      %v1904 = vpop.xlane.xlu0 %1903
      %1905 = vadd.xlane.f32.xlu0 %v1870
      %v1906 = vpop.xlane.xlu0 %1905
      %1907 = vadd.xlane.f32.xlu0 %v1871
      %v1908 = vpop.xlane.xlu0 %1907
      %1909 = vadd.xlane.f32.xlu0 %v1872
      %v1910 = vpop.xlane.xlu0 %1909
      %1911 = vadd.xlane.f32.xlu0 %v1873
      %v1912 = vpop.xlane.xlu0 %1911
      %1913 = vadd.xlane.f32.xlu0 %v1874
      %v1914 = vpop.xlane.xlu0 %1913
      %1915 = vadd.xlane.f32.xlu0 %v1875
      %v1916 = vpop.xlane.xlu0 %1915
      %1917 = vadd.xlane.f32.xlu0 %v1876
      %v1918 = vpop.xlane.xlu0 %1917
      %1919 = vadd.xlane.f32.xlu0 %v1877
      %v1920 = vpop.xlane.xlu0 %1919
      %1921 = vadd.xlane.f32.xlu0 %v1878
      %v1922 = vpop.xlane.xlu0 %1921
      %1923 = vadd.xlane.f32.xlu0 %v1879
      %v1924 = vpop.xlane.xlu0 %1923
      %1925 = vadd.xlane.f32.xlu0 %v1880
      %v1926 = vpop.xlane.xlu0 %1925
      %1927 = vadd.xlane.f32.xlu0 %v1881
      %v1928 = vpop.xlane.xlu0 %1927
      %1929 = vadd.xlane.f32.xlu0 %v1882
      %v1930 = vpop.xlane.xlu0 %1929
      %1931 = vadd.xlane.f32.xlu0 %v1883
      %v1932 = vpop.xlane.xlu0 %1931
      %1933 = vadd.xlane.f32.xlu0 %v1884
      %v1934 = vpop.xlane.xlu0 %1933
      %1935 = vadd.xlane.f32.xlu0 %v1885
      %v1936 = vpop.xlane.xlu0 %1935
      %1937 = vadd.xlane.f32.xlu0 %v1886
      %v1938 = vpop.xlane.xlu0 %1937
      %1939 = vadd.xlane.f32.xlu0 %v1887
      %v1940 = vpop.xlane.xlu0 %1939
      %1941 = vadd.xlane.f32.xlu0 %v1888
      %v1942 = vpop.xlane.xlu0 %1941
      %1943 = vadd.xlane.f32.xlu0 %v1889
      %v1944 = vpop.xlane.xlu0 %1943
      %1945 = vadd.xlane.f32.xlu0 %v1890
      %v1946 = vpop.xlane.xlu0 %1945
      %1947 = vadd.xlane.f32.xlu0 %v1891
      %v1948 = vpop.xlane.xlu0 %1947
      %1949 = vadd.xlane.f32.xlu0 %v1892
      %v1950 = vpop.xlane.xlu0 %1949
      %1951 = vadd.xlane.f32.xlu0 %v1893
      %v1952 = vpop.xlane.xlu0 %1951
      %1953 = vadd.xlane.f32.xlu0 %v1894
      %v1954 = vpop.xlane.xlu0 %1953
      %1955 = vadd.xlane.f32.xlu0 %v1895
      %v1956 = vpop.xlane.xlu0 %1955
      %1957 = vadd.xlane.f32.xlu0 %v1896
      %v1958 = vpop.xlane.xlu0 %1957
      %1959 = vadd.xlane.f32.xlu0 %v1897
      %v1960 = vpop.xlane.xlu0 %1959
      %1961 = vadd.xlane.f32.xlu0 %v1898
      %v1962 = vpop.xlane.xlu0 %1961
      %vm1963 = vcmask 7168
      %1964 = vst.msk [vmem:[%s318] sm:$0xff] %vm1963, %v1900
      %1965 = vst.msk [vmem:[%s318 + $0x8] sm:$0xff] %vm1963, %v1902
      %1966 = vst.msk [vmem:[%s318 + $0x10] sm:$0xff] %vm1963, %v1904
      %1967 = vst.msk [vmem:[%s318 + $0x18] sm:$0xff] %vm1963, %v1906
      %1968 = vst.msk [vmem:[%s318 + $0x20] sm:$0xff] %vm1963, %v1908
      %1969 = vst.msk [vmem:[%s318 + $0x28] sm:$0xff] %vm1963, %v1910
      %1970 = vst.msk [vmem:[%s318 + $0x30] sm:$0xff] %vm1963, %v1912
      %1971 = vst.msk [vmem:[%s318 + $0x38] sm:$0xff] %vm1963, %v1914
      %1972 = vst.msk [vmem:[%s318 + $0x40] sm:$0xff] %vm1963, %v1916
      %1973 = vst.msk [vmem:[%s318 + $0x48] sm:$0xff] %vm1963, %v1918
      %1974 = vst.msk [vmem:[%s318 + $0x50] sm:$0xff] %vm1963, %v1920
      %1975 = vst.msk [vmem:[%s318 + $0x58] sm:$0xff] %vm1963, %v1922
      %1976 = vst.msk [vmem:[%s318 + $0x60] sm:$0xff] %vm1963, %v1924
      %1977 = vst.msk [vmem:[%s318 + $0x68] sm:$0xff] %vm1963, %v1926
      %1978 = vst.msk [vmem:[%s318 + $0x70] sm:$0xff] %vm1963, %v1928
      %1979 = vst.msk [vmem:[%s318 + $0x78] sm:$0xff] %vm1963, %v1930
      %1980 = vst.msk [vmem:[%s318 + $0x80] sm:$0xff] %vm1963, %v1932
      %1981 = vst.msk [vmem:[%s318 + $0x88] sm:$0xff] %vm1963, %v1934
      %1982 = vst.msk [vmem:[%s318 + $0x90] sm:$0xff] %vm1963, %v1936
      %1983 = vst.msk [vmem:[%s318 + $0x98] sm:$0xff] %vm1963, %v1938
      %1984 = vst.msk [vmem:[%s318 + $0xa0] sm:$0xff] %vm1963, %v1940
      %1985 = vst.msk [vmem:[%s318 + $0xa8] sm:$0xff] %vm1963, %v1942
      %1986 = vst.msk [vmem:[%s318 + $0xb0] sm:$0xff] %vm1963, %v1944
      %1987 = vst.msk [vmem:[%s318 + $0xb8] sm:$0xff] %vm1963, %v1946
      %1988 = vst.msk [vmem:[%s318 + $0xc0] sm:$0xff] %vm1963, %v1948
      %1989 = vst.msk [vmem:[%s318 + $0xc8] sm:$0xff] %vm1963, %v1950
      %1990 = vst.msk [vmem:[%s318 + $0xd0] sm:$0xff] %vm1963, %v1952
      %1991 = vst.msk [vmem:[%s318 + $0xd8] sm:$0xff] %vm1963, %v1954
      %1992 = vst.msk [vmem:[%s318 + $0xe0] sm:$0xff] %vm1963, %v1956
      %1993 = vst.msk [vmem:[%s318 + $0xe8] sm:$0xff] %vm1963, %v1958
      %1994 = vst.msk [vmem:[%s318 + $0xf0] sm:$0xff] %vm1963, %v1960
      %1995 = vst.msk [vmem:[%s318 + $0xf8] sm:$0xff] %vm1963, %v1962
      %s1996 = smul.u32 32, %s21
      %p1997 = scmp.lt.s32.totalorder %s1996, 63
      %s1998 = scalar_select %p1997, %s1996, 63
      %s1999 = smul.addr %s1998, 8
      %s2000 = scalar_lea.vmem %s4, %s1999
      %s2001 = smul.u32 32, %s21
      %p2002 = scmp.lt.s32.totalorder %s2001, 63
      %s2003 = scalar_select %p2002, %s2001, 63
      %s2004 = smul.addr %s2003, 8
      %s2005 = scalar_lea.vmem %s5, %s2004
      // Predicated region
      $region37: #{multiscale_internal_fwd.12} parent=35 // pred_check
        %p2006 = pneg %p148
      $region38: #{multiscale_internal_fwd.12} parent=35 // pred_check_branch
        %2008 = sbr.rel (%p2006) target = $region40
      $region39: #{multiscale_internal_fwd.12} parent=35 // pred_region
        %s2009 = smul.u32 32, %s21
      $region40: #{multiscale_internal_fwd.12} parent=35 // pred_fallthru
        _
      // Predicated region
      $region41: #{multiscale_internal_fwd.12} parent=35 // pred_check
        %p2010 = pneg %p174
      $region42: #{multiscale_internal_fwd.12} parent=35 // pred_check_branch
        %2012 = sbr.rel (%p2010) target = $region44
      $region43: #{multiscale_internal_fwd.12} parent=35 // pred_region
        %s2013 = smul.u32 32, %s21
      $region44: #{multiscale_internal_fwd.12} parent=35 // pred_fallthru
        _
    $region36: #{multiscale_internal_fwd.12} parent=5 // pred_fallthru
      _
    %p2014 = scmp.le.s32.totalorder 2, %s12
    // Predicated region
    $region45: #{multiscale_internal_fwd.12} parent=5 // pred_check
      %p2015 = pneg %p2014
    $region46: #{multiscale_internal_fwd.12} parent=5 // pred_check_branch
      %2017 = sbr.rel (%p2015) target = $region48
    $region47: #{multiscale_internal_fwd.12} parent=5 // pred_region
      %s2018 = ssub.s32 %s12, 2
      // Predicated region
      $region49: #{multiscale_internal_fwd.12} parent=47 // pred_check
        %p2019 = pneg %p154
      $region50: #{multiscale_internal_fwd.12} parent=47 // pred_check_branch
        %2021 = sbr.rel (%p2019) target = $region52
      $region51: #{multiscale_internal_fwd.12} parent=47 // pred_region
        %s2022 = smul.u32 32, %s23
        %p2023 = scmp.lt.s32.totalorder %s2022, 63
        %s2024 = scalar_select %p2023, %s2022, 63
        %s2025 = smul.addr %s2024, 8
        %s2026 = scalar_lea.vmem %s4, %s2025
      $region52: #{multiscale_internal_fwd.12} parent=47 // pred_fallthru
        _
      // Predicated region
      $region53: #{multiscale_internal_fwd.12} parent=47 // pred_check
        %p2027 = pneg %p180
      $region54: #{multiscale_internal_fwd.12} parent=47 // pred_check_branch
        %2029 = sbr.rel (%p2027) target = $region56
      $region55: #{multiscale_internal_fwd.12} parent=47 // pred_region
        %s2030 = smul.u32 32, %s23
        %p2031 = scmp.lt.s32.totalorder %s2030, 63
        %s2032 = scalar_select %p2031, %s2030, 63
        %s2033 = smul.addr %s2032, 8
        %s2034 = scalar_lea.vmem %s5, %s2033
      $region56: #{multiscale_internal_fwd.12} parent=47 // pred_fallthru
        _
    $region48: #{multiscale_internal_fwd.12} parent=5 // pred_fallthru
      _
  $region6: #{multiscale_internal_fwd.12} parent=0 // loop_footer
    %s16 = sadd.s32 1, %s12
  $region7: #{multiscale_internal_fwd.12} parent=0 // loop_footer_branch
    %11 = sbr.rel target = $region3
  $region8: #{multiscale_internal_fwd.12} parent=0 // loop_exit
    _

</llo_original>
